<compile_context>
chip_gen: v5e
topology: v5e:2x2
jax: 0.10.0
libtpu: 0.0.40
codegen_flags: <defaults>
</compile_context>

<pallas_src>
import numpy as np
import jax
import jax.numpy as jnp
from jax import lax
from jax.experimental import pallas as pl
from jax.experimental.pallas import tpu as pltpu

# ---- hyperparameters (mirroring the PyTorch module's globals) ----
N_FINGERPRINT = 30
N_WORD = 40
DIM = 32
LAYER_GNN = 2
LAYER_CNN = 2
WINDOW = 2                    # Conv2d kernel_size = 2*WINDOW+1 = 5, padding = WINDOW
KSIZE = 2 * WINDOW + 1

N_ATOMS = 8                   # compound graph size
SEQ_LEN = 16                  # protein word-sequence length

# ---- batching / packing parameters ----
LP = 4                        # samples packed along lanes (LP*DIM = 128 lanes)
TB = 32                       # samples per grid step (super-block)
G = TB // LP                  # lane-groups per super-block (stacked on sublanes)
LPD = LP * DIM                # 128
NROWS = G * SEQ_LEN           # protein rows per super-block (128)


def cpi_kernel(x_fp_ref, adj_ref, x_wd_ref,
               w_gnn_ref, b_gnn_ref, pool_atom_ref,
               w_att_ref, b_att_ref,
               c_cat_ref, conv_b_ref,
               expand_seq_ref, pool_seq_ref, seg_ones_ref,
               w_out_ref, b_out_ref,
               z_ref):
    f32 = jnp.float32

    # ------------- GNN over TB compound graphs (sublane-batched) -------------
    xs = x_fp_ref[0]                         # (TB*N_ATOMS, DIM)
    adj = adj_ref[0]                         # (TB*N_ATOMS, TB*N_ATOMS) block-diag
    for l in range(LAYER_GNN):
        hs = jnp.maximum(
            jnp.dot(xs, w_gnn_ref[l], preferred_element_type=f32) + b_gnn_ref[l],
            0.0)
        xs = xs + jnp.dot(adj, hs, preferred_element_type=f32)
    # per-sample sum over atoms: (TB, TB*N_ATOMS) @ (TB*N_ATOMS, DIM)
    x_comp = jnp.dot(pool_atom_ref[...], xs, preferred_element_type=f32)   # (TB, DIM)

    # lane-pack the compound vectors: x_lp[g, p*DIM:(p+1)*DIM] = x_comp[p*G+g]
    x_lp = jnp.concatenate(
        [x_comp[p * G:(p + 1) * G, :] for p in range(LP)], axis=1)         # (G, LPD)

    # ------------- attention-CNN over TB proteins (lane-packed) --------------
    ws = x_wd_ref[0]                         # (NROWS, LPD)
    w_att = w_att_ref[...]                   # (LPD, LPD) block-diag of W_att^T
    b_att = b_att_ref[...]                   # (1, LPD)
    expand_seq = expand_seq_ref[...]         # (NROWS, G)
    pool_seq = pool_seq_ref[...]             # (G, NROWS)
    seg_ones = seg_ones_ref[...]             # (LPD, LPD)

    # Row-validity masks for the roll-based zero-padded row shifts.  Shifts
    # must not cross sequence (lane-group) boundaries; layer-invariant.
    r_mod = lax.broadcasted_iota(jnp.int32, (NROWS, LPD), 0) % SEQ_LEN
    masks = []
    for a in range(KSIZE):
        d = a - WINDOW
        masks.append(jnp.logical_and(r_mod + d >= 0, r_mod + d < SEQ_LEN))

    for i in range(LAYER_CNN):
        # 5x5 single-channel "same" conv as ONE matmul:
        #   conv = concat_a(rowshift_a(ws)) @ c_cat_bd[i] + bias
        pieces = []
        for a in range(KSIZE):
            d = a - WINDOW
            if d == 0:
                pieces.append(ws)
            else:
                rolled = pltpu.roll(ws, shift=(-d) % NROWS, axis=0)
                pieces.append(jnp.where(masks[a], rolled, 0.0))
        shifted_cat = jnp.concatenate(pieces, axis=1)          # (NROWS, KSIZE*LPD)
        conv = jnp.dot(shifted_cat, c_cat_ref[i],
                       preferred_element_type=f32) + conv_b_ref[i]
        hs = jnp.maximum(conv, 0.0)                            # (NROWS, LPD)

        # attention projections (block-diagonal weight = per-sample Linear)
        x_lp = jnp.maximum(
            jnp.dot(x_lp, w_att, preferred_element_type=f32) + b_att, 0.0)   # (G, LPD)
        hs_p = jnp.maximum(
            jnp.dot(hs, w_att, preferred_element_type=f32) + b_att, 0.0)     # (NROWS, LPD)

        # weights = tanh(hs . x) per sample; segmented 32-lane reduce +
        # broadcast-back is a single block-of-ones matmul.
        x_bcast = jnp.dot(expand_seq, x_lp, preferred_element_type=f32)      # (NROWS, LPD)
        w_rep = jnp.dot(hs_p * x_bcast, seg_ones, preferred_element_type=f32)
        ws = jnp.tanh(w_rep) * hs_p                                          # (NROWS, LPD)

    # per-sample sum over sequence positions
    x_prot_lp = jnp.dot(pool_seq, ws, preferred_element_type=f32)            # (G, LPD)
    # un-pack lanes back to sublane-major sample order (s = p*G + g)
    x_prot = jnp.concatenate(
        [x_prot_lp[:, p * DIM:(p + 1) * DIM] for p in range(LP)], axis=0)    # (TB, DIM)

    # -------- output head: W_out(cat(x_comp, x_prot)), lane-padded store -----
    w_out = w_out_ref[...]                    # (2*DIM, LPD), only 2 real lanes
    z = (jnp.dot(x_comp, w_out[0:DIM, :], preferred_element_type=f32)
         + jnp.dot(x_prot, w_out[DIM:2 * DIM, :], preferred_element_type=f32)
         + b_out_ref[...])                                                   # (TB, LPD)
    z_ref[0] = z


def cpi_forward(x_fp, adjacency, x_wd, p):
    """x_fp (B, N_ATOMS, DIM), adjacency (B, N_ATOMS, N_ATOMS),
    x_wd (B, SEQ_LEN, DIM) -> logits (B, 2)."""
    B = x_fp.shape[0]
    nblk = max(1, -(-B // TB))
    b_pad = nblk * TB - B
    if b_pad:
        x_fp = jnp.pad(x_fp, ((0, b_pad), (0, 0), (0, 0)))
        adjacency = jnp.pad(adjacency, ((0, b_pad), (0, 0), (0, 0)))
        x_wd = jnp.pad(x_wd, ((0, b_pad), (0, 0), (0, 0)))

    # GNN inputs: sublane-batched atoms + block-diagonal adjacency per block.
    x_fp_blk = x_fp.reshape(nblk, TB * N_ATOMS, DIM)
    adj_blocks = adjacency.reshape(nblk, TB, N_ATOMS, N_ATOMS)
    eye_tb = jnp.eye(TB, dtype=jnp.float32)
    adj_bd = (eye_tb[None, :, None, :, None]
              * adj_blocks[:, :, :, None, :]).reshape(nblk, TB * N_ATOMS, TB * N_ATOMS)

    # Protein inputs: lane-pack LP samples per group (within-block s = p*G + g).
    x_wd_lp = (x_wd.reshape(nblk, LP, G, SEQ_LEN, DIM)
                   .transpose(0, 2, 3, 1, 4)
                   .reshape(nblk, NROWS, LPD))

    per_blk = lambda n: (n, 0, 0)
    c2 = lambda n: (0, 0)
    c3 = lambda n: (0, 0, 0)

    in_specs = [
        pl.BlockSpec((1, TB * N_ATOMS, DIM), per_blk),
        pl.BlockSpec((1, TB * N_ATOMS, TB * N_ATOMS), per_blk),
        pl.BlockSpec((1, NROWS, LPD), per_blk),
        pl.BlockSpec((LAYER_GNN, DIM, DIM), c3),
        pl.BlockSpec((LAYER_GNN, DIM), c2),
        pl.BlockSpec((TB, TB * N_ATOMS), c2),
        pl.BlockSpec((LPD, LPD), c2),
        pl.BlockSpec((1, LPD), c2),
        pl.BlockSpec((LAYER_CNN, KSIZE * LPD, LPD), c3),
        pl.BlockSpec((LAYER_CNN, LPD), c2),
        pl.BlockSpec((NROWS, G), c2),
        pl.BlockSpec((G, NROWS), c2),
        pl.BlockSpec((LPD, LPD), c2),
        pl.BlockSpec((2 * DIM, LPD), c2),
        pl.BlockSpec((1, LPD), c2),
    ]
    z = pl.pallas_call(
        cpi_kernel,
        out_shape=jax.ShapeDtypeStruct((nblk, TB, LPD), jnp.float32),
        grid=(nblk,),
        in_specs=in_specs,
        out_specs=pl.BlockSpec((1, TB, LPD), per_blk),
        compiler_params=pltpu.CompilerParams(
            dimension_semantics=("parallel",)),
    )(x_fp_blk, adj_bd, x_wd_lp,
      p["w_gnn_T"], p["b_gnn"], p["pool_atom"],
      p["w_att_bd"], p["b_att_lp"],
      p["c_cat_bd"], p["conv_b_lp"],
      p["expand_seq"], p["pool_seq"], p["seg_ones"],
      p["w_out_pad"], p["b_out_pad"])
    return z[:, :, :2].reshape(nblk * TB, 2)[:B]


def shift_matrix(n, d):
    """M[i, i+d] = 1 (zero outside range): (M @ x)[i] = x[i+d], zero-padded."""
    m = np.zeros((n, n), np.float32)
    for i in range(n):
        if 0 <= i + d < n:
            m[i, i + d] = 1.0
    return m


def build_params(key):
    ks = jax.random.split(key, 10)
    sc = 0.1
    embed_fp = sc * jax.random.normal(ks[0], (N_FINGERPRINT, DIM), jnp.float32)
    embed_wd = sc * jax.random.normal(ks[1], (N_WORD, DIM), jnp.float32)
    w_gnn = sc * jax.random.normal(ks[2], (LAYER_GNN, DIM, DIM), jnp.float32)
    b_gnn = sc * jax.random.normal(ks[3], (LAYER_GNN, DIM), jnp.float32)
    w_att = sc * jax.random.normal(ks[4], (DIM, DIM), jnp.float32)
    b_att = sc * jax.random.normal(ks[5], (DIM,), jnp.float32)
    conv_k = sc * jax.random.normal(ks[6], (LAYER_CNN, KSIZE, KSIZE), jnp.float32)
    conv_bias = sc * jax.random.normal(ks[7], (LAYER_CNN,), jnp.float32)
    w_out = sc * jax.random.normal(ks[8], (2, 2 * DIM), jnp.float32)
    b_out = sc * jax.random.normal(ks[9], (2,), jnp.float32)

    # Fold taps x column-shifts: c_shift[l, a] maps the a-th row-shifted copy
    # of ws directly to the conv output (zero padding via the shift matrices).
    s_col = np.stack([shift_matrix(DIM, b - WINDOW).T for b in range(KSIZE)])
    c_shift = np.einsum("lab,bqj->laqj", np.asarray(conv_k), s_col).astype(np.float32)

    eye_lp = np.eye(LP, dtype=np.float32)
    # Lane-packed (block-diagonal over LP samples) weights.
    c_cat_bd = np.stack([
        np.concatenate([np.kron(eye_lp, c_shift[l, a]) for a in range(KSIZE)], axis=0)
        for l in range(LAYER_CNN)]).astype(np.float32)        # (L_CNN, KSIZE*LPD, LPD)
    w_att_bd = np.kron(eye_lp, np.asarray(w_att).T).astype(np.float32)   # (LPD, LPD)
    b_att_lp = np.tile(np.asarray(b_att), LP).reshape(1, LPD).astype(np.float32)
    conv_b_lp = np.broadcast_to(np.asarray(conv_bias)[:, None],
                                (LAYER_CNN, LPD)).astype(np.float32).copy()
    seg_ones = np.kron(eye_lp, np.ones((DIM, DIM), np.float32))          # (LPD, LPD)

    # Structural pooling / broadcast matrices for the batched layout.
    pool_atom = np.kron(np.eye(TB, dtype=np.float32),
                        np.ones((1, N_ATOMS), np.float32))               # (TB, TB*N_ATOMS)
    expand_seq = np.kron(np.eye(G, dtype=np.float32),
                         np.ones((SEQ_LEN, 1), np.float32))              # (NROWS, G)
    pool_seq = np.kron(np.eye(G, dtype=np.float32),
                       np.ones((1, SEQ_LEN), np.float32))                # (G, NROWS)

    # Lane-padded output head (only the first 2 output lanes are real).
    w_out_pad = np.zeros((2 * DIM, LPD), np.float32)
    w_out_pad[:, :2] = np.asarray(w_out).T
    b_out_pad = np.zeros((1, LPD), np.float32)
    b_out_pad[0, :2] = np.asarray(b_out)

    return dict(
        embed_fp=embed_fp, embed_wd=embed_wd,
        # kernel-side params (PyTorch Linear: y = x @ W.T + b -> store W.T)
        w_gnn_T=jnp.transpose(w_gnn, (0, 2, 1)), b_gnn=b_gnn,
        pool_atom=jnp.asarray(pool_atom),
        w_att_bd=jnp.asarray(w_att_bd), b_att_lp=jnp.asarray(b_att_lp),
        c_cat_bd=jnp.asarray(c_cat_bd), conv_b_lp=jnp.asarray(conv_b_lp),
        expand_seq=jnp.asarray(expand_seq), pool_seq=jnp.asarray(pool_seq),
        seg_ones=jnp.asarray(seg_ones),
        w_out_pad=jnp.asarray(w_out_pad), b_out_pad=jnp.asarray(b_out_pad),
        # raw copies for the pure-JAX reference
        w_gnn=w_gnn, w_att=w_att, b_att=b_att, conv_k=conv_k,
        conv_bias=conv_bias, w_out=w_out, b_out=b_out,
    )


def reference_forward(fingerprints, adjacency, words, p):
    """Pure-JAX replica of the PyTorch forward for one sample (verification)."""
    xs = p["embed_fp"][fingerprints]
    for l in range(LAYER_GNN):
        hs = jax.nn.relu(xs @ p["w_gnn"][l].T + p["b_gnn"][l])
        xs = xs + adjacency @ hs
    x_compound = jnp.sum(xs, axis=0, keepdims=True)

    x = x_compound
    ws = p["embed_wd"][words]
    for i in range(LAYER_CNN):
        pad = jnp.pad(ws, ((WINDOW, WINDOW), (WINDOW, WINDOW)))
        conv = jnp.zeros_like(ws)
        for a in range(KSIZE):
            for b in range(KSIZE):
                conv = conv + p["conv_k"][i, a, b] * pad[a:a + SEQ_LEN, b:b + DIM]
        hs = jax.nn.relu(conv + p["conv_bias"][i])
        x = jax.nn.relu(x @ p["w_att"].T + p["b_att"])
        hs = jax.nn.relu(hs @ p["w_att"].T + p["b_att"])
        weights = jnp.tanh(x @ hs.T)
        ws = weights.T * hs
    x_protein = jnp.sum(ws, axis=0, keepdims=True)

    y = jnp.concatenate([x_compound, x_protein], axis=1)
    return y @ p["w_out"].T + p["b_out"]


if __name__ == "__main__":
    key = jax.random.PRNGKey(0)
    kp, kf, ka, kw = jax.random.split(key, 4)
    params = build_params(kp)

    B = 64   # two super-blocks of TB=32 -> two "parallel" grid steps (v7x)
    fingerprints = jax.random.randint(kf, (B, N_ATOMS), 0, N_FINGERPRINT, jnp.int32)
    words = jax.random.randint(kw, (B, SEQ_LEN), 0, N_WORD, jnp.int32)
    adj_rand = jax.random.uniform(ka, (B, N_ATOMS, N_ATOMS))
    adjacency = (adj_rand + jnp.transpose(adj_rand, (0, 2, 1)) > 1.0).astype(jnp.float32)

    # glue: embedding gathers stay outside the kernel
    x_fp = params["embed_fp"][fingerprints]      # (B, N_ATOMS, DIM)
    x_wd = params["embed_wd"][words]             # (B, SEQ_LEN, DIM)

    z = cpi_forward(x_fp, adjacency, x_wd, params)
    z = jax.block_until_ready(z)

    ref_fn = jax.vmap(lambda f, a, w: reference_forward(f, a, w, params)[0])
    z_ref = ref_fn(fingerprints, adjacency, words)
    np.testing.assert_allclose(np.asarray(z), np.asarray(z_ref), rtol=1e-2, atol=1e-2)

    print("KERNEL_OK")
</pallas_src>

<mosaic_0001>
module attributes {stable_mosaic.version = 11 : i64} {
  func.func @cpi_kernel(%arg0: i32, %arg1: memref<1x256x32xf32, #tpu.memory_space<vmem>>, %arg2: memref<1x256x256xf32, #tpu.memory_space<vmem>>, %arg3: memref<1x128x128xf32, #tpu.memory_space<vmem>>, %arg4: memref<2x32x32xf32, #tpu.memory_space<vmem>>, %arg5: memref<2x32xf32, #tpu.memory_space<vmem>>, %arg6: memref<32x256xf32, #tpu.memory_space<vmem>>, %arg7: memref<128x128xf32, #tpu.memory_space<vmem>>, %arg8: memref<1x128xf32, #tpu.memory_space<vmem>>, %arg9: memref<2x640x128xf32, #tpu.memory_space<vmem>>, %arg10: memref<2x128xf32, #tpu.memory_space<vmem>>, %arg11: memref<128x8xf32, #tpu.memory_space<vmem>>, %arg12: memref<8x128xf32, #tpu.memory_space<vmem>>, %arg13: memref<128x128xf32, #tpu.memory_space<vmem>>, %arg14: memref<64x128xf32, #tpu.memory_space<vmem>>, %arg15: memref<1x128xf32, #tpu.memory_space<vmem>>, %arg16: memref<1x32x128xf32, #tpu.memory_space<vmem>>) attributes {dimension_semantics = [#tpu.dimension_semantics<parallel>], iteration_bounds = array<i64: 2>, scalar_prefetch = 0 : i64, scratch_operands = 0 : i64, tpu.core_type = #tpu.core_type<tc>, window_params = [{transform_indices = @transform_0, window_bounds = array<i64: 1, 256, 32>}, {transform_indices = @transform_1, window_bounds = array<i64: 1, 256, 256>}, {transform_indices = @transform_2, window_bounds = array<i64: 1, 128, 128>}, {pipeline_mode = #tpu.pipeline_mode<synchronous>, transform_indices = @transform_3, window_bounds = array<i64: 2, 32, 32>}, {pipeline_mode = #tpu.pipeline_mode<synchronous>, transform_indices = @transform_4, window_bounds = array<i64: 2, 32>}, {pipeline_mode = #tpu.pipeline_mode<synchronous>, transform_indices = @transform_5, window_bounds = array<i64: 32, 256>}, {pipeline_mode = #tpu.pipeline_mode<synchronous>, transform_indices = @transform_6, window_bounds = array<i64: 128, 128>}, {pipeline_mode = #tpu.pipeline_mode<synchronous>, transform_indices = @transform_7, window_bounds = array<i64: 1, 128>}, {pipeline_mode = #tpu.pipeline_mode<synchronous>, transform_indices = @transform_8, window_bounds = array<i64: 2, 640, 128>}, {pipeline_mode = #tpu.pipeline_mode<synchronous>, transform_indices = @transform_9, window_bounds = array<i64: 2, 128>}, {pipeline_mode = #tpu.pipeline_mode<synchronous>, transform_indices = @transform_10, window_bounds = array<i64: 128, 8>}, {pipeline_mode = #tpu.pipeline_mode<synchronous>, transform_indices = @transform_11, window_bounds = array<i64: 8, 128>}, {pipeline_mode = #tpu.pipeline_mode<synchronous>, transform_indices = @transform_12, window_bounds = array<i64: 128, 128>}, {pipeline_mode = #tpu.pipeline_mode<synchronous>, transform_indices = @transform_13, window_bounds = array<i64: 64, 128>}, {pipeline_mode = #tpu.pipeline_mode<synchronous>, transform_indices = @transform_14, window_bounds = array<i64: 1, 128>}, {transform_indices = @transform_15, window_bounds = array<i64: 1, 32, 128>}]} {
    %c0 = arith.constant 0 : index
    %c0_0 = arith.constant 0 : index
    %c0_1 = arith.constant 0 : index
    %0 = vector.load %arg1[%c0, %c0_0, %c0_1] : memref<1x256x32xf32, #tpu.memory_space<vmem>>, vector<1x256x32xf32>
    %1 = vector.shape_cast %0 : vector<1x256x32xf32> to vector<256x32xf32>
    %c0_2 = arith.constant 0 : index
    %c0_3 = arith.constant 0 : index
    %c0_4 = arith.constant 0 : index
    %2 = vector.load %arg2[%c0_2, %c0_3, %c0_4] : memref<1x256x256xf32, #tpu.memory_space<vmem>>, vector<1x256x256xf32>
    %3 = vector.shape_cast %2 : vector<1x256x256xf32> to vector<256x256xf32>
    %c0_5 = arith.constant 0 : index
    %c0_6 = arith.constant 0 : index
    %c0_7 = arith.constant 0 : index
    %4 = vector.load %arg4[%c0_5, %c0_6, %c0_7] : memref<2x32x32xf32, #tpu.memory_space<vmem>>, vector<1x32x32xf32>
    %5 = vector.shape_cast %4 : vector<1x32x32xf32> to vector<32x32xf32>
    %cst = arith.constant dense<0.000000e+00> : vector<256x32xf32>
    %6 = tpu.matmul %1, %5, %cst {dimension_numbers = #tpu.dot_dimension_numbers<[1], [0], [0], [1], [0, 0, 1, 1], [], []>} : vector<256x32xf32>, vector<32x32xf32>, vector<256x32xf32> -> vector<256x32xf32>
    %c0_8 = arith.constant 0 : index
    %c0_9 = arith.constant 0 : index
    %7 = vector.load %arg5[%c0_8, %c0_9] : memref<2x32xf32, #tpu.memory_space<vmem>>, vector<1x32xf32>
    %8 = vector.shape_cast %7 : vector<1x32xf32> to vector<32xf32>
    %9 = vector.shape_cast %8 : vector<32xf32> to vector<1x32xf32>
    %10 = vector.broadcast %9 : vector<1x32xf32> to vector<256x32xf32>
    %11 = arith.addf %6, %10 : vector<256x32xf32>
    %cst_10 = arith.constant 0.000000e+00 : f32
    %12 = vector.broadcast %cst_10 : f32 to vector<256x32xf32>
    %13 = arith.maximumf %11, %12 : vector<256x32xf32>
    %cst_11 = arith.constant dense<0.000000e+00> : vector<256x32xf32>
    %14 = tpu.matmul %3, %13, %cst_11 {dimension_numbers = #tpu.dot_dimension_numbers<[1], [0], [0], [1], [0, 0, 1, 1], [], []>} : vector<256x256xf32>, vector<256x32xf32>, vector<256x32xf32> -> vector<256x32xf32>
    %15 = arith.addf %1, %14 : vector<256x32xf32>
    %c1 = arith.constant 1 : index
    %c0_12 = arith.constant 0 : index
    %c0_13 = arith.constant 0 : index
    %16 = vector.load %arg4[%c1, %c0_12, %c0_13] : memref<2x32x32xf32, #tpu.memory_space<vmem>>, vector<1x32x32xf32>
    %17 = vector.shape_cast %16 : vector<1x32x32xf32> to vector<32x32xf32>
    %cst_14 = arith.constant dense<0.000000e+00> : vector<256x32xf32>
    %18 = tpu.matmul %15, %17, %cst_14 {dimension_numbers = #tpu.dot_dimension_numbers<[1], [0], [0], [1], [0, 0, 1, 1], [], []>} : vector<256x32xf32>, vector<32x32xf32>, vector<256x32xf32> -> vector<256x32xf32>
    %c1_15 = arith.constant 1 : index
    %c0_16 = arith.constant 0 : index
    %19 = vector.load %arg5[%c1_15, %c0_16] : memref<2x32xf32, #tpu.memory_space<vmem>>, vector<1x32xf32>
    %20 = vector.shape_cast %19 : vector<1x32xf32> to vector<32xf32>
    %21 = vector.shape_cast %20 : vector<32xf32> to vector<1x32xf32>
    %22 = vector.broadcast %21 : vector<1x32xf32> to vector<256x32xf32>
    %23 = arith.addf %18, %22 : vector<256x32xf32>
    %cst_17 = arith.constant 0.000000e+00 : f32
    %24 = vector.broadcast %cst_17 : f32 to vector<256x32xf32>
    %25 = arith.maximumf %23, %24 : vector<256x32xf32>
    %cst_18 = arith.constant dense<0.000000e+00> : vector<256x32xf32>
    %26 = tpu.matmul %3, %25, %cst_18 {dimension_numbers = #tpu.dot_dimension_numbers<[1], [0], [0], [1], [0, 0, 1, 1], [], []>} : vector<256x256xf32>, vector<256x32xf32>, vector<256x32xf32> -> vector<256x32xf32>
    %27 = arith.addf %15, %26 : vector<256x32xf32>
    %c0_19 = arith.constant 0 : index
    %c0_20 = arith.constant 0 : index
    %28 = vector.load %arg6[%c0_19, %c0_20] : memref<32x256xf32, #tpu.memory_space<vmem>>, vector<32x256xf32>
    %cst_21 = arith.constant dense<0.000000e+00> : vector<32x32xf32>
    %29 = tpu.matmul %28, %27, %cst_21 {dimension_numbers = #tpu.dot_dimension_numbers<[1], [0], [0], [1], [0, 0, 1, 1], [], []>} : vector<32x256xf32>, vector<256x32xf32>, vector<32x32xf32> -> vector<32x32xf32>
    %30 = vector.extract_strided_slice %29 {offsets = [0, 0], sizes = [8, 32], strides = [1, 1]} : vector<32x32xf32> to vector<8x32xf32>
    %31 = vector.extract_strided_slice %29 {offsets = [8, 0], sizes = [8, 32], strides = [1, 1]} : vector<32x32xf32> to vector<8x32xf32>
    %32 = vector.extract_strided_slice %29 {offsets = [16, 0], sizes = [8, 32], strides = [1, 1]} : vector<32x32xf32> to vector<8x32xf32>
    %33 = vector.extract_strided_slice %29 {offsets = [24, 0], sizes = [8, 32], strides = [1, 1]} : vector<32x32xf32> to vector<8x32xf32>
    %34 = tpu.concatenate %30, %31, %32, %33 in 1 : vector<8x32xf32>, vector<8x32xf32>, vector<8x32xf32>, vector<8x32xf32> -> vector<8x128xf32>
    %c0_22 = arith.constant 0 : index
    %c0_23 = arith.constant 0 : index
    %c0_24 = arith.constant 0 : index
    %35 = vector.load %arg3[%c0_22, %c0_23, %c0_24] : memref<1x128x128xf32, #tpu.memory_space<vmem>>, vector<1x128x128xf32>
    %36 = vector.shape_cast %35 : vector<1x128x128xf32> to vector<128x128xf32>
    %c0_25 = arith.constant 0 : index
    %c0_26 = arith.constant 0 : index
    %37 = vector.load %arg7[%c0_25, %c0_26] : memref<128x128xf32, #tpu.memory_space<vmem>>, vector<128x128xf32>
    %c0_27 = arith.constant 0 : index
    %c0_28 = arith.constant 0 : index
    %38 = vector.load %arg8[%c0_27, %c0_28] : memref<1x128xf32, #tpu.memory_space<vmem>>, vector<1x128xf32>
    %c0_29 = arith.constant 0 : index
    %c0_30 = arith.constant 0 : index
    %39 = vector.load %arg11[%c0_29, %c0_30] : memref<128x8xf32, #tpu.memory_space<vmem>>, vector<128x8xf32>
    %c0_31 = arith.constant 0 : index
    %c0_32 = arith.constant 0 : index
    %40 = vector.load %arg12[%c0_31, %c0_32] : memref<8x128xf32, #tpu.memory_space<vmem>>, vector<8x128xf32>
    %c0_33 = arith.constant 0 : index
    %c0_34 = arith.constant 0 : index
    %41 = vector.load %arg13[%c0_33, %c0_34] : memref<128x128xf32, #tpu.memory_space<vmem>>, vector<128x128xf32>
    %42 = tpu.iota {dimensions = array<i32: 0>} : vector<128x128xi32>
    %c16_i32 = arith.constant 16 : i32
    %c0_i32 = arith.constant 0 : i32
    %43 = arith.cmpi eq, %c16_i32, %c0_i32 : i32
    %c1_i32 = arith.constant 1 : i32
    %44 = arith.select %43, %c1_i32, %c16_i32 : i32
    %45 = vector.broadcast %44 : i32 to vector<128x128xi32>
    %46 = arith.remsi %42, %45 : vector<128x128xi32>
    %c0_i32_35 = arith.constant 0 : i32
    %47 = vector.broadcast %c0_i32_35 : i32 to vector<128x128xi32>
    %48 = arith.cmpi ne, %46, %47 : vector<128x128xi32>
    %c0_i32_36 = arith.constant 0 : i32
    %49 = vector.broadcast %c0_i32_36 : i32 to vector<128x128xi32>
    %50 = arith.cmpi slt, %46, %49 : vector<128x128xi32>
    %c0_i32_37 = arith.constant 0 : i32
    %51 = arith.cmpi slt, %44, %c0_i32_37 : i32
    %52 = vector.broadcast %51 : i1 to vector<128x128xi1>
    %53 = vector.broadcast %52 : vector<128x128xi1> to vector<128x128xi1>
    %54 = arith.xori %50, %53 : vector<128x128xi1>
    %55 = arith.andi %54, %48 : vector<128x128xi1>
    %56 = vector.broadcast %44 : i32 to vector<128x128xi32>
    %57 = arith.addi %46, %56 : vector<128x128xi32>
    %58 = arith.select %55, %57, %46 : vector<128x128xi1>, vector<128x128xi32>
    %c-2_i32 = arith.constant -2 : i32
    %59 = vector.broadcast %c-2_i32 : i32 to vector<128x128xi32>
    %60 = arith.addi %58, %59 : vector<128x128xi32>
    %c0_i32_38 = arith.constant 0 : i32
    %61 = vector.broadcast %c0_i32_38 : i32 to vector<128x128xi32>
    %62 = arith.cmpi sge, %60, %61 : vector<128x128xi32>
    %c-2_i32_39 = arith.constant -2 : i32
    %63 = vector.broadcast %c-2_i32_39 : i32 to vector<128x128xi32>
    %64 = arith.addi %58, %63 : vector<128x128xi32>
    %c16_i32_40 = arith.constant 16 : i32
    %65 = vector.broadcast %c16_i32_40 : i32 to vector<128x128xi32>
    %66 = arith.cmpi slt, %64, %65 : vector<128x128xi32>
    %67 = arith.andi %62, %66 : vector<128x128xi1>
    %c-1_i32 = arith.constant -1 : i32
    %68 = vector.broadcast %c-1_i32 : i32 to vector<128x128xi32>
    %69 = arith.addi %58, %68 : vector<128x128xi32>
    %c0_i32_41 = arith.constant 0 : i32
    %70 = vector.broadcast %c0_i32_41 : i32 to vector<128x128xi32>
    %71 = arith.cmpi sge, %69, %70 : vector<128x128xi32>
    %c-1_i32_42 = arith.constant -1 : i32
    %72 = vector.broadcast %c-1_i32_42 : i32 to vector<128x128xi32>
    %73 = arith.addi %58, %72 : vector<128x128xi32>
    %c16_i32_43 = arith.constant 16 : i32
    %74 = vector.broadcast %c16_i32_43 : i32 to vector<128x128xi32>
    %75 = arith.cmpi slt, %73, %74 : vector<128x128xi32>
    %76 = arith.andi %71, %75 : vector<128x128xi1>
    %c1_i32_44 = arith.constant 1 : i32
    %77 = vector.broadcast %c1_i32_44 : i32 to vector<128x128xi32>
    %78 = arith.addi %58, %77 : vector<128x128xi32>
    %c0_i32_45 = arith.constant 0 : i32
    %79 = vector.broadcast %c0_i32_45 : i32 to vector<128x128xi32>
    %80 = arith.cmpi sge, %78, %79 : vector<128x128xi32>
    %c1_i32_46 = arith.constant 1 : i32
    %81 = vector.broadcast %c1_i32_46 : i32 to vector<128x128xi32>
    %82 = arith.addi %58, %81 : vector<128x128xi32>
    %c16_i32_47 = arith.constant 16 : i32
    %83 = vector.broadcast %c16_i32_47 : i32 to vector<128x128xi32>
    %84 = arith.cmpi slt, %82, %83 : vector<128x128xi32>
    %85 = arith.andi %80, %84 : vector<128x128xi1>
    %c2_i32 = arith.constant 2 : i32
    %86 = vector.broadcast %c2_i32 : i32 to vector<128x128xi32>
    %87 = arith.addi %58, %86 : vector<128x128xi32>
    %c0_i32_48 = arith.constant 0 : i32
    %88 = vector.broadcast %c0_i32_48 : i32 to vector<128x128xi32>
    %89 = arith.cmpi sge, %87, %88 : vector<128x128xi32>
    %c2_i32_49 = arith.constant 2 : i32
    %90 = vector.broadcast %c2_i32_49 : i32 to vector<128x128xi32>
    %91 = arith.addi %58, %90 : vector<128x128xi32>
    %c16_i32_50 = arith.constant 16 : i32
    %92 = vector.broadcast %c16_i32_50 : i32 to vector<128x128xi32>
    %93 = arith.cmpi slt, %91, %92 : vector<128x128xi32>
    %94 = arith.andi %89, %93 : vector<128x128xi1>
    %c2_i32_51 = arith.constant 2 : i32
    %95 = tpu.dynamic_rotate %36 by %c2_i32_51 dim 0 : vector<128x128xf32>, i32 -> vector<128x128xf32>
    %cst_52 = arith.constant 0.000000e+00 : f32
    %96 = vector.broadcast %cst_52 : f32 to vector<128x128xf32>
    %97 = arith.select %67, %95, %96 : vector<128x128xi1>, vector<128x128xf32>
    %c1_i32_53 = arith.constant 1 : i32
    %98 = tpu.dynamic_rotate %36 by %c1_i32_53 dim 0 : vector<128x128xf32>, i32 -> vector<128x128xf32>
    %cst_54 = arith.constant 0.000000e+00 : f32
    %99 = vector.broadcast %cst_54 : f32 to vector<128x128xf32>
    %100 = arith.select %76, %98, %99 : vector<128x128xi1>, vector<128x128xf32>
    %c127_i32 = arith.constant 127 : i32
    %101 = tpu.dynamic_rotate %36 by %c127_i32 dim 0 : vector<128x128xf32>, i32 -> vector<128x128xf32>
    %cst_55 = arith.constant 0.000000e+00 : f32
    %102 = vector.broadcast %cst_55 : f32 to vector<128x128xf32>
    %103 = arith.select %85, %101, %102 : vector<128x128xi1>, vector<128x128xf32>
    %c126_i32 = arith.constant 126 : i32
    %104 = tpu.dynamic_rotate %36 by %c126_i32 dim 0 : vector<128x128xf32>, i32 -> vector<128x128xf32>
    %cst_56 = arith.constant 0.000000e+00 : f32
    %105 = vector.broadcast %cst_56 : f32 to vector<128x128xf32>
    %106 = arith.select %94, %104, %105 : vector<128x128xi1>, vector<128x128xf32>
    %107 = tpu.concatenate %97, %100, %36, %103, %106 in 1 : vector<128x128xf32>, vector<128x128xf32>, vector<128x128xf32>, vector<128x128xf32>, vector<128x128xf32> -> vector<128x640xf32>
    %c0_57 = arith.constant 0 : index
    %c0_58 = arith.constant 0 : index
    %c0_59 = arith.constant 0 : index
    %108 = vector.load %arg9[%c0_57, %c0_58, %c0_59] : memref<2x640x128xf32, #tpu.memory_space<vmem>>, vector<1x640x128xf32>
    %109 = vector.shape_cast %108 : vector<1x640x128xf32> to vector<640x128xf32>
    %cst_60 = arith.constant dense<0.000000e+00> : vector<128x128xf32>
    %110 = tpu.matmul %107, %109, %cst_60 {dimension_numbers = #tpu.dot_dimension_numbers<[1], [0], [0], [1], [0, 0, 1, 1], [], []>} : vector<128x640xf32>, vector<640x128xf32>, vector<128x128xf32> -> vector<128x128xf32>
    %c0_61 = arith.constant 0 : index
    %c0_62 = arith.constant 0 : index
    %111 = vector.load %arg10[%c0_61, %c0_62] : memref<2x128xf32, #tpu.memory_space<vmem>>, vector<1x128xf32>
    %112 = vector.shape_cast %111 : vector<1x128xf32> to vector<128xf32>
    %113 = vector.shape_cast %112 : vector<128xf32> to vector<1x128xf32>
    %114 = vector.broadcast %113 : vector<1x128xf32> to vector<128x128xf32>
    %115 = arith.addf %110, %114 : vector<128x128xf32>
    %cst_63 = arith.constant 0.000000e+00 : f32
    %116 = vector.broadcast %cst_63 : f32 to vector<128x128xf32>
    %117 = arith.maximumf %115, %116 : vector<128x128xf32>
    %cst_64 = arith.constant dense<0.000000e+00> : vector<8x128xf32>
    %118 = tpu.matmul %34, %37, %cst_64 {dimension_numbers = #tpu.dot_dimension_numbers<[1], [0], [0], [1], [0, 0, 1, 1], [], []>} : vector<8x128xf32>, vector<128x128xf32>, vector<8x128xf32> -> vector<8x128xf32>
    %119 = vector.broadcast %38 : vector<1x128xf32> to vector<8x128xf32>
    %120 = arith.addf %118, %119 : vector<8x128xf32>
    %cst_65 = arith.constant 0.000000e+00 : f32
    %121 = vector.broadcast %cst_65 : f32 to vector<8x128xf32>
    %122 = arith.maximumf %120, %121 : vector<8x128xf32>
    %cst_66 = arith.constant dense<0.000000e+00> : vector<128x128xf32>
    %123 = tpu.matmul %117, %37, %cst_66 {dimension_numbers = #tpu.dot_dimension_numbers<[1], [0], [0], [1], [0, 0, 1, 1], [], []>} : vector<128x128xf32>, vector<128x128xf32>, vector<128x128xf32> -> vector<128x128xf32>
    %124 = vector.broadcast %38 : vector<1x128xf32> to vector<128x128xf32>
    %125 = arith.addf %123, %124 : vector<128x128xf32>
    %cst_67 = arith.constant 0.000000e+00 : f32
    %126 = vector.broadcast %cst_67 : f32 to vector<128x128xf32>
    %127 = arith.maximumf %125, %126 : vector<128x128xf32>
    %cst_68 = arith.constant dense<0.000000e+00> : vector<128x128xf32>
    %128 = tpu.matmul %39, %122, %cst_68 {dimension_numbers = #tpu.dot_dimension_numbers<[1], [0], [0], [1], [0, 0, 1, 1], [], []>} : vector<128x8xf32>, vector<8x128xf32>, vector<128x128xf32> -> vector<128x128xf32>
    %129 = arith.mulf %127, %128 : vector<128x128xf32>
    %cst_69 = arith.constant dense<0.000000e+00> : vector<128x128xf32>
    %130 = tpu.matmul %129, %41, %cst_69 {dimension_numbers = #tpu.dot_dimension_numbers<[1], [0], [0], [1], [0, 0, 1, 1], [], []>} : vector<128x128xf32>, vector<128x128xf32>, vector<128x128xf32> -> vector<128x128xf32>
    %131 = math.tanh %130 : vector<128x128xf32>
    %132 = arith.mulf %131, %127 : vector<128x128xf32>
    %c2_i32_70 = arith.constant 2 : i32
    %133 = tpu.dynamic_rotate %132 by %c2_i32_70 dim 0 : vector<128x128xf32>, i32 -> vector<128x128xf32>
    %cst_71 = arith.constant 0.000000e+00 : f32
    %134 = vector.broadcast %cst_71 : f32 to vector<128x128xf32>
    %135 = arith.select %67, %133, %134 : vector<128x128xi1>, vector<128x128xf32>
    %c1_i32_72 = arith.constant 1 : i32
    %136 = tpu.dynamic_rotate %132 by %c1_i32_72 dim 0 : vector<128x128xf32>, i32 -> vector<128x128xf32>
    %cst_73 = arith.constant 0.000000e+00 : f32
    %137 = vector.broadcast %cst_73 : f32 to vector<128x128xf32>
    %138 = arith.select %76, %136, %137 : vector<128x128xi1>, vector<128x128xf32>
    %c127_i32_74 = arith.constant 127 : i32
    %139 = tpu.dynamic_rotate %132 by %c127_i32_74 dim 0 : vector<128x128xf32>, i32 -> vector<128x128xf32>
    %cst_75 = arith.constant 0.000000e+00 : f32
    %140 = vector.broadcast %cst_75 : f32 to vector<128x128xf32>
    %141 = arith.select %85, %139, %140 : vector<128x128xi1>, vector<128x128xf32>
    %c126_i32_76 = arith.constant 126 : i32
    %142 = tpu.dynamic_rotate %132 by %c126_i32_76 dim 0 : vector<128x128xf32>, i32 -> vector<128x128xf32>
    %cst_77 = arith.constant 0.000000e+00 : f32
    %143 = vector.broadcast %cst_77 : f32 to vector<128x128xf32>
    %144 = arith.select %94, %142, %143 : vector<128x128xi1>, vector<128x128xf32>
    %145 = tpu.concatenate %135, %138, %132, %141, %144 in 1 : vector<128x128xf32>, vector<128x128xf32>, vector<128x128xf32>, vector<128x128xf32>, vector<128x128xf32> -> vector<128x640xf32>
    %c1_78 = arith.constant 1 : index
    %c0_79 = arith.constant 0 : index
    %c0_80 = arith.constant 0 : index
    %146 = vector.load %arg9[%c1_78, %c0_79, %c0_80] : memref<2x640x128xf32, #tpu.memory_space<vmem>>, vector<1x640x128xf32>
    %147 = vector.shape_cast %146 : vector<1x640x128xf32> to vector<640x128xf32>
    %cst_81 = arith.constant dense<0.000000e+00> : vector<128x128xf32>
    %148 = tpu.matmul %145, %147, %cst_81 {dimension_numbers = #tpu.dot_dimension_numbers<[1], [0], [0], [1], [0, 0, 1, 1], [], []>} : vector<128x640xf32>, vector<640x128xf32>, vector<128x128xf32> -> vector<128x128xf32>
    %c1_82 = arith.constant 1 : index
    %c0_83 = arith.constant 0 : index
    %149 = vector.load %arg10[%c1_82, %c0_83] : memref<2x128xf32, #tpu.memory_space<vmem>>, vector<1x128xf32>
    %150 = vector.shape_cast %149 : vector<1x128xf32> to vector<128xf32>
    %151 = vector.shape_cast %150 : vector<128xf32> to vector<1x128xf32>
    %152 = vector.broadcast %151 : vector<1x128xf32> to vector<128x128xf32>
    %153 = arith.addf %148, %152 : vector<128x128xf32>
    %cst_84 = arith.constant 0.000000e+00 : f32
    %154 = vector.broadcast %cst_84 : f32 to vector<128x128xf32>
    %155 = arith.maximumf %153, %154 : vector<128x128xf32>
    %cst_85 = arith.constant dense<0.000000e+00> : vector<8x128xf32>
    %156 = tpu.matmul %122, %37, %cst_85 {dimension_numbers = #tpu.dot_dimension_numbers<[1], [0], [0], [1], [0, 0, 1, 1], [], []>} : vector<8x128xf32>, vector<128x128xf32>, vector<8x128xf32> -> vector<8x128xf32>
    %157 = vector.broadcast %38 : vector<1x128xf32> to vector<8x128xf32>
    %158 = arith.addf %156, %157 : vector<8x128xf32>
    %cst_86 = arith.constant 0.000000e+00 : f32
    %159 = vector.broadcast %cst_86 : f32 to vector<8x128xf32>
    %160 = arith.maximumf %158, %159 : vector<8x128xf32>
    %cst_87 = arith.constant dense<0.000000e+00> : vector<128x128xf32>
    %161 = tpu.matmul %155, %37, %cst_87 {dimension_numbers = #tpu.dot_dimension_numbers<[1], [0], [0], [1], [0, 0, 1, 1], [], []>} : vector<128x128xf32>, vector<128x128xf32>, vector<128x128xf32> -> vector<128x128xf32>
    %162 = vector.broadcast %38 : vector<1x128xf32> to vector<128x128xf32>
    %163 = arith.addf %161, %162 : vector<128x128xf32>
    %cst_88 = arith.constant 0.000000e+00 : f32
    %164 = vector.broadcast %cst_88 : f32 to vector<128x128xf32>
    %165 = arith.maximumf %163, %164 : vector<128x128xf32>
    %cst_89 = arith.constant dense<0.000000e+00> : vector<128x128xf32>
    %166 = tpu.matmul %39, %160, %cst_89 {dimension_numbers = #tpu.dot_dimension_numbers<[1], [0], [0], [1], [0, 0, 1, 1], [], []>} : vector<128x8xf32>, vector<8x128xf32>, vector<128x128xf32> -> vector<128x128xf32>
    %167 = arith.mulf %165, %166 : vector<128x128xf32>
    %cst_90 = arith.constant dense<0.000000e+00> : vector<128x128xf32>
    %168 = tpu.matmul %167, %41, %cst_90 {dimension_numbers = #tpu.dot_dimension_numbers<[1], [0], [0], [1], [0, 0, 1, 1], [], []>} : vector<128x128xf32>, vector<128x128xf32>, vector<128x128xf32> -> vector<128x128xf32>
    %169 = math.tanh %168 : vector<128x128xf32>
    %170 = arith.mulf %169, %165 : vector<128x128xf32>
    %cst_91 = arith.constant dense<0.000000e+00> : vector<8x128xf32>
    %171 = tpu.matmul %40, %170, %cst_91 {dimension_numbers = #tpu.dot_dimension_numbers<[1], [0], [0], [1], [0, 0, 1, 1], [], []>} : vector<8x128xf32>, vector<128x128xf32>, vector<8x128xf32> -> vector<8x128xf32>
    %172 = vector.extract_strided_slice %171 {offsets = [0, 0], sizes = [8, 32], strides = [1, 1]} : vector<8x128xf32> to vector<8x32xf32>
    %173 = vector.extract_strided_slice %171 {offsets = [0, 32], sizes = [8, 32], strides = [1, 1]} : vector<8x128xf32> to vector<8x32xf32>
    %174 = vector.extract_strided_slice %171 {offsets = [0, 64], sizes = [8, 32], strides = [1, 1]} : vector<8x128xf32> to vector<8x32xf32>
    %175 = vector.extract_strided_slice %171 {offsets = [0, 96], sizes = [8, 32], strides = [1, 1]} : vector<8x128xf32> to vector<8x32xf32>
    %176 = tpu.concatenate %172, %173, %174, %175 in 0 : vector<8x32xf32>, vector<8x32xf32>, vector<8x32xf32>, vector<8x32xf32> -> vector<32x32xf32>
    %c0_92 = arith.constant 0 : index
    %c0_93 = arith.constant 0 : index
    %177 = vector.load %arg14[%c0_92, %c0_93] : memref<64x128xf32, #tpu.memory_space<vmem>>, vector<64x128xf32>
    %178 = vector.extract_strided_slice %177 {offsets = [0, 0], sizes = [32, 128], strides = [1, 1]} : vector<64x128xf32> to vector<32x128xf32>
    %cst_94 = arith.constant dense<0.000000e+00> : vector<32x128xf32>
    %179 = tpu.matmul %29, %178, %cst_94 {dimension_numbers = #tpu.dot_dimension_numbers<[1], [0], [0], [1], [0, 0, 1, 1], [], []>} : vector<32x32xf32>, vector<32x128xf32>, vector<32x128xf32> -> vector<32x128xf32>
    %180 = vector.extract_strided_slice %177 {offsets = [32, 0], sizes = [32, 128], strides = [1, 1]} : vector<64x128xf32> to vector<32x128xf32>
    %cst_95 = arith.constant dense<0.000000e+00> : vector<32x128xf32>
    %181 = tpu.matmul %176, %180, %cst_95 {dimension_numbers = #tpu.dot_dimension_numbers<[1], [0], [0], [1], [0, 0, 1, 1], [], []>} : vector<32x32xf32>, vector<32x128xf32>, vector<32x128xf32> -> vector<32x128xf32>
    %182 = arith.addf %179, %181 : vector<32x128xf32>
    %c0_96 = arith.constant 0 : index
    %c0_97 = arith.constant 0 : index
    %183 = vector.load %arg15[%c0_96, %c0_97] : memref<1x128xf32, #tpu.memory_space<vmem>>, vector<1x128xf32>
    %184 = vector.broadcast %183 : vector<1x128xf32> to vector<32x128xf32>
    %185 = arith.addf %182, %184 : vector<32x128xf32>
    %c0_98 = arith.constant 0 : index
    %c0_99 = arith.constant 0 : index
    %c0_100 = arith.constant 0 : index
    %186 = vector.load %arg16[%c0_98, %c0_99, %c0_100] : memref<1x32x128xf32, #tpu.memory_space<vmem>>, vector<1x32x128xf32>
    %187 = vector.shape_cast %186 : vector<1x32x128xf32> to vector<32x128xf32>
    %188 = vector.shape_cast %185 : vector<32x128xf32> to vector<1x32x128xf32>
    tpu.vector_store %arg16[%c0_98, %c0_99, %c0_100], %188 {strides = array<i32>} : memref<1x32x128xf32, #tpu.memory_space<vmem>>, vector<1x32x128xf32>,
    return
  }
  func.func @transform_0(%arg0: i32) -> (i32, i32, i32) {
    %c0_i32 = arith.constant 0 : i32
    %c0_i32_0 = arith.constant 0 : i32
    %c0_i32_1 = arith.constant 0 : i32
    return %arg0, %c0_i32, %c0_i32_0 : i32, i32, i32
  }
  func.func @transform_1(%arg0: i32) -> (i32, i32, i32) {
    %c0_i32 = arith.constant 0 : i32
    %c0_i32_0 = arith.constant 0 : i32
    %c0_i32_1 = arith.constant 0 : i32
    return %arg0, %c0_i32, %c0_i32_0 : i32, i32, i32
  }
  func.func @transform_2(%arg0: i32) -> (i32, i32, i32) {
    %c0_i32 = arith.constant 0 : i32
    %c0_i32_0 = arith.constant 0 : i32
    %c0_i32_1 = arith.constant 0 : i32
    return %arg0, %c0_i32, %c0_i32_0 : i32, i32, i32
  }
  func.func @transform_3(%arg0: i32) -> (i32, i32, i32) {
    %c0_i32 = arith.constant 0 : i32
    %c0_i32_0 = arith.constant 0 : i32
    %c0_i32_1 = arith.constant 0 : i32
    %c0_i32_2 = arith.constant 0 : i32
    return %c0_i32, %c0_i32_0, %c0_i32_1 : i32, i32, i32
  }
  func.func @transform_4(%arg0: i32) -> (i32, i32) {
    %c0_i32 = arith.constant 0 : i32
    %c0_i32_0 = arith.constant 0 : i32
    %c0_i32_1 = arith.constant 0 : i32
    return %c0_i32, %c0_i32_0 : i32, i32
  }
  func.func @transform_5(%arg0: i32) -> (i32, i32) {
    %c0_i32 = arith.constant 0 : i32
    %c0_i32_0 = arith.constant 0 : i32
    %c0_i32_1 = arith.constant 0 : i32
    return %c0_i32, %c0_i32_0 : i32, i32
  }
  func.func @transform_6(%arg0: i32) -> (i32, i32) {
    %c0_i32 = arith.constant 0 : i32
    %c0_i32_0 = arith.constant 0 : i32
    %c0_i32_1 = arith.constant 0 : i32
    return %c0_i32, %c0_i32_0 : i32, i32
  }
  func.func @transform_7(%arg0: i32) -> (i32, i32) {
    %c0_i32 = arith.constant 0 : i32
    %c0_i32_0 = arith.constant 0 : i32
    %c0_i32_1 = arith.constant 0 : i32
    return %c0_i32, %c0_i32_0 : i32, i32
  }
  func.func @transform_8(%arg0: i32) -> (i32, i32, i32) {
    %c0_i32 = arith.constant 0 : i32
    %c0_i32_0 = arith.constant 0 : i32
    %c0_i32_1 = arith.constant 0 : i32
    %c0_i32_2 = arith.constant 0 : i32
    return %c0_i32, %c0_i32_0, %c0_i32_1 : i32, i32, i32
  }
  func.func @transform_9(%arg0: i32) -> (i32, i32) {
    %c0_i32 = arith.constant 0 : i32
    %c0_i32_0 = arith.constant 0 : i32
    %c0_i32_1 = arith.constant 0 : i32
    return %c0_i32, %c0_i32_0 : i32, i32
  }
  func.func @transform_10(%arg0: i32) -> (i32, i32) {
    %c0_i32 = arith.constant 0 : i32
    %c0_i32_0 = arith.constant 0 : i32
    %c0_i32_1 = arith.constant 0 : i32
    return %c0_i32, %c0_i32_0 : i32, i32
  }
  func.func @transform_11(%arg0: i32) -> (i32, i32) {
    %c0_i32 = arith.constant 0 : i32
    %c0_i32_0 = arith.constant 0 : i32
    %c0_i32_1 = arith.constant 0 : i32
    return %c0_i32, %c0_i32_0 : i32, i32
  }
  func.func @transform_12(%arg0: i32) -> (i32, i32) {
    %c0_i32 = arith.constant 0 : i32
    %c0_i32_0 = arith.constant 0 : i32
    %c0_i32_1 = arith.constant 0 : i32
    return %c0_i32, %c0_i32_0 : i32, i32
  }
  func.func @transform_13(%arg0: i32) -> (i32, i32) {
    %c0_i32 = arith.constant 0 : i32
    %c0_i32_0 = arith.constant 0 : i32
    %c0_i32_1 = arith.constant 0 : i32
    return %c0_i32, %c0_i32_0 : i32, i32
  }
  func.func @transform_14(%arg0: i32) -> (i32, i32) {
    %c0_i32 = arith.constant 0 : i32
    %c0_i32_0 = arith.constant 0 : i32
    %c0_i32_1 = arith.constant 0 : i32
    return %c0_i32, %c0_i32_0 : i32, i32
  }
  func.func @transform_15(%arg0: i32) -> (i32, i32, i32) {
    %c0_i32 = arith.constant 0 : i32
    %c0_i32_0 = arith.constant 0 : i32
    %c0_i32_1 = arith.constant 0 : i32
    return %arg0, %c0_i32, %c0_i32_0 : i32, i32, i32
  }
}

</mosaic_0001>

<llo_original>
// kernel: tpu_custom_call.1
$region0: #{tpu_custom_call.1}
  #allocation0 [shape = 'u32[]', space=smem, size = 0x4, offset = 0x4, fixed_abs, tag = 'smem constant byte address 0x4 - core index']
  #allocation1 [shape = 'u32[72,128]{1,0:T(1,128)}', space=vmem, size = 0x9000, scoped, tag = 'internal scratch']
  %s0 = inlined_call_operand.vmem [shape: f32[2,256,32], index: 0, kind: input, shape index: {}]
  %s1 = inlined_call_operand.hbm [shape: f32[2,256,256], index: 1, kind: input, shape index: {}]
  %s2 = inlined_call_operand.vmem [shape: f32[2,128,128], index: 2, kind: input, shape index: {}]
  %s3 = inlined_call_operand.vmem [shape: f32[2,32,32], index: 3, kind: input, shape index: {}]
  %s4 = inlined_call_operand.hbm [shape: f32[2,32], index: 4, kind: input, shape index: {}]
  %s5 = inlined_call_operand.vmem [shape: f32[32,256], index: 5, kind: input, shape index: {}]
  %s6 = inlined_call_operand.vmem [shape: f32[128,128], index: 6, kind: input, shape index: {}]
  %s7 = inlined_call_operand.hbm [shape: f32[1,128], index: 7, kind: input, shape index: {}]
  %s8 = inlined_call_operand.hbm [shape: f32[2,640,128], index: 8, kind: input, shape index: {}]
  %s9 = inlined_call_operand.hbm [shape: f32[2,128], index: 9, kind: input, shape index: {}]
  %s10 = inlined_call_operand.vmem [shape: f32[128,8], index: 10, kind: input, shape index: {}]
  %s11 = inlined_call_operand.vmem [shape: f32[8,128], index: 11, kind: input, shape index: {}]
  %s12 = inlined_call_operand.vmem [shape: f32[128,128], index: 12, kind: input, shape index: {}]
  %s13 = inlined_call_operand.hbm [shape: f32[64,128], index: 13, kind: input, shape index: {}]
  %s14 = inlined_call_operand.vmem [shape: f32[1,128], index: 14, kind: input, shape index: {}]
  %s15 = inlined_call_operand.hbm [shape: f32[2,32,128], index: 15, kind: output, shape index: {}]
  %s16 = sld [smem:[#allocation0]]
  $region117: #{tpu_custom_call.1} parent=0
    _
  %s18 = ssub.s32 1, %s16
  %s19 = scalar_select 0, %s18, %s16
  $region1: #{tpu_custom_call.1} parent=0
    #allocation2 [shape = 'u8[524288]{0}', space=vmem, size = 0x80000, scoped, tag = 'input window, operand 1']
    #allocation3 [shape = 's32[2]{0}', space=sflag, size = 0x8, scoped, tag = 'scoped memory for tpu_custom_call.1']
    #allocation4 [shape = 's32[2]{0}', space=sflag, size = 0x8, scoped, tag = 'scoped memory for tpu_custom_call.1']
    #allocation5 [shape = 'u8[1024]{0}', space=vmem, size = 0x400, scoped, tag = 'input window, operand 4, single buffered']
    #allocation6 [shape = 's32[1]{0}', space=sflag, size = 0x4, scoped, tag = 'scoped memory for tpu_custom_call.1']
    #allocation7 [shape = 'u8[512]{0}', space=vmem, size = 0x400, scoped, tag = 'input window, operand 7, single buffered']
    #allocation8 [shape = 'u8[655360]{0}', space=vmem, size = 0xa0000, scoped, tag = 'input window, operand 8, single buffered']
    #allocation9 [shape = 's32[1]{0}', space=sflag, size = 0x4, scoped, tag = 'scoped memory for tpu_custom_call.1']
    #allocation10 [shape = 'u8[1024]{0}', space=vmem, size = 0x400, scoped, tag = 'input window, operand 9, single buffered']
    #allocation11 [shape = 'u8[32768]{0}', space=vmem, size = 0x8000, scoped, tag = 'input window, operand 13, single buffered']
    #allocation12 [shape = 's32[1]{0}', space=sflag, size = 0x4, scoped, tag = 'scoped memory for tpu_custom_call.1']
    #allocation13 [shape = 'u8[32768]{0}', space=vmem, size = 0x8000, scoped, tag = 'output window, operand 0']
    %20 = vsyncpa [#allocation3], 0
    %s21 = scalar_lea.sflag [#allocation3], 1
    %22 = vsyncpa %s21, 0
    %23 = vsyncpa [#allocation6], 0
    %24 = vsyncpa [#allocation9], 0
    %25 = vsyncpa [#allocation12], 0
    %26 = vsyncpa [#allocation4], 0
    %s27 = scalar_lea.sflag [#allocation4], 1
    %28 = vsyncpa %s27, 0
    loop: start=0, step=1, limit=4
    $region2: #{tpu_custom_call.1} parent=1 // loop_pre_header
      _
    $region3: #{tpu_custom_call.1} parent=1 // loop_header
      %s30 = sphi 0, %s34
      %p31 = scmp.ge.s32.totalorder %s30, 4
      %s40 = sphi 0, %s42
      %s43 = sphi 0, %s40
      %s44 = sphi 0, %s43
      %s60 = sphi 0, %s44
      %s66 = sphi 0, %s68
      %s69 = sphi 0, %s66
      %s70 = sphi 0, %s69
      %s86 = sphi 0, %s70
      %s92 = sphi 0, %s94
      %s95 = sphi 0, %s92
      %s96 = sphi 0, %s95
      %s112 = sphi 0, %s96
      %s116 = sphi 0, %s116
      %s118 = sphi 0, %s116
      %s119 = sphi 0, %s118
      %s133 = sphi 0, %s119
      %s137 = sphi 0, %s137
      %s139 = sphi 0, %s137
      %s140 = sphi 0, %s139
      %s154 = sphi 0, %s140
      %s158 = sphi 0, %s158
      %s160 = sphi 0, %s158
      %s161 = sphi 0, %s160
      %s175 = sphi 0, %s161
      %s179 = sphi 0, %s179
      %s181 = sphi 0, %s179
      %s182 = sphi 0, %s181
      %s196 = sphi 0, %s182
      %s200 = sphi 0, %s200
      %s202 = sphi 0, %s200
      %s203 = sphi 0, %s202
      %s217 = sphi 0, %s203
      %s221 = sphi 0, %s221
      %s223 = sphi 0, %s221
      %s224 = sphi 0, %s223
      %s238 = sphi 0, %s224
      %s242 = sphi 0, %s242
      %s244 = sphi 0, %s242
      %s245 = sphi 0, %s244
      %s259 = sphi 0, %s245
      %s263 = sphi 0, %s263
      %s265 = sphi 0, %s263
      %s266 = sphi 0, %s265
      %s280 = sphi 0, %s266
      %s284 = sphi 0, %s284
      %s286 = sphi 0, %s284
      %s287 = sphi 0, %s286
      %s301 = sphi 0, %s287
      %s305 = sphi 0, %s305
      %s307 = sphi 0, %s305
      %s308 = sphi 0, %s307
      %s322 = sphi 0, %s308
      %s326 = sphi 0, %s326
      %s328 = sphi 0, %s326
      %s329 = sphi 0, %s328
      %s343 = sphi 0, %s329
      %s347 = sphi 0, %s347
      %s349 = sphi 0, %s347
      %s350 = sphi 0, %s349
      %s364 = sphi 0, %s350
      %s370 = sphi 0, %s372
      %s373 = sphi 0, %s370
      %s374 = sphi 0, %s373
      %s390 = sphi 0, %s374
    $region4: #{tpu_custom_call.1} parent=1 // loop_header_branch
      %33 = sbr.rel (%p31) target = $region8
    $region5: #{tpu_custom_call.1} parent=1 // loop_body
      %s35 = ssub.s32 %s30, 1
      %s36 = ssub.s32 %s30, 2
      %s37 = sadd.s32 %s30, 1
      %s38 = ssub.s32 %s30, %s37
      %p39 = scmp.eq.s32.totalorder %s38, 0
      %s41 = sadd.s32 %s40, 1
      %s42 = scalar_select %p39, %s40, %s41
      %p45 = pneg %p39
      %p46 = scmp.eq.s32.totalorder %s30, 1
      %p47 = por %p45, %p46
      %p48 = scmp.ne.s32.totalorder %s40, %s43
      %p49 = scmp.eq.s32.totalorder %s30, 0
      %p50 = por %p48, %p49
      %p51 = scmp.ne.s32.totalorder %s40, %s43
      %p52 = scmp.eq.s32.totalorder %s35, 1
      %p53 = por %p51, %p52
      %p54 = scmp.ne.s32.totalorder %s43, %s44
      %p55 = scmp.eq.s32.totalorder %s35, 0
      %p56 = por %p54, %p55
      %p57 = scmp.ne.s32.totalorder %s43, %s44
      %p58 = scmp.eq.s32.totalorder %s36, 1
      %p59 = por %p57, %p58
      %p61 = scmp.ne.s32.totalorder %s44, %s60
      %p62 = scmp.eq.s32.totalorder %s36, 0
      %p63 = por %p61, %p62
      %s64 = ssub.s32 %s30, %s37
      %p65 = scmp.eq.s32.totalorder %s64, 0
      %s67 = sadd.s32 %s66, 1
      %s68 = scalar_select %p65, %s66, %s67
      %p71 = pneg %p65
      %p72 = scmp.eq.s32.totalorder %s30, 1
      %p73 = por %p71, %p72
      %p74 = scmp.ne.s32.totalorder %s66, %s69
      %p75 = scmp.eq.s32.totalorder %s30, 0
      %p76 = por %p74, %p75
      %p77 = scmp.ne.s32.totalorder %s66, %s69
      %p78 = scmp.eq.s32.totalorder %s35, 1
      %p79 = por %p77, %p78
      %p80 = scmp.ne.s32.totalorder %s69, %s70
      %p81 = scmp.eq.s32.totalorder %s35, 0
      %p82 = por %p80, %p81
      %p83 = scmp.ne.s32.totalorder %s69, %s70
      %p84 = scmp.eq.s32.totalorder %s36, 1
      %p85 = por %p83, %p84
      %p87 = scmp.ne.s32.totalorder %s70, %s86
      %p88 = scmp.eq.s32.totalorder %s36, 0
      %p89 = por %p87, %p88
      %s90 = ssub.s32 %s30, %s37
      %p91 = scmp.eq.s32.totalorder %s90, 0
      %s93 = sadd.s32 %s92, 1
      %s94 = scalar_select %p91, %s92, %s93
      %p97 = pneg %p91
      %p98 = scmp.eq.s32.totalorder %s30, 1
      %p99 = por %p97, %p98
      %p100 = scmp.ne.s32.totalorder %s92, %s95
      %p101 = scmp.eq.s32.totalorder %s30, 0
      %p102 = por %p100, %p101
      %p103 = scmp.ne.s32.totalorder %s92, %s95
      %p104 = scmp.eq.s32.totalorder %s35, 1
      %p105 = por %p103, %p104
      %p106 = scmp.ne.s32.totalorder %s95, %s96
      %p107 = scmp.eq.s32.totalorder %s35, 0
      %p108 = por %p106, %p107
      %p109 = scmp.ne.s32.totalorder %s95, %s96
      %p110 = scmp.eq.s32.totalorder %s36, 1
      %p111 = por %p109, %p110
      %p113 = scmp.ne.s32.totalorder %s96, %s112
      %p114 = scmp.eq.s32.totalorder %s36, 0
      %p115 = por %p113, %p114
      %s117 = sadd.s32 %s116, 1
      %p120 = scmp.eq.s32.totalorder %s30, 1
      %p121 = scmp.ne.s32.totalorder %s116, %s118
      %p122 = scmp.eq.s32.totalorder %s30, 0
      %p123 = por %p121, %p122
      %p124 = scmp.ne.s32.totalorder %s116, %s118
      %p125 = scmp.eq.s32.totalorder %s35, 1
      %p126 = por %p124, %p125
      %p127 = scmp.ne.s32.totalorder %s118, %s119
      %p128 = scmp.eq.s32.totalorder %s35, 0
      %p129 = por %p127, %p128
      %p130 = scmp.ne.s32.totalorder %s118, %s119
      %p131 = scmp.eq.s32.totalorder %s36, 1
      %p132 = por %p130, %p131
      %p134 = scmp.ne.s32.totalorder %s119, %s133
      %p135 = scmp.eq.s32.totalorder %s36, 0
      %p136 = por %p134, %p135
      %s138 = sadd.s32 %s137, 1
      %p141 = scmp.eq.s32.totalorder %s30, 1
      %p142 = scmp.ne.s32.totalorder %s137, %s139
      %p143 = scmp.eq.s32.totalorder %s30, 0
      %p144 = por %p142, %p143
      %p145 = scmp.ne.s32.totalorder %s137, %s139
      %p146 = scmp.eq.s32.totalorder %s35, 1
      %p147 = por %p145, %p146
      %p148 = scmp.ne.s32.totalorder %s139, %s140
      %p149 = scmp.eq.s32.totalorder %s35, 0
      %p150 = por %p148, %p149
      %p151 = scmp.ne.s32.totalorder %s139, %s140
      %p152 = scmp.eq.s32.totalorder %s36, 1
      %p153 = por %p151, %p152
      %p155 = scmp.ne.s32.totalorder %s140, %s154
      %p156 = scmp.eq.s32.totalorder %s36, 0
      %p157 = por %p155, %p156
      %s159 = sadd.s32 %s158, 1
      %p162 = scmp.eq.s32.totalorder %s30, 1
      %p163 = scmp.ne.s32.totalorder %s158, %s160
      %p164 = scmp.eq.s32.totalorder %s30, 0
      %p165 = por %p163, %p164
      %p166 = scmp.ne.s32.totalorder %s158, %s160
      %p167 = scmp.eq.s32.totalorder %s35, 1
      %p168 = por %p166, %p167
      %p169 = scmp.ne.s32.totalorder %s160, %s161
      %p170 = scmp.eq.s32.totalorder %s35, 0
      %p171 = por %p169, %p170
      %p172 = scmp.ne.s32.totalorder %s160, %s161
      %p173 = scmp.eq.s32.totalorder %s36, 1
      %p174 = por %p172, %p173
      %p176 = scmp.ne.s32.totalorder %s161, %s175
      %p177 = scmp.eq.s32.totalorder %s36, 0
      %p178 = por %p176, %p177
      %s180 = sadd.s32 %s179, 1
      %p183 = scmp.eq.s32.totalorder %s30, 1
      %p184 = scmp.ne.s32.totalorder %s179, %s181
      %p185 = scmp.eq.s32.totalorder %s30, 0
      %p186 = por %p184, %p185
      %p187 = scmp.ne.s32.totalorder %s179, %s181
      %p188 = scmp.eq.s32.totalorder %s35, 1
      %p189 = por %p187, %p188
      %p190 = scmp.ne.s32.totalorder %s181, %s182
      %p191 = scmp.eq.s32.totalorder %s35, 0
      %p192 = por %p190, %p191
      %p193 = scmp.ne.s32.totalorder %s181, %s182
      %p194 = scmp.eq.s32.totalorder %s36, 1
      %p195 = por %p193, %p194
      %p197 = scmp.ne.s32.totalorder %s182, %s196
      %p198 = scmp.eq.s32.totalorder %s36, 0
      %p199 = por %p197, %p198
      %s201 = sadd.s32 %s200, 1
      %p204 = scmp.eq.s32.totalorder %s30, 1
      %p205 = scmp.ne.s32.totalorder %s200, %s202
      %p206 = scmp.eq.s32.totalorder %s30, 0
      %p207 = por %p205, %p206
      %p208 = scmp.ne.s32.totalorder %s200, %s202
      %p209 = scmp.eq.s32.totalorder %s35, 1
      %p210 = por %p208, %p209
      %p211 = scmp.ne.s32.totalorder %s202, %s203
      %p212 = scmp.eq.s32.totalorder %s35, 0
      %p213 = por %p211, %p212
      %p214 = scmp.ne.s32.totalorder %s202, %s203
      %p215 = scmp.eq.s32.totalorder %s36, 1
      %p216 = por %p214, %p215
      %p218 = scmp.ne.s32.totalorder %s203, %s217
      %p219 = scmp.eq.s32.totalorder %s36, 0
      %p220 = por %p218, %p219
      %s222 = sadd.s32 %s221, 1
      %p225 = scmp.eq.s32.totalorder %s30, 1
      %p226 = scmp.ne.s32.totalorder %s221, %s223
      %p227 = scmp.eq.s32.totalorder %s30, 0
      %p228 = por %p226, %p227
      %p229 = scmp.ne.s32.totalorder %s221, %s223
      %p230 = scmp.eq.s32.totalorder %s35, 1
      %p231 = por %p229, %p230
      %p232 = scmp.ne.s32.totalorder %s223, %s224
      %p233 = scmp.eq.s32.totalorder %s35, 0
      %p234 = por %p232, %p233
      %p235 = scmp.ne.s32.totalorder %s223, %s224
      %p236 = scmp.eq.s32.totalorder %s36, 1
      %p237 = por %p235, %p236
      %p239 = scmp.ne.s32.totalorder %s224, %s238
      %p240 = scmp.eq.s32.totalorder %s36, 0
      %p241 = por %p239, %p240
      %s243 = sadd.s32 %s242, 1
      %p246 = scmp.eq.s32.totalorder %s30, 1
      %p247 = scmp.ne.s32.totalorder %s242, %s244
      %p248 = scmp.eq.s32.totalorder %s30, 0
      %p249 = por %p247, %p248
      %p250 = scmp.ne.s32.totalorder %s242, %s244
      %p251 = scmp.eq.s32.totalorder %s35, 1
      %p252 = por %p250, %p251
      %p253 = scmp.ne.s32.totalorder %s244, %s245
      %p254 = scmp.eq.s32.totalorder %s35, 0
      %p255 = por %p253, %p254
      %p256 = scmp.ne.s32.totalorder %s244, %s245
      %p257 = scmp.eq.s32.totalorder %s36, 1
      %p258 = por %p256, %p257
      %p260 = scmp.ne.s32.totalorder %s245, %s259
      %p261 = scmp.eq.s32.totalorder %s36, 0
      %p262 = por %p260, %p261
      %s264 = sadd.s32 %s263, 1
      %p267 = scmp.eq.s32.totalorder %s30, 1
      %p268 = scmp.ne.s32.totalorder %s263, %s265
      %p269 = scmp.eq.s32.totalorder %s30, 0
      %p270 = por %p268, %p269
      %p271 = scmp.ne.s32.totalorder %s263, %s265
      %p272 = scmp.eq.s32.totalorder %s35, 1
      %p273 = por %p271, %p272
      %p274 = scmp.ne.s32.totalorder %s265, %s266
      %p275 = scmp.eq.s32.totalorder %s35, 0
      %p276 = por %p274, %p275
      %p277 = scmp.ne.s32.totalorder %s265, %s266
      %p278 = scmp.eq.s32.totalorder %s36, 1
      %p279 = por %p277, %p278
      %p281 = scmp.ne.s32.totalorder %s266, %s280
      %p282 = scmp.eq.s32.totalorder %s36, 0
      %p283 = por %p281, %p282
      %s285 = sadd.s32 %s284, 1
      %p288 = scmp.eq.s32.totalorder %s30, 1
      %p289 = scmp.ne.s32.totalorder %s284, %s286
      %p290 = scmp.eq.s32.totalorder %s30, 0
      %p291 = por %p289, %p290
      %p292 = scmp.ne.s32.totalorder %s284, %s286
      %p293 = scmp.eq.s32.totalorder %s35, 1
      %p294 = por %p292, %p293
      %p295 = scmp.ne.s32.totalorder %s286, %s287
      %p296 = scmp.eq.s32.totalorder %s35, 0
      %p297 = por %p295, %p296
      %p298 = scmp.ne.s32.totalorder %s286, %s287
      %p299 = scmp.eq.s32.totalorder %s36, 1
      %p300 = por %p298, %p299
      %p302 = scmp.ne.s32.totalorder %s287, %s301
      %p303 = scmp.eq.s32.totalorder %s36, 0
      %p304 = por %p302, %p303
      %s306 = sadd.s32 %s305, 1
      %p309 = scmp.eq.s32.totalorder %s30, 1
      %p310 = scmp.ne.s32.totalorder %s305, %s307
      %p311 = scmp.eq.s32.totalorder %s30, 0
      %p312 = por %p310, %p311
      %p313 = scmp.ne.s32.totalorder %s305, %s307
      %p314 = scmp.eq.s32.totalorder %s35, 1
      %p315 = por %p313, %p314
      %p316 = scmp.ne.s32.totalorder %s307, %s308
      %p317 = scmp.eq.s32.totalorder %s35, 0
      %p318 = por %p316, %p317
      %p319 = scmp.ne.s32.totalorder %s307, %s308
      %p320 = scmp.eq.s32.totalorder %s36, 1
      %p321 = por %p319, %p320
      %p323 = scmp.ne.s32.totalorder %s308, %s322
      %p324 = scmp.eq.s32.totalorder %s36, 0
      %p325 = por %p323, %p324
      %s327 = sadd.s32 %s326, 1
      %p330 = scmp.eq.s32.totalorder %s30, 1
      %p331 = scmp.ne.s32.totalorder %s326, %s328
      %p332 = scmp.eq.s32.totalorder %s30, 0
      %p333 = por %p331, %p332
      %p334 = scmp.ne.s32.totalorder %s326, %s328
      %p335 = scmp.eq.s32.totalorder %s35, 1
      %p336 = por %p334, %p335
      %p337 = scmp.ne.s32.totalorder %s328, %s329
      %p338 = scmp.eq.s32.totalorder %s35, 0
      %p339 = por %p337, %p338
      %p340 = scmp.ne.s32.totalorder %s328, %s329
      %p341 = scmp.eq.s32.totalorder %s36, 1
      %p342 = por %p340, %p341
      %p344 = scmp.ne.s32.totalorder %s329, %s343
      %p345 = scmp.eq.s32.totalorder %s36, 0
      %p346 = por %p344, %p345
      %s348 = sadd.s32 %s347, 1
      %p351 = scmp.eq.s32.totalorder %s30, 1
      %p352 = scmp.ne.s32.totalorder %s347, %s349
      %p353 = scmp.eq.s32.totalorder %s30, 0
      %p354 = por %p352, %p353
      %p355 = scmp.ne.s32.totalorder %s347, %s349
      %p356 = scmp.eq.s32.totalorder %s35, 1
      %p357 = por %p355, %p356
      %p358 = scmp.ne.s32.totalorder %s349, %s350
      %p359 = scmp.eq.s32.totalorder %s35, 0
      %p360 = por %p358, %p359
      %p361 = scmp.ne.s32.totalorder %s349, %s350
      %p362 = scmp.eq.s32.totalorder %s36, 1
      %p363 = por %p361, %p362
      %p365 = scmp.ne.s32.totalorder %s350, %s364
      %p366 = scmp.eq.s32.totalorder %s36, 0
      %p367 = por %p365, %p366
      %s368 = ssub.s32 %s30, %s37
      %p369 = scmp.eq.s32.totalorder %s368, 0
      %s371 = sadd.s32 %s370, 1
      %s372 = scalar_select %p369, %s370, %s371
      %p375 = pneg %p369
      %p376 = scmp.eq.s32.totalorder %s30, 1
      %p377 = por %p375, %p376
      %p378 = scmp.ne.s32.totalorder %s370, %s373
      %p379 = scmp.eq.s32.totalorder %s30, 0
      %p380 = por %p378, %p379
      %p381 = scmp.ne.s32.totalorder %s370, %s373
      %p382 = scmp.eq.s32.totalorder %s35, 1
      %p383 = por %p381, %p382
      %p384 = scmp.ne.s32.totalorder %s373, %s374
      %p385 = scmp.eq.s32.totalorder %s35, 0
      %p386 = por %p384, %p385
      %p387 = scmp.ne.s32.totalorder %s373, %s374
      %p388 = scmp.eq.s32.totalorder %s36, 1
      %p389 = por %p387, %p388
      %p391 = scmp.ne.s32.totalorder %s374, %s390
      %p392 = scmp.eq.s32.totalorder %s36, 0
      %p393 = por %p391, %p392
      %p394 = scmp.le.s32.totalorder 1, %s30
      %p395 = scmp.lt.s32.totalorder %s30, 3
      %p396 = pnand %p394, %p395
      %p397 = pneg %p396
      // Predicated region
      $region9: #{tpu_custom_call.1} parent=5 // pred_check
        _
      $region10: #{tpu_custom_call.1} parent=5 // pred_check_branch
        %399 = sbr.rel (%p396) target = $region12
      $region11: #{tpu_custom_call.1} parent=5 // pred_region
        %s400 = ssub.s32 %s30, 1
        // Predicated region
        $region13: #{tpu_custom_call.1} parent=11 // pred_check
          %p401 = pneg %p129
        $region14: #{tpu_custom_call.1} parent=11 // pred_check_branch
          %403 = sbr.rel (%p401) target = $region16
        $region15: #{tpu_custom_call.1} parent=11 // pred_region
          _
        $region16: #{tpu_custom_call.1} parent=11 // pred_fallthru
          _
        // Predicated region
        $region17: #{tpu_custom_call.1} parent=11 // pred_check
          %p404 = pneg %p150
        $region18: #{tpu_custom_call.1} parent=11 // pred_check_branch
          %406 = sbr.rel (%p404) target = $region20
        $region19: #{tpu_custom_call.1} parent=11 // pred_region
          %408 = vsyncadd [#allocation6], 0
          %s410 = sshll.u32 %s4, 4
          %s411 = int_to_ptr.hbm [resolvable:$true] %s410
          %s412 = sshll.u32 [#allocation5], 4
          %s413 = int_to_ptr.vmem [resolvable:$true] %s412
          %415 = dma.hbm_to_vmem [thread:$0]  %s411, 32, %s413, [#allocation6]
        $region20: #{tpu_custom_call.1} parent=11 // pred_fallthru
          _
        // Predicated region
        $region21: #{tpu_custom_call.1} parent=11 // pred_check
          %p416 = pneg %p171
        $region22: #{tpu_custom_call.1} parent=11 // pred_check_branch
          %418 = sbr.rel (%p416) target = $region24
        $region23: #{tpu_custom_call.1} parent=11 // pred_region
          _
        $region24: #{tpu_custom_call.1} parent=11 // pred_fallthru
          _
        // Predicated region
        $region25: #{tpu_custom_call.1} parent=11 // pred_check
          %p419 = pneg %p192
        $region26: #{tpu_custom_call.1} parent=11 // pred_check_branch
          %421 = sbr.rel (%p419) target = $region28
        $region27: #{tpu_custom_call.1} parent=11 // pred_region
          _
        $region28: #{tpu_custom_call.1} parent=11 // pred_fallthru
          _
        // Predicated region
        $region29: #{tpu_custom_call.1} parent=11 // pred_check
          %p422 = pneg %p213
        $region30: #{tpu_custom_call.1} parent=11 // pred_check_branch
          %424 = sbr.rel (%p422) target = $region32
        $region31: #{tpu_custom_call.1} parent=11 // pred_region
          %426 = vsyncadd [#allocation6], 0
          %s428 = sshll.u32 %s7, 4
          %s429 = int_to_ptr.hbm [resolvable:$true] %s428
          %s430 = sshll.u32 [#allocation7], 4
          %s431 = int_to_ptr.vmem [resolvable:$true] %s430
          %433 = dma.hbm_to_vmem [thread:$0]  %s429, 16, %s431, [#allocation6]
        $region32: #{tpu_custom_call.1} parent=11 // pred_fallthru
          _
        // Predicated region
        $region33: #{tpu_custom_call.1} parent=11 // pred_check
          %p434 = pneg %p234
        $region34: #{tpu_custom_call.1} parent=11 // pred_check_branch
          %436 = sbr.rel (%p434) target = $region36
        $region35: #{tpu_custom_call.1} parent=11 // pred_region
          %438 = vsyncadd [#allocation9], 0
          %s439 = sshll.u32 %s8, 4
          %s440 = int_to_ptr.hbm [resolvable:$true] %s439
          %s441 = sshll.u32 [#allocation8], 4
          %s442 = int_to_ptr.vmem [resolvable:$true] %s441
          %447 = dma.hbm_to_vmem [thread:$0]  %s440, 20480, %s442, [#allocation9], 128, 128, 8
        $region36: #{tpu_custom_call.1} parent=11 // pred_fallthru
          _
        // Predicated region
        $region37: #{tpu_custom_call.1} parent=11 // pred_check
          %p448 = pneg %p255
        $region38: #{tpu_custom_call.1} parent=11 // pred_check_branch
          %450 = sbr.rel (%p448) target = $region40
        $region39: #{tpu_custom_call.1} parent=11 // pred_region
          %452 = vsyncadd [#allocation9], 0
          %s454 = sshll.u32 %s9, 4
          %s455 = int_to_ptr.hbm [resolvable:$true] %s454
          %s456 = sshll.u32 [#allocation10], 4
          %s457 = int_to_ptr.vmem [resolvable:$true] %s456
          %459 = dma.hbm_to_vmem [thread:$0]  %s455, 32, %s457, [#allocation9]
        $region40: #{tpu_custom_call.1} parent=11 // pred_fallthru
          _
        // Predicated region
        $region41: #{tpu_custom_call.1} parent=11 // pred_check
          %p460 = pneg %p276
        $region42: #{tpu_custom_call.1} parent=11 // pred_check_branch
          %462 = sbr.rel (%p460) target = $region44
        $region43: #{tpu_custom_call.1} parent=11 // pred_region
          _
        $region44: #{tpu_custom_call.1} parent=11 // pred_fallthru
          _
        // Predicated region
        $region45: #{tpu_custom_call.1} parent=11 // pred_check
          %p463 = pneg %p297
        $region46: #{tpu_custom_call.1} parent=11 // pred_check_branch
          %465 = sbr.rel (%p463) target = $region48
        $region47: #{tpu_custom_call.1} parent=11 // pred_region
          _
        $region48: #{tpu_custom_call.1} parent=11 // pred_fallthru
          _
        // Predicated region
        $region49: #{tpu_custom_call.1} parent=11 // pred_check
          %p466 = pneg %p318
        $region50: #{tpu_custom_call.1} parent=11 // pred_check_branch
          %468 = sbr.rel (%p466) target = $region52
        $region51: #{tpu_custom_call.1} parent=11 // pred_region
          _
        $region52: #{tpu_custom_call.1} parent=11 // pred_fallthru
          _
        // Predicated region
        $region53: #{tpu_custom_call.1} parent=11 // pred_check
          %p469 = pneg %p339
        $region54: #{tpu_custom_call.1} parent=11 // pred_check_branch
          %471 = sbr.rel (%p469) target = $region56
        $region55: #{tpu_custom_call.1} parent=11 // pred_region
          %473 = vsyncadd [#allocation12], 0
          %s474 = sshll.u32 %s13, 4
          %s475 = int_to_ptr.hbm [resolvable:$true] %s474
          %s476 = sshll.u32 [#allocation11], 4
          %s477 = int_to_ptr.vmem [resolvable:$true] %s476
          %482 = dma.hbm_to_vmem [thread:$0]  %s475, 1024, %s477, [#allocation12], 128, 128, 8
        $region56: #{tpu_custom_call.1} parent=11 // pred_fallthru
          _
        // Predicated region
        $region57: #{tpu_custom_call.1} parent=11 // pred_check
          %p483 = pneg %p360
        $region58: #{tpu_custom_call.1} parent=11 // pred_check_branch
          %485 = sbr.rel (%p483) target = $region60
        $region59: #{tpu_custom_call.1} parent=11 // pred_region
          _
        $region60: #{tpu_custom_call.1} parent=11 // pred_fallthru
          _
      $region12: #{tpu_custom_call.1} parent=5 // pred_fallthru
        _
      %p486 = scmp.lt.s32.totalorder %s30, 2
      // Predicated region
      $region61: #{tpu_custom_call.1} parent=5 // pred_check
        %p487 = pneg %p486
      $region62: #{tpu_custom_call.1} parent=5 // pred_check_branch
        %489 = sbr.rel (%p487) target = $region64
      $region63: #{tpu_custom_call.1} parent=5 // pred_region
        // Predicated region
        $region65: #{tpu_custom_call.1} parent=63 // pred_check
          %p490 = pneg %p50
        $region66: #{tpu_custom_call.1} parent=63 // pred_check_branch
          %492 = sbr.rel (%p490) target = $region68
        $region67: #{tpu_custom_call.1} parent=63 // pred_region
          %p493 = scmp.lt.s32.totalorder %s30, 1
          %s494 = scalar_select %p493, %s30, 1
          %s495 = smul.addr %s494, 32
          %s496 = smul.addr %s495, 8
          %s497 = scalar_lea.vmem %s0, %s496
        $region68: #{tpu_custom_call.1} parent=63 // pred_fallthru
          _
        // Predicated region
        $region69: #{tpu_custom_call.1} parent=63 // pred_check
          %p498 = pneg %p76
        $region70: #{tpu_custom_call.1} parent=63 // pred_check_branch
          %500 = sbr.rel (%p498) target = $region72
        $region71: #{tpu_custom_call.1} parent=63 // pred_region
          %s501 = sand.u32 %s66, 1
          %s502 = scalar_lea.sflag [#allocation3], %s501
          %s503 = sand.u32 %s66, 1
          %s504 = smul.addr %s503, 512
          %s505 = scalar_lea.vmem [#allocation2], %s504
          %507 = vsyncadd %s502, 0
          %s508 = smul.addr %s30, 64
          %s509 = smul.addr %s508, 8
          %s510 = scalar_lea.hbm %s1, %s509
          %s511 = sshll.u32 %s510, 4
          %s512 = int_to_ptr.hbm [resolvable:$true] %s511
          %s513 = sshll.u32 %s505, 4
          %s514 = int_to_ptr.vmem [resolvable:$true] %s513
          %519 = dma.hbm_to_vmem [thread:$0]  %s512, 8192, %s514, %s502, 256, 256, 16
        $region72: #{tpu_custom_call.1} parent=63 // pred_fallthru
          _
        // Predicated region
        $region73: #{tpu_custom_call.1} parent=63 // pred_check
          %p520 = pneg %p102
        $region74: #{tpu_custom_call.1} parent=63 // pred_check_branch
          %522 = sbr.rel (%p520) target = $region76
        $region75: #{tpu_custom_call.1} parent=63 // pred_region
          %p523 = scmp.lt.s32.totalorder %s30, 1
          %s524 = scalar_select %p523, %s30, 1
          %s525 = smul.addr %s524, 16
          %s526 = smul.addr %s525, 8
          %s527 = scalar_lea.vmem %s2, %s526
        $region76: #{tpu_custom_call.1} parent=63 // pred_fallthru
          _
      $region64: #{tpu_custom_call.1} parent=5 // pred_fallthru
        _
      %p528 = scmp.le.s32.totalorder 1, %s30
      %p529 = scmp.lt.s32.totalorder %s30, 3
      %p530 = pnand %p528, %p529
      %p531 = pneg %p530
      // Predicated region
      $region77: #{tpu_custom_call.1} parent=5 // pred_check
        _
      $region78: #{tpu_custom_call.1} parent=5 // pred_check_branch
        %533 = sbr.rel (%p530) target = $region80
      $region79: #{tpu_custom_call.1} parent=5 // pred_region
        %s534 = ssub.s32 %s30, 1
        %s535 = sand.u32 %s69, 1
        %s536 = scalar_lea.sflag [#allocation3], %s535
        %s537 = sand.u32 %s69, 1
        %s538 = smul.addr %s537, 512
        %s539 = scalar_lea.vmem [#allocation2], %s538
        // Predicated region
        $region81: #{tpu_custom_call.1} parent=79 // pred_check
          %p540 = pneg %p82
        $region82: #{tpu_custom_call.1} parent=79 // pred_check_branch
          %542 = sbr.rel (%p540) target = $region84
        $region83: #{tpu_custom_call.1} parent=79 // pred_region
          %544 = dma.done %s536, 8192
        $region84: #{tpu_custom_call.1} parent=79 // pred_fallthru
          _
        // Predicated region
        $region85: #{tpu_custom_call.1} parent=79 // pred_check
          %p545 = pneg %p150
        $region86: #{tpu_custom_call.1} parent=79 // pred_check_branch
          %547 = sbr.rel (%p545) target = $region88
        $region87: #{tpu_custom_call.1} parent=79 // pred_region
          %549 = dma.done [#allocation6], 32
        $region88: #{tpu_custom_call.1} parent=79 // pred_fallthru
          _
        // Predicated region
        $region89: #{tpu_custom_call.1} parent=79 // pred_check
          %p550 = pneg %p213
        $region90: #{tpu_custom_call.1} parent=79 // pred_check_branch
          %552 = sbr.rel (%p550) target = $region92
        $region91: #{tpu_custom_call.1} parent=79 // pred_region
          %554 = dma.done [#allocation6], 16
        $region92: #{tpu_custom_call.1} parent=79 // pred_fallthru
          _
        // Predicated region
        $region93: #{tpu_custom_call.1} parent=79 // pred_check
          %p555 = pneg %p234
        $region94: #{tpu_custom_call.1} parent=79 // pred_check_branch
          %557 = sbr.rel (%p555) target = $region96
        $region95: #{tpu_custom_call.1} parent=79 // pred_region
          %559 = dma.done [#allocation9], 20480
        $region96: #{tpu_custom_call.1} parent=79 // pred_fallthru
          _
        // Predicated region
        $region97: #{tpu_custom_call.1} parent=79 // pred_check
          %p560 = pneg %p255
        $region98: #{tpu_custom_call.1} parent=79 // pred_check_branch
          %562 = sbr.rel (%p560) target = $region100
        $region99: #{tpu_custom_call.1} parent=79 // pred_region
          %564 = dma.done [#allocation9], 32
        $region100: #{tpu_custom_call.1} parent=79 // pred_fallthru
          _
        // Predicated region
        $region101: #{tpu_custom_call.1} parent=79 // pred_check
          %p565 = pneg %p339
        $region102: #{tpu_custom_call.1} parent=79 // pred_check_branch
          %567 = sbr.rel (%p565) target = $region104
        $region103: #{tpu_custom_call.1} parent=79 // pred_region
          %569 = dma.done [#allocation12], 1024
        $region104: #{tpu_custom_call.1} parent=79 // pred_fallthru
          _
        %p570 = scmp.lt.s32.totalorder %s35, 1
        %s571 = scalar_select %p570, %s35, 1
        %s572 = smul.addr %s571, 32
        %s573 = smul.addr %s572, 8
        %s574 = scalar_lea.vmem %s0, %s573
        %p575 = pneg %p56
        %p576 = pneg %p53
        %s577 = sand.u32 %s69, 1
        %s578 = scalar_lea.sflag [#allocation3], %s577
        %s579 = sand.u32 %s69, 1
        %s580 = smul.addr %s579, 512
        %s581 = scalar_lea.vmem [#allocation2], %s580
        %p582 = pneg %p82
        %p583 = pneg %p79
        %p584 = scmp.lt.s32.totalorder %s35, 1
        %s585 = scalar_select %p584, %s35, 1
        %s586 = smul.addr %s585, 16
        %s587 = smul.addr %s586, 8
        %s588 = scalar_lea.vmem %s2, %s587
        %p589 = pneg %p108
        %p590 = pneg %p105
        %p591 = pneg %p129
        %p592 = pneg %p126
        %p593 = pneg %p150
        %p594 = pneg %p147
        %p595 = pneg %p171
        %p596 = pneg %p168
        %p597 = pneg %p192
        %p598 = pneg %p189
        %p599 = pneg %p213
        %p600 = pneg %p210
        %p601 = pneg %p234
        %p602 = pneg %p231
        %p603 = pneg %p255
        %p604 = pneg %p252
        %p605 = pneg %p276
        %p606 = pneg %p273
        %p607 = pneg %p297
        %p608 = pneg %p294
        %p609 = pneg %p318
        %p610 = pneg %p315
        %p611 = pneg %p339
        %p612 = pneg %p336
        %p613 = pneg %p360
        %p614 = pneg %p357
        %p615 = pneg %p386
        %p616 = pneg %p383
        %s617 = sand.u32 %s373, 1
        %s618 = scalar_lea.sflag [#allocation4], %s617
        %s619 = sand.u32 %s373, 1
        %s620 = smul.addr %s619, 32
        %s621 = scalar_lea.vmem [#allocation13], %s620
        %p622 = scmp.lt.s32.totalorder %s35, 1
        %s623 = scalar_select %p622, %s35, 1
        %s624 = smul.addr %s623, 32
        %s625 = smul.addr %s624, 8
        %s626 = scalar_lea.vmem %s0, %s625
        %p627 = scmp.lt.s32.totalorder %s35, 1
        %s628 = scalar_select %p627, %s35, 1
        %s629 = smul.addr %s628, 16
        %s630 = smul.addr %s629, 8
        %s631 = scalar_lea.vmem %s2, %s630
        %v632 = vld [vmem:[%s626] sm:$0xff]
        %v633 = vld [vmem:[%s626 + $0x8] sm:$0xff]
        %v634 = vld [vmem:[%s626 + $0x10] sm:$0xff]
        %v635 = vld [vmem:[%s626 + $0x18] sm:$0xff]
        %v636 = vld [vmem:[%s626 + $0x20] sm:$0xff]
        %v637 = vld [vmem:[%s626 + $0x28] sm:$0xff]
        %v638 = vld [vmem:[%s626 + $0x30] sm:$0xff]
        %v639 = vld [vmem:[%s626 + $0x38] sm:$0xff]
        %v640 = vld [vmem:[%s626 + $0x40] sm:$0xff]
        %v641 = vld [vmem:[%s626 + $0x48] sm:$0xff]
        %v642 = vld [vmem:[%s626 + $0x50] sm:$0xff]
        %v643 = vld [vmem:[%s626 + $0x58] sm:$0xff]
        %v644 = vld [vmem:[%s626 + $0x60] sm:$0xff]
        %v645 = vld [vmem:[%s626 + $0x68] sm:$0xff]
        %v646 = vld [vmem:[%s626 + $0x70] sm:$0xff]
        %v647 = vld [vmem:[%s626 + $0x78] sm:$0xff]
        %v648 = vld [vmem:[%s626 + $0x80] sm:$0xff]
        %v649 = vld [vmem:[%s626 + $0x88] sm:$0xff]
        %v650 = vld [vmem:[%s626 + $0x90] sm:$0xff]
        %v651 = vld [vmem:[%s626 + $0x98] sm:$0xff]
        %v652 = vld [vmem:[%s626 + $0xa0] sm:$0xff]
        %v653 = vld [vmem:[%s626 + $0xa8] sm:$0xff]
        %v654 = vld [vmem:[%s626 + $0xb0] sm:$0xff]
        %v655 = vld [vmem:[%s626 + $0xb8] sm:$0xff]
        %v656 = vld [vmem:[%s626 + $0xc0] sm:$0xff]
        %v657 = vld [vmem:[%s626 + $0xc8] sm:$0xff]
        %v658 = vld [vmem:[%s626 + $0xd0] sm:$0xff]
        %v659 = vld [vmem:[%s626 + $0xd8] sm:$0xff]
        %v660 = vld [vmem:[%s626 + $0xe0] sm:$0xff]
        %v661 = vld [vmem:[%s626 + $0xe8] sm:$0xff]
        %v662 = vld [vmem:[%s626 + $0xf0] sm:$0xff]
        %v663 = vld [vmem:[%s626 + $0xf8] sm:$0xff]
        %v664 = vld [vmem:[%s539] sm:$0xff]
        %v665 = vld [vmem:[%s539 + $0x8] sm:$0xff]
        %v666 = vld [vmem:[%s539 + $0x10] sm:$0xff]
        %v667 = vld [vmem:[%s539 + $0x18] sm:$0xff]
        %v668 = vld [vmem:[%s539 + $0x20] sm:$0xff]
        %v669 = vld [vmem:[%s539 + $0x28] sm:$0xff]
        %v670 = vld [vmem:[%s539 + $0x30] sm:$0xff]
        %v671 = vld [vmem:[%s539 + $0x38] sm:$0xff]
        %v672 = vld [vmem:[%s539 + $0x40] sm:$0xff]
        %v673 = vld [vmem:[%s539 + $0x48] sm:$0xff]
        %v674 = vld [vmem:[%s539 + $0x50] sm:$0xff]
        %v675 = vld [vmem:[%s539 + $0x58] sm:$0xff]
        %v676 = vld [vmem:[%s539 + $0x60] sm:$0xff]
        %v677 = vld [vmem:[%s539 + $0x68] sm:$0xff]
        %v678 = vld [vmem:[%s539 + $0x70] sm:$0xff]
        %v679 = vld [vmem:[%s539 + $0x78] sm:$0xff]
        %v680 = vld [vmem:[%s539 + $0x80] sm:$0xff]
        %v681 = vld [vmem:[%s539 + $0x88] sm:$0xff]
        %v682 = vld [vmem:[%s539 + $0x90] sm:$0xff]
        %v683 = vld [vmem:[%s539 + $0x98] sm:$0xff]
        %v684 = vld [vmem:[%s539 + $0xa0] sm:$0xff]
        %v685 = vld [vmem:[%s539 + $0xa8] sm:$0xff]
        %v686 = vld [vmem:[%s539 + $0xb0] sm:$0xff]
        %v687 = vld [vmem:[%s539 + $0xb8] sm:$0xff]
        %v688 = vld [vmem:[%s539 + $0xc0] sm:$0xff]
        %v689 = vld [vmem:[%s539 + $0xc8] sm:$0xff]
        %v690 = vld [vmem:[%s539 + $0xd0] sm:$0xff]
        %v691 = vld [vmem:[%s539 + $0xd8] sm:$0xff]
        %v692 = vld [vmem:[%s539 + $0xe0] sm:$0xff]
        %v693 = vld [vmem:[%s539 + $0xe8] sm:$0xff]
        %v694 = vld [vmem:[%s539 + $0xf0] sm:$0xff]
        %v695 = vld [vmem:[%s539 + $0xf8] sm:$0xff]
        %v696 = vld [vmem:[%s539 + $0x100] sm:$0xff]
        %v697 = vld [vmem:[%s539 + $0x108] sm:$0xff]
        %v698 = vld [vmem:[%s539 + $0x110] sm:$0xff]
        %v699 = vld [vmem:[%s539 + $0x118] sm:$0xff]
        %v700 = vld [vmem:[%s539 + $0x120] sm:$0xff]
        %v701 = vld [vmem:[%s539 + $0x128] sm:$0xff]
        %v702 = vld [vmem:[%s539 + $0x130] sm:$0xff]
        %v703 = vld [vmem:[%s539 + $0x138] sm:$0xff]
        %v704 = vld [vmem:[%s539 + $0x140] sm:$0xff]
        %v705 = vld [vmem:[%s539 + $0x148] sm:$0xff]
        %v706 = vld [vmem:[%s539 + $0x150] sm:$0xff]
        %v707 = vld [vmem:[%s539 + $0x158] sm:$0xff]
        %v708 = vld [vmem:[%s539 + $0x160] sm:$0xff]
        %v709 = vld [vmem:[%s539 + $0x168] sm:$0xff]
        %v710 = vld [vmem:[%s539 + $0x170] sm:$0xff]
        %v711 = vld [vmem:[%s539 + $0x178] sm:$0xff]
        %v712 = vld [vmem:[%s539 + $0x180] sm:$0xff]
        %v713 = vld [vmem:[%s539 + $0x188] sm:$0xff]
        %v714 = vld [vmem:[%s539 + $0x190] sm:$0xff]
        %v715 = vld [vmem:[%s539 + $0x198] sm:$0xff]
        %v716 = vld [vmem:[%s539 + $0x1a0] sm:$0xff]
        %v717 = vld [vmem:[%s539 + $0x1a8] sm:$0xff]
        %v718 = vld [vmem:[%s539 + $0x1b0] sm:$0xff]
        %v719 = vld [vmem:[%s539 + $0x1b8] sm:$0xff]
        %v720 = vld [vmem:[%s539 + $0x1c0] sm:$0xff]
        %v721 = vld [vmem:[%s539 + $0x1c8] sm:$0xff]
        %v722 = vld [vmem:[%s539 + $0x1d0] sm:$0xff]
        %v723 = vld [vmem:[%s539 + $0x1d8] sm:$0xff]
        %v724 = vld [vmem:[%s539 + $0x1e0] sm:$0xff]
        %v725 = vld [vmem:[%s539 + $0x1e8] sm:$0xff]
        %v726 = vld [vmem:[%s539 + $0x1f0] sm:$0xff]
        %v727 = vld [vmem:[%s539 + $0x1f8] sm:$0xff]
        %v728 = vld [vmem:[%s3] sm:$0xff]
        %v729 = vld [vmem:[%s3 + $0x8] sm:$0xff]
        %v730 = vld [vmem:[%s3 + $0x10] sm:$0xff]
        %v731 = vld [vmem:[%s3 + $0x18] sm:$0xff]
        %v732 = vld [vmem:[#allocation5] sm:$0x1]
        %v733 = vperm.slane %v732, 0
        %vm734 = vcmask 261120
        %v736 = vsel %vm734, %v632, 0
        %v739 = vsel %vm734, %v633, 0
        %v742 = vsel %vm734, %v634, 0
        %v745 = vsel %vm734, %v635, 0
        %v748 = vsel %vm734, %v636, 0
        %v751 = vsel %vm734, %v637, 0
        %v754 = vsel %vm734, %v638, 0
        %v757 = vsel %vm734, %v639, 0
        %v760 = vsel %vm734, %v640, 0
        %v763 = vsel %vm734, %v641, 0
        %v766 = vsel %vm734, %v642, 0
        %v769 = vsel %vm734, %v643, 0
        %v772 = vsel %vm734, %v644, 0
        %v775 = vsel %vm734, %v645, 0
        %v778 = vsel %vm734, %v646, 0
        %v781 = vsel %vm734, %v647, 0
        %v784 = vsel %vm734, %v648, 0
        %v787 = vsel %vm734, %v649, 0
        %v790 = vsel %vm734, %v650, 0
        %v793 = vsel %vm734, %v651, 0
        %v796 = vsel %vm734, %v652, 0
        %v799 = vsel %vm734, %v653, 0
        %v802 = vsel %vm734, %v654, 0
        %v805 = vsel %vm734, %v655, 0
        %v808 = vsel %vm734, %v656, 0
        %v811 = vsel %vm734, %v657, 0
        %v814 = vsel %vm734, %v658, 0
        %v817 = vsel %vm734, %v659, 0
        %v820 = vsel %vm734, %v660, 0
        %v823 = vsel %vm734, %v661, 0
        %v826 = vsel %vm734, %v662, 0
        %v829 = vsel %vm734, %v663, 0
        %831 = vmatpush.msra.mxu0 0.0
        %832 = vmatpush.msra.mxu0 0.0
        %833 = vmatpush.msra.mxu0 0.0
        %834 = vmatpush.msra.mxu0 0.0
        %835 = vmatpush.msra.mxu0 0.0
        %836 = vmatpush.msra.mxu0 0.0
        %837 = vmatpush.msra.mxu0 0.0
        %838 = vmatpush.msra.mxu0 0.0
        %839 = vmatpush.msra.mxu0 0.0
        %840 = vmatpush.msra.mxu0 0.0
        %841 = vmatpush.msra.mxu0 0.0
        %842 = vmatpush.msra.mxu0 0.0
        %843 = vmatpush.msra.mxu0 %v731
        %844 = vmatpush.msra.mxu0 %v730
        %845 = vmatpush.msra.mxu0 %v729
        %846 = vmatpush.msra.mxu0 %v728
        %847 = vmatmul.f32.gmra.mxu0 %v736
        %v848 = vpop.f32.mrf.mxu0
        %v849 = vadd.f32 %v733, %v848
        %850 = vmatmul.f32.gmra.mxu0 %v739
        %v851 = vpop.f32.mrf.mxu0
        %v852 = vadd.f32 %v733, %v851
        %853 = vmatmul.f32.gmra.mxu0 %v742
        %v854 = vpop.f32.mrf.mxu0
        %v855 = vadd.f32 %v733, %v854
        %856 = vmatmul.f32.gmra.mxu0 %v745
        %v857 = vpop.f32.mrf.mxu0
        %v858 = vadd.f32 %v733, %v857
        %859 = vmatmul.f32.gmra.mxu0 %v748
        %v860 = vpop.f32.mrf.mxu0
        %v861 = vadd.f32 %v733, %v860
        %862 = vmatmul.f32.gmra.mxu0 %v751
        %v863 = vpop.f32.mrf.mxu0
        %v864 = vadd.f32 %v733, %v863
        %865 = vmatmul.f32.gmra.mxu0 %v754
        %v866 = vpop.f32.mrf.mxu0
        %v867 = vadd.f32 %v733, %v866
        %868 = vmatmul.f32.gmra.mxu0 %v757
        %v869 = vpop.f32.mrf.mxu0
        %v870 = vadd.f32 %v733, %v869
        %871 = vmatmul.f32.gmra.mxu0 %v760
        %v872 = vpop.f32.mrf.mxu0
        %v873 = vadd.f32 %v733, %v872
        %874 = vmatmul.f32.gmra.mxu0 %v763
        %v875 = vpop.f32.mrf.mxu0
        %v876 = vadd.f32 %v733, %v875
        %877 = vmatmul.f32.gmra.mxu0 %v766
        %v878 = vpop.f32.mrf.mxu0
        %v879 = vadd.f32 %v733, %v878
        %880 = vmatmul.f32.gmra.mxu0 %v769
        %v881 = vpop.f32.mrf.mxu0
        %v882 = vadd.f32 %v733, %v881
        %883 = vmatmul.f32.gmra.mxu0 %v772
        %v884 = vpop.f32.mrf.mxu0
        %v885 = vadd.f32 %v733, %v884
        %886 = vmatmul.f32.gmra.mxu0 %v775
        %v887 = vpop.f32.mrf.mxu0
        %v888 = vadd.f32 %v733, %v887
        %889 = vmatmul.f32.gmra.mxu0 %v778
        %v890 = vpop.f32.mrf.mxu0
        %v891 = vadd.f32 %v733, %v890
        %892 = vmatmul.f32.gmra.mxu0 %v781
        %v893 = vpop.f32.mrf.mxu0
        %v894 = vadd.f32 %v733, %v893
        %895 = vmatmul.f32.gmra.mxu0 %v784
        %v896 = vpop.f32.mrf.mxu0
        %v897 = vadd.f32 %v733, %v896
        %898 = vmatmul.f32.gmra.mxu0 %v787
        %v899 = vpop.f32.mrf.mxu0
        %v900 = vadd.f32 %v733, %v899
        %901 = vmatmul.f32.gmra.mxu0 %v790
        %v902 = vpop.f32.mrf.mxu0
        %v903 = vadd.f32 %v733, %v902
        %904 = vmatmul.f32.gmra.mxu0 %v793
        %v905 = vpop.f32.mrf.mxu0
        %v906 = vadd.f32 %v733, %v905
        %907 = vmatmul.f32.gmra.mxu0 %v796
        %v908 = vpop.f32.mrf.mxu0
        %v909 = vadd.f32 %v733, %v908
        %910 = vmatmul.f32.gmra.mxu0 %v799
        %v911 = vpop.f32.mrf.mxu0
        %v912 = vadd.f32 %v733, %v911
        %913 = vmatmul.f32.gmra.mxu0 %v802
        %v914 = vpop.f32.mrf.mxu0
        %v915 = vadd.f32 %v733, %v914
        %916 = vmatmul.f32.gmra.mxu0 %v805
        %v917 = vpop.f32.mrf.mxu0
        %v918 = vadd.f32 %v733, %v917
        %919 = vmatmul.f32.gmra.mxu0 %v808
        %v920 = vpop.f32.mrf.mxu0
        %v921 = vadd.f32 %v733, %v920
        %922 = vmatmul.f32.gmra.mxu0 %v811
        %v923 = vpop.f32.mrf.mxu0
        %v924 = vadd.f32 %v733, %v923
        %925 = vmatmul.f32.gmra.mxu0 %v814
        %v926 = vpop.f32.mrf.mxu0
        %v927 = vadd.f32 %v733, %v926
        %928 = vmatmul.f32.gmra.mxu0 %v817
        %v929 = vpop.f32.mrf.mxu0
        %v930 = vadd.f32 %v733, %v929
        %931 = vmatmul.f32.gmra.mxu0 %v820
        %v932 = vpop.f32.mrf.mxu0
        %v933 = vadd.f32 %v733, %v932
        %934 = vmatmul.f32.gmra.mxu0 %v823
        %v935 = vpop.f32.mrf.mxu0
        %v936 = vadd.f32 %v733, %v935
        %937 = vmatmul.f32.gmra.mxu0 %v826
        %v938 = vpop.f32.mrf.mxu0
        %v939 = vadd.f32 %v733, %v938
        %940 = vmatmul.f32.gmra.mxu0 %v829
        %v941 = vpop.f32.mrf.mxu0
        %v942 = vadd.f32 %v733, %v941
        %943 = vdwg.mxu0
        %v944 = vmax.f32 %v849, 0.0
        %v945 = vmax.f32 %v852, 0.0
        %v946 = vmax.f32 %v855, 0.0
        %v947 = vmax.f32 %v858, 0.0
        %v948 = vmax.f32 %v861, 0.0
        %v949 = vmax.f32 %v864, 0.0
        %v950 = vmax.f32 %v867, 0.0
        %v951 = vmax.f32 %v870, 0.0
        %v952 = vmax.f32 %v873, 0.0
        %v953 = vmax.f32 %v876, 0.0
        %v954 = vmax.f32 %v879, 0.0
        %v955 = vmax.f32 %v882, 0.0
        %v956 = vmax.f32 %v885, 0.0
        %v957 = vmax.f32 %v888, 0.0
        %v958 = vmax.f32 %v891, 0.0
        %v959 = vmax.f32 %v894, 0.0
        %v960 = vmax.f32 %v897, 0.0
        %v961 = vmax.f32 %v900, 0.0
        %v962 = vmax.f32 %v903, 0.0
        %v963 = vmax.f32 %v906, 0.0
        %v964 = vmax.f32 %v909, 0.0
        %v965 = vmax.f32 %v912, 0.0
        %v966 = vmax.f32 %v915, 0.0
        %v967 = vmax.f32 %v918, 0.0
        %v968 = vmax.f32 %v921, 0.0
        %v969 = vmax.f32 %v924, 0.0
        %v970 = vmax.f32 %v927, 0.0
        %v971 = vmax.f32 %v930, 0.0
        %v972 = vmax.f32 %v933, 0.0
        %v973 = vmax.f32 %v936, 0.0
        %v974 = vmax.f32 %v939, 0.0
        %v975 = vmax.f32 %v942, 0.0
        %976 = vmatpush.msra.mxu0 %v959
        %977 = vmatpush.msra.mxu0 %v958
        %978 = vmatpush.msra.mxu0 %v957
        %979 = vmatpush.msra.mxu0 %v956
        %980 = vmatpush.msra.mxu0 %v955
        %981 = vmatpush.msra.mxu0 %v954
        %982 = vmatpush.msra.mxu0 %v953
        %983 = vmatpush.msra.mxu0 %v952
        %984 = vmatpush.msra.mxu0 %v951
        %985 = vmatpush.msra.mxu0 %v950
        %986 = vmatpush.msra.mxu0 %v949
        %987 = vmatpush.msra.mxu0 %v948
        %988 = vmatpush.msra.mxu0 %v947
        %989 = vmatpush.msra.mxu0 %v946
        %990 = vmatpush.msra.mxu0 %v945
        %991 = vmatpush.msra.mxu0 %v944
        %992 = vmatmul.f32.gmra.mxu0 %v664
        %v993 = vpop.f32.mrf.mxu0
        %v994 = vadd.f32 0.0, %v993
        %995 = vmatmul.f32.gmra.mxu0 %v666
        %v996 = vpop.f32.mrf.mxu0
        %v997 = vadd.f32 0.0, %v996
        %998 = vmatmul.f32.gmra.mxu0 %v668
        %v999 = vpop.f32.mrf.mxu0
        %v1000 = vadd.f32 0.0, %v999
        %1001 = vmatmul.f32.gmra.mxu0 %v670
        %v1002 = vpop.f32.mrf.mxu0
        %v1003 = vadd.f32 0.0, %v1002
        %1004 = vmatmul.f32.gmra.mxu0 %v672
        %v1005 = vpop.f32.mrf.mxu0
        %v1006 = vadd.f32 0.0, %v1005
        %1007 = vmatmul.f32.gmra.mxu0 %v674
        %v1008 = vpop.f32.mrf.mxu0
        %v1009 = vadd.f32 0.0, %v1008
        %1010 = vmatmul.f32.gmra.mxu0 %v676
        %v1011 = vpop.f32.mrf.mxu0
        %v1012 = vadd.f32 0.0, %v1011
        %1013 = vmatmul.f32.gmra.mxu0 %v678
        %v1014 = vpop.f32.mrf.mxu0
        %v1015 = vadd.f32 0.0, %v1014
        %1016 = vmatmul.f32.gmra.mxu0 %v680
        %v1017 = vpop.f32.mrf.mxu0
        %v1018 = vadd.f32 0.0, %v1017
        %1019 = vmatmul.f32.gmra.mxu0 %v682
        %v1020 = vpop.f32.mrf.mxu0
        %v1021 = vadd.f32 0.0, %v1020
        %1022 = vmatmul.f32.gmra.mxu0 %v684
        %v1023 = vpop.f32.mrf.mxu0
        %v1024 = vadd.f32 0.0, %v1023
        %1025 = vmatmul.f32.gmra.mxu0 %v686
        %v1026 = vpop.f32.mrf.mxu0
        %v1027 = vadd.f32 0.0, %v1026
        %1028 = vmatmul.f32.gmra.mxu0 %v688
        %v1029 = vpop.f32.mrf.mxu0
        %v1030 = vadd.f32 0.0, %v1029
        %1031 = vmatmul.f32.gmra.mxu0 %v690
        %v1032 = vpop.f32.mrf.mxu0
        %v1033 = vadd.f32 0.0, %v1032
        %1034 = vmatmul.f32.gmra.mxu0 %v692
        %v1035 = vpop.f32.mrf.mxu0
        %v1036 = vadd.f32 0.0, %v1035
        %1037 = vmatmul.f32.gmra.mxu0 %v694
        %v1038 = vpop.f32.mrf.mxu0
        %v1039 = vadd.f32 0.0, %v1038
        %1040 = vmatmul.f32.gmra.mxu0 %v696
        %v1041 = vpop.f32.mrf.mxu0
        %v1042 = vadd.f32 0.0, %v1041
        %1043 = vmatmul.f32.gmra.mxu0 %v698
        %v1044 = vpop.f32.mrf.mxu0
        %v1045 = vadd.f32 0.0, %v1044
        %1046 = vmatmul.f32.gmra.mxu0 %v700
        %v1047 = vpop.f32.mrf.mxu0
        %v1048 = vadd.f32 0.0, %v1047
        %1049 = vmatmul.f32.gmra.mxu0 %v702
        %v1050 = vpop.f32.mrf.mxu0
        %v1051 = vadd.f32 0.0, %v1050
        %1052 = vmatmul.f32.gmra.mxu0 %v704
        %v1053 = vpop.f32.mrf.mxu0
        %v1054 = vadd.f32 0.0, %v1053
        %1055 = vmatmul.f32.gmra.mxu0 %v706
        %v1056 = vpop.f32.mrf.mxu0
        %v1057 = vadd.f32 0.0, %v1056
        %1058 = vmatmul.f32.gmra.mxu0 %v708
        %v1059 = vpop.f32.mrf.mxu0
        %v1060 = vadd.f32 0.0, %v1059
        %1061 = vmatmul.f32.gmra.mxu0 %v710
        %v1062 = vpop.f32.mrf.mxu0
        %v1063 = vadd.f32 0.0, %v1062
        %1064 = vmatmul.f32.gmra.mxu0 %v712
        %v1065 = vpop.f32.mrf.mxu0
        %v1066 = vadd.f32 0.0, %v1065
        %1067 = vmatmul.f32.gmra.mxu0 %v714
        %v1068 = vpop.f32.mrf.mxu0
        %v1069 = vadd.f32 0.0, %v1068
        %1070 = vmatmul.f32.gmra.mxu0 %v716
        %v1071 = vpop.f32.mrf.mxu0
        %v1072 = vadd.f32 0.0, %v1071
        %1073 = vmatmul.f32.gmra.mxu0 %v718
        %v1074 = vpop.f32.mrf.mxu0
        %v1075 = vadd.f32 0.0, %v1074
        %1076 = vmatmul.f32.gmra.mxu0 %v720
        %v1077 = vpop.f32.mrf.mxu0
        %v1078 = vadd.f32 0.0, %v1077
        %1079 = vmatmul.f32.gmra.mxu0 %v722
        %v1080 = vpop.f32.mrf.mxu0
        %v1081 = vadd.f32 0.0, %v1080
        %1082 = vmatmul.f32.gmra.mxu0 %v724
        %v1083 = vpop.f32.mrf.mxu0
        %v1084 = vadd.f32 0.0, %v1083
        %1085 = vmatmul.f32.gmra.mxu0 %v726
        %v1086 = vpop.f32.mrf.mxu0
        %v1087 = vadd.f32 0.0, %v1086
        %1088 = vdwg.mxu0
        %1089 = vmatpush.msra.mxu0 %v975
        %1090 = vmatpush.msra.mxu0 %v974
        %1091 = vmatpush.msra.mxu0 %v973
        %1092 = vmatpush.msra.mxu0 %v972
        %1093 = vmatpush.msra.mxu0 %v971
        %1094 = vmatpush.msra.mxu0 %v970
        %1095 = vmatpush.msra.mxu0 %v969
        %1096 = vmatpush.msra.mxu0 %v968
        %1097 = vmatpush.msra.mxu0 %v967
        %1098 = vmatpush.msra.mxu0 %v966
        %1099 = vmatpush.msra.mxu0 %v965
        %1100 = vmatpush.msra.mxu0 %v964
        %1101 = vmatpush.msra.mxu0 %v963
        %1102 = vmatpush.msra.mxu0 %v962
        %1103 = vmatpush.msra.mxu0 %v961
        %1104 = vmatpush.msra.mxu0 %v960
        %1105 = vmatmul.f32.gmra.mxu0 %v665
        %v1106 = vpop.f32.mrf.mxu0
        %v1107 = vadd.f32 %v994, %v1106
        %1108 = vmatmul.f32.gmra.mxu0 %v667
        %v1109 = vpop.f32.mrf.mxu0
        %v1110 = vadd.f32 %v997, %v1109
        %1111 = vmatmul.f32.gmra.mxu0 %v669
        %v1112 = vpop.f32.mrf.mxu0
        %v1113 = vadd.f32 %v1000, %v1112
        %1114 = vmatmul.f32.gmra.mxu0 %v671
        %v1115 = vpop.f32.mrf.mxu0
        %v1116 = vadd.f32 %v1003, %v1115
        %1117 = vmatmul.f32.gmra.mxu0 %v673
        %v1118 = vpop.f32.mrf.mxu0
        %v1119 = vadd.f32 %v1006, %v1118
        %1120 = vmatmul.f32.gmra.mxu0 %v675
        %v1121 = vpop.f32.mrf.mxu0
        %v1122 = vadd.f32 %v1009, %v1121
        %1123 = vmatmul.f32.gmra.mxu0 %v677
        %v1124 = vpop.f32.mrf.mxu0
        %v1125 = vadd.f32 %v1012, %v1124
        %1126 = vmatmul.f32.gmra.mxu0 %v679
        %v1127 = vpop.f32.mrf.mxu0
        %v1128 = vadd.f32 %v1015, %v1127
        %1129 = vmatmul.f32.gmra.mxu0 %v681
        %v1130 = vpop.f32.mrf.mxu0
        %v1131 = vadd.f32 %v1018, %v1130
        %1132 = vmatmul.f32.gmra.mxu0 %v683
        %v1133 = vpop.f32.mrf.mxu0
        %v1134 = vadd.f32 %v1021, %v1133
        %1135 = vmatmul.f32.gmra.mxu0 %v685
        %v1136 = vpop.f32.mrf.mxu0
        %v1137 = vadd.f32 %v1024, %v1136
        %1138 = vmatmul.f32.gmra.mxu0 %v687
        %v1139 = vpop.f32.mrf.mxu0
        %v1140 = vadd.f32 %v1027, %v1139
        %1141 = vmatmul.f32.gmra.mxu0 %v689
        %v1142 = vpop.f32.mrf.mxu0
        %v1143 = vadd.f32 %v1030, %v1142
        %1144 = vmatmul.f32.gmra.mxu0 %v691
        %v1145 = vpop.f32.mrf.mxu0
        %v1146 = vadd.f32 %v1033, %v1145
        %1147 = vmatmul.f32.gmra.mxu0 %v693
        %v1148 = vpop.f32.mrf.mxu0
        %v1149 = vadd.f32 %v1036, %v1148
        %1150 = vmatmul.f32.gmra.mxu0 %v695
        %v1151 = vpop.f32.mrf.mxu0
        %v1152 = vadd.f32 %v1039, %v1151
        %1153 = vmatmul.f32.gmra.mxu0 %v697
        %v1154 = vpop.f32.mrf.mxu0
        %v1155 = vadd.f32 %v1042, %v1154
        %1156 = vmatmul.f32.gmra.mxu0 %v699
        %v1157 = vpop.f32.mrf.mxu0
        %v1158 = vadd.f32 %v1045, %v1157
        %1159 = vmatmul.f32.gmra.mxu0 %v701
        %v1160 = vpop.f32.mrf.mxu0
        %v1161 = vadd.f32 %v1048, %v1160
        %1162 = vmatmul.f32.gmra.mxu0 %v703
        %v1163 = vpop.f32.mrf.mxu0
        %v1164 = vadd.f32 %v1051, %v1163
        %1165 = vmatmul.f32.gmra.mxu0 %v705
        %v1166 = vpop.f32.mrf.mxu0
        %v1167 = vadd.f32 %v1054, %v1166
        %1168 = vmatmul.f32.gmra.mxu0 %v707
        %v1169 = vpop.f32.mrf.mxu0
        %v1170 = vadd.f32 %v1057, %v1169
        %1171 = vmatmul.f32.gmra.mxu0 %v709
        %v1172 = vpop.f32.mrf.mxu0
        %v1173 = vadd.f32 %v1060, %v1172
        %1174 = vmatmul.f32.gmra.mxu0 %v711
        %v1175 = vpop.f32.mrf.mxu0
        %v1176 = vadd.f32 %v1063, %v1175
        %1177 = vmatmul.f32.gmra.mxu0 %v713
        %v1178 = vpop.f32.mrf.mxu0
        %v1179 = vadd.f32 %v1066, %v1178
        %1180 = vmatmul.f32.gmra.mxu0 %v715
        %v1181 = vpop.f32.mrf.mxu0
        %v1182 = vadd.f32 %v1069, %v1181
        %1183 = vmatmul.f32.gmra.mxu0 %v717
        %v1184 = vpop.f32.mrf.mxu0
        %v1185 = vadd.f32 %v1072, %v1184
        %1186 = vmatmul.f32.gmra.mxu0 %v719
        %v1187 = vpop.f32.mrf.mxu0
        %v1188 = vadd.f32 %v1075, %v1187
        %1189 = vmatmul.f32.gmra.mxu0 %v721
        %v1190 = vpop.f32.mrf.mxu0
        %v1191 = vadd.f32 %v1078, %v1190
        %1192 = vmatmul.f32.gmra.mxu0 %v723
        %v1193 = vpop.f32.mrf.mxu0
        %v1194 = vadd.f32 %v1081, %v1193
        %1195 = vmatmul.f32.gmra.mxu0 %v725
        %v1196 = vpop.f32.mrf.mxu0
        %v1197 = vadd.f32 %v1084, %v1196
        %1198 = vmatmul.f32.gmra.mxu0 %v727
        %v1199 = vpop.f32.mrf.mxu0
        %v1200 = vadd.f32 %v1087, %v1199
        %1201 = vdwg.mxu0
        %v1202 = vadd.f32 %v632, %v1107
        %v1203 = vadd.f32 %v633, %v1110
        %v1204 = vadd.f32 %v634, %v1113
        %v1205 = vadd.f32 %v635, %v1116
        %v1206 = vadd.f32 %v636, %v1119
        %v1207 = vadd.f32 %v637, %v1122
        %v1208 = vadd.f32 %v638, %v1125
        %v1209 = vadd.f32 %v639, %v1128
        %v1210 = vadd.f32 %v640, %v1131
        %v1211 = vadd.f32 %v641, %v1134
        %v1212 = vadd.f32 %v642, %v1137
        %v1213 = vadd.f32 %v643, %v1140
        %v1214 = vadd.f32 %v644, %v1143
        %v1215 = vadd.f32 %v645, %v1146
        %v1216 = vadd.f32 %v646, %v1149
        %v1217 = vadd.f32 %v647, %v1152
        %v1218 = vadd.f32 %v648, %v1155
        %v1219 = vadd.f32 %v649, %v1158
        %v1220 = vadd.f32 %v650, %v1161
        %v1221 = vadd.f32 %v651, %v1164
        %v1222 = vadd.f32 %v652, %v1167
        %v1223 = vadd.f32 %v653, %v1170
        %v1224 = vadd.f32 %v654, %v1173
        %v1225 = vadd.f32 %v655, %v1176
        %v1226 = vadd.f32 %v656, %v1179
        %v1227 = vadd.f32 %v657, %v1182
        %v1228 = vadd.f32 %v658, %v1185
        %v1229 = vadd.f32 %v659, %v1188
        %v1230 = vadd.f32 %v660, %v1191
        %v1231 = vadd.f32 %v661, %v1194
        %v1232 = vadd.f32 %v662, %v1197
        %v1233 = vadd.f32 %v663, %v1200
        %s1234 = scalar_lea.vmem %s3, 32
        %v1235 = vld [vmem:[%s1234] sm:$0xff]
        %v1236 = vld [vmem:[%s1234 + $0x8] sm:$0xff]
        %v1237 = vld [vmem:[%s1234 + $0x10] sm:$0xff]
        %v1238 = vld [vmem:[%s1234 + $0x18] sm:$0xff]
        %v1239 = vld [vmem:[#allocation5 + $0x1] sm:$0x1]
        %v1240 = vperm.slane %v1239, 0
        %v1242 = vsel %vm734, %v1202, 0
        %v1245 = vsel %vm734, %v1203, 0
        %v1248 = vsel %vm734, %v1204, 0
        %v1251 = vsel %vm734, %v1205, 0
        %v1254 = vsel %vm734, %v1206, 0
        %v1257 = vsel %vm734, %v1207, 0
        %v1260 = vsel %vm734, %v1208, 0
        %v1263 = vsel %vm734, %v1209, 0
        %v1266 = vsel %vm734, %v1210, 0
        %v1269 = vsel %vm734, %v1211, 0
        %v1272 = vsel %vm734, %v1212, 0
        %v1275 = vsel %vm734, %v1213, 0
        %v1278 = vsel %vm734, %v1214, 0
        %v1281 = vsel %vm734, %v1215, 0
        %v1284 = vsel %vm734, %v1216, 0
        %v1287 = vsel %vm734, %v1217, 0
        %v1290 = vsel %vm734, %v1218, 0
        %v1293 = vsel %vm734, %v1219, 0
        %v1296 = vsel %vm734, %v1220, 0
        %v1299 = vsel %vm734, %v1221, 0
        %v1302 = vsel %vm734, %v1222, 0
        %v1305 = vsel %vm734, %v1223, 0
        %v1308 = vsel %vm734, %v1224, 0
        %v1311 = vsel %vm734, %v1225, 0
        %v1314 = vsel %vm734, %v1226, 0
        %v1317 = vsel %vm734, %v1227, 0
        %v1320 = vsel %vm734, %v1228, 0
        %v1323 = vsel %vm734, %v1229, 0
        %v1326 = vsel %vm734, %v1230, 0
        %v1329 = vsel %vm734, %v1231, 0
        %v1332 = vsel %vm734, %v1232, 0
        %v1335 = vsel %vm734, %v1233, 0
        %1337 = vmatpush.msra.mxu0 0.0
        %1338 = vmatpush.msra.mxu0 0.0
        %1339 = vmatpush.msra.mxu0 0.0
        %1340 = vmatpush.msra.mxu0 0.0
        %1341 = vmatpush.msra.mxu0 0.0
        %1342 = vmatpush.msra.mxu0 0.0
        %1343 = vmatpush.msra.mxu0 0.0
        %1344 = vmatpush.msra.mxu0 0.0
        %1345 = vmatpush.msra.mxu0 0.0
        %1346 = vmatpush.msra.mxu0 0.0
        %1347 = vmatpush.msra.mxu0 0.0
        %1348 = vmatpush.msra.mxu0 0.0
        %1349 = vmatpush.msra.mxu0 %v1238
        %1350 = vmatpush.msra.mxu0 %v1237
        %1351 = vmatpush.msra.mxu0 %v1236
        %1352 = vmatpush.msra.mxu0 %v1235
        %1353 = vmatmul.f32.gmra.mxu0 %v1242
        %v1354 = vpop.f32.mrf.mxu0
        %v1355 = vadd.f32 %v1240, %v1354
        %1356 = vmatmul.f32.gmra.mxu0 %v1245
        %v1357 = vpop.f32.mrf.mxu0
        %v1358 = vadd.f32 %v1240, %v1357
        %1359 = vmatmul.f32.gmra.mxu0 %v1248
        %v1360 = vpop.f32.mrf.mxu0
        %v1361 = vadd.f32 %v1240, %v1360
        %1362 = vmatmul.f32.gmra.mxu0 %v1251
        %v1363 = vpop.f32.mrf.mxu0
        %v1364 = vadd.f32 %v1240, %v1363
        %1365 = vmatmul.f32.gmra.mxu0 %v1254
        %v1366 = vpop.f32.mrf.mxu0
        %v1367 = vadd.f32 %v1240, %v1366
        %1368 = vmatmul.f32.gmra.mxu0 %v1257
        %v1369 = vpop.f32.mrf.mxu0
        %v1370 = vadd.f32 %v1240, %v1369
        %1371 = vmatmul.f32.gmra.mxu0 %v1260
        %v1372 = vpop.f32.mrf.mxu0
        %v1373 = vadd.f32 %v1240, %v1372
        %1374 = vmatmul.f32.gmra.mxu0 %v1263
        %v1375 = vpop.f32.mrf.mxu0
        %v1376 = vadd.f32 %v1240, %v1375
        %1377 = vmatmul.f32.gmra.mxu0 %v1266
        %v1378 = vpop.f32.mrf.mxu0
        %v1379 = vadd.f32 %v1240, %v1378
        %1380 = vmatmul.f32.gmra.mxu0 %v1269
        %v1381 = vpop.f32.mrf.mxu0
        %v1382 = vadd.f32 %v1240, %v1381
        %1383 = vmatmul.f32.gmra.mxu0 %v1272
        %v1384 = vpop.f32.mrf.mxu0
        %v1385 = vadd.f32 %v1240, %v1384
        %1386 = vmatmul.f32.gmra.mxu0 %v1275
        %v1387 = vpop.f32.mrf.mxu0
        %v1388 = vadd.f32 %v1240, %v1387
        %1389 = vmatmul.f32.gmra.mxu0 %v1278
        %v1390 = vpop.f32.mrf.mxu0
        %v1391 = vadd.f32 %v1240, %v1390
        %1392 = vmatmul.f32.gmra.mxu0 %v1281
        %v1393 = vpop.f32.mrf.mxu0
        %v1394 = vadd.f32 %v1240, %v1393
        %1395 = vmatmul.f32.gmra.mxu0 %v1284
        %v1396 = vpop.f32.mrf.mxu0
        %v1397 = vadd.f32 %v1240, %v1396
        %1398 = vmatmul.f32.gmra.mxu0 %v1287
        %v1399 = vpop.f32.mrf.mxu0
        %v1400 = vadd.f32 %v1240, %v1399
        %1401 = vmatmul.f32.gmra.mxu0 %v1290
        %v1402 = vpop.f32.mrf.mxu0
        %v1403 = vadd.f32 %v1240, %v1402
        %1404 = vmatmul.f32.gmra.mxu0 %v1293
        %v1405 = vpop.f32.mrf.mxu0
        %v1406 = vadd.f32 %v1240, %v1405
        %1407 = vmatmul.f32.gmra.mxu0 %v1296
        %v1408 = vpop.f32.mrf.mxu0
        %v1409 = vadd.f32 %v1240, %v1408
        %1410 = vmatmul.f32.gmra.mxu0 %v1299
        %v1411 = vpop.f32.mrf.mxu0
        %v1412 = vadd.f32 %v1240, %v1411
        %1413 = vmatmul.f32.gmra.mxu0 %v1302
        %v1414 = vpop.f32.mrf.mxu0
        %v1415 = vadd.f32 %v1240, %v1414
        %1416 = vmatmul.f32.gmra.mxu0 %v1305
        %v1417 = vpop.f32.mrf.mxu0
        %v1418 = vadd.f32 %v1240, %v1417
        %1419 = vmatmul.f32.gmra.mxu0 %v1308
        %v1420 = vpop.f32.mrf.mxu0
        %v1421 = vadd.f32 %v1240, %v1420
        %1422 = vmatmul.f32.gmra.mxu0 %v1311
        %v1423 = vpop.f32.mrf.mxu0
        %v1424 = vadd.f32 %v1240, %v1423
        %1425 = vmatmul.f32.gmra.mxu0 %v1314
        %v1426 = vpop.f32.mrf.mxu0
        %v1427 = vadd.f32 %v1240, %v1426
        %1428 = vmatmul.f32.gmra.mxu0 %v1317
        %v1429 = vpop.f32.mrf.mxu0
        %v1430 = vadd.f32 %v1240, %v1429
        %1431 = vmatmul.f32.gmra.mxu0 %v1320
        %v1432 = vpop.f32.mrf.mxu0
        %v1433 = vadd.f32 %v1240, %v1432
        %1434 = vmatmul.f32.gmra.mxu0 %v1323
        %v1435 = vpop.f32.mrf.mxu0
        %v1436 = vadd.f32 %v1240, %v1435
        %1437 = vmatmul.f32.gmra.mxu0 %v1326
        %v1438 = vpop.f32.mrf.mxu0
        %v1439 = vadd.f32 %v1240, %v1438
        %1440 = vmatmul.f32.gmra.mxu0 %v1329
        %v1441 = vpop.f32.mrf.mxu0
        %v1442 = vadd.f32 %v1240, %v1441
        %1443 = vmatmul.f32.gmra.mxu0 %v1332
        %v1444 = vpop.f32.mrf.mxu0
        %v1445 = vadd.f32 %v1240, %v1444
        %1446 = vmatmul.f32.gmra.mxu0 %v1335
        %v1447 = vpop.f32.mrf.mxu0
        %v1448 = vadd.f32 %v1240, %v1447
        %1449 = vdwg.mxu0
        %v1450 = vmax.f32 %v1355, 0.0
        %v1451 = vmax.f32 %v1358, 0.0
        %v1452 = vmax.f32 %v1361, 0.0
        %v1453 = vmax.f32 %v1364, 0.0
        %v1454 = vmax.f32 %v1367, 0.0
        %v1455 = vmax.f32 %v1370, 0.0
        %v1456 = vmax.f32 %v1373, 0.0
        %v1457 = vmax.f32 %v1376, 0.0
        %v1458 = vmax.f32 %v1379, 0.0
        %v1459 = vmax.f32 %v1382, 0.0
        %v1460 = vmax.f32 %v1385, 0.0
        %v1461 = vmax.f32 %v1388, 0.0
        %v1462 = vmax.f32 %v1391, 0.0
        %v1463 = vmax.f32 %v1394, 0.0
        %v1464 = vmax.f32 %v1397, 0.0
        %v1465 = vmax.f32 %v1400, 0.0
        %v1466 = vmax.f32 %v1403, 0.0
        %v1467 = vmax.f32 %v1406, 0.0
        %v1468 = vmax.f32 %v1409, 0.0
        %v1469 = vmax.f32 %v1412, 0.0
        %v1470 = vmax.f32 %v1415, 0.0
        %v1471 = vmax.f32 %v1418, 0.0
        %v1472 = vmax.f32 %v1421, 0.0
        %v1473 = vmax.f32 %v1424, 0.0
        %v1474 = vmax.f32 %v1427, 0.0
        %v1475 = vmax.f32 %v1430, 0.0
        %v1476 = vmax.f32 %v1433, 0.0
        %v1477 = vmax.f32 %v1436, 0.0
        %v1478 = vmax.f32 %v1439, 0.0
        %v1479 = vmax.f32 %v1442, 0.0
        %v1480 = vmax.f32 %v1445, 0.0
        %v1481 = vmax.f32 %v1448, 0.0
        %1482 = vmatpush.msra.mxu0 %v1465
        %1483 = vmatpush.msra.mxu0 %v1464
        %1484 = vmatpush.msra.mxu0 %v1463
        %1485 = vmatpush.msra.mxu0 %v1462
        %1486 = vmatpush.msra.mxu0 %v1461
        %1487 = vmatpush.msra.mxu0 %v1460
        %1488 = vmatpush.msra.mxu0 %v1459
        %1489 = vmatpush.msra.mxu0 %v1458
        %1490 = vmatpush.msra.mxu0 %v1457
        %1491 = vmatpush.msra.mxu0 %v1456
        %1492 = vmatpush.msra.mxu0 %v1455
        %1493 = vmatpush.msra.mxu0 %v1454
        %1494 = vmatpush.msra.mxu0 %v1453
        %1495 = vmatpush.msra.mxu0 %v1452
        %1496 = vmatpush.msra.mxu0 %v1451
        %1497 = vmatpush.msra.mxu0 %v1450
        %1498 = vmatmul.f32.gmra.mxu0 %v664
        %v1499 = vpop.f32.mrf.mxu0
        %v1500 = vadd.f32 0.0, %v1499
        %1501 = vmatmul.f32.gmra.mxu0 %v666
        %v1502 = vpop.f32.mrf.mxu0
        %v1503 = vadd.f32 0.0, %v1502
        %1504 = vmatmul.f32.gmra.mxu0 %v668
        %v1505 = vpop.f32.mrf.mxu0
        %v1506 = vadd.f32 0.0, %v1505
        %1507 = vmatmul.f32.gmra.mxu0 %v670
        %v1508 = vpop.f32.mrf.mxu0
        %v1509 = vadd.f32 0.0, %v1508
        %1510 = vmatmul.f32.gmra.mxu0 %v672
        %v1511 = vpop.f32.mrf.mxu0
        %v1512 = vadd.f32 0.0, %v1511
        %1513 = vmatmul.f32.gmra.mxu0 %v674
        %v1514 = vpop.f32.mrf.mxu0
        %v1515 = vadd.f32 0.0, %v1514
        %1516 = vmatmul.f32.gmra.mxu0 %v676
        %v1517 = vpop.f32.mrf.mxu0
        %v1518 = vadd.f32 0.0, %v1517
        %1519 = vmatmul.f32.gmra.mxu0 %v678
        %v1520 = vpop.f32.mrf.mxu0
        %v1521 = vadd.f32 0.0, %v1520
        %1522 = vmatmul.f32.gmra.mxu0 %v680
        %v1523 = vpop.f32.mrf.mxu0
        %v1524 = vadd.f32 0.0, %v1523
        %1525 = vmatmul.f32.gmra.mxu0 %v682
        %v1526 = vpop.f32.mrf.mxu0
        %v1527 = vadd.f32 0.0, %v1526
        %1528 = vmatmul.f32.gmra.mxu0 %v684
        %v1529 = vpop.f32.mrf.mxu0
        %v1530 = vadd.f32 0.0, %v1529
        %1531 = vmatmul.f32.gmra.mxu0 %v686
        %v1532 = vpop.f32.mrf.mxu0
        %v1533 = vadd.f32 0.0, %v1532
        %1534 = vmatmul.f32.gmra.mxu0 %v688
        %v1535 = vpop.f32.mrf.mxu0
        %v1536 = vadd.f32 0.0, %v1535
        %1537 = vmatmul.f32.gmra.mxu0 %v690
        %v1538 = vpop.f32.mrf.mxu0
        %v1539 = vadd.f32 0.0, %v1538
        %1540 = vmatmul.f32.gmra.mxu0 %v692
        %v1541 = vpop.f32.mrf.mxu0
        %v1542 = vadd.f32 0.0, %v1541
        %1543 = vmatmul.f32.gmra.mxu0 %v694
        %v1544 = vpop.f32.mrf.mxu0
        %v1545 = vadd.f32 0.0, %v1544
        %1546 = vmatmul.f32.gmra.mxu0 %v696
        %v1547 = vpop.f32.mrf.mxu0
        %v1548 = vadd.f32 0.0, %v1547
        %1549 = vmatmul.f32.gmra.mxu0 %v698
        %v1550 = vpop.f32.mrf.mxu0
        %v1551 = vadd.f32 0.0, %v1550
        %1552 = vmatmul.f32.gmra.mxu0 %v700
        %v1553 = vpop.f32.mrf.mxu0
        %v1554 = vadd.f32 0.0, %v1553
        %1555 = vmatmul.f32.gmra.mxu0 %v702
        %v1556 = vpop.f32.mrf.mxu0
        %v1557 = vadd.f32 0.0, %v1556
        %1558 = vmatmul.f32.gmra.mxu0 %v704
        %v1559 = vpop.f32.mrf.mxu0
        %v1560 = vadd.f32 0.0, %v1559
        %1561 = vmatmul.f32.gmra.mxu0 %v706
        %v1562 = vpop.f32.mrf.mxu0
        %v1563 = vadd.f32 0.0, %v1562
        %1564 = vmatmul.f32.gmra.mxu0 %v708
        %v1565 = vpop.f32.mrf.mxu0
        %v1566 = vadd.f32 0.0, %v1565
        %1567 = vmatmul.f32.gmra.mxu0 %v710
        %v1568 = vpop.f32.mrf.mxu0
        %v1569 = vadd.f32 0.0, %v1568
        %1570 = vmatmul.f32.gmra.mxu0 %v712
        %v1571 = vpop.f32.mrf.mxu0
        %v1572 = vadd.f32 0.0, %v1571
        %1573 = vmatmul.f32.gmra.mxu0 %v714
        %v1574 = vpop.f32.mrf.mxu0
        %v1575 = vadd.f32 0.0, %v1574
        %1576 = vmatmul.f32.gmra.mxu0 %v716
        %v1577 = vpop.f32.mrf.mxu0
        %v1578 = vadd.f32 0.0, %v1577
        %1579 = vmatmul.f32.gmra.mxu0 %v718
        %v1580 = vpop.f32.mrf.mxu0
        %v1581 = vadd.f32 0.0, %v1580
        %1582 = vmatmul.f32.gmra.mxu0 %v720
        %v1583 = vpop.f32.mrf.mxu0
        %v1584 = vadd.f32 0.0, %v1583
        %1585 = vmatmul.f32.gmra.mxu0 %v722
        %v1586 = vpop.f32.mrf.mxu0
        %v1587 = vadd.f32 0.0, %v1586
        %1588 = vmatmul.f32.gmra.mxu0 %v724
        %v1589 = vpop.f32.mrf.mxu0
        %v1590 = vadd.f32 0.0, %v1589
        %1591 = vmatmul.f32.gmra.mxu0 %v726
        %v1592 = vpop.f32.mrf.mxu0
        %v1593 = vadd.f32 0.0, %v1592
        %1594 = vdwg.mxu0
        %1595 = vmatpush.msra.mxu0 %v1481
        %1596 = vmatpush.msra.mxu0 %v1480
        %1597 = vmatpush.msra.mxu0 %v1479
        %1598 = vmatpush.msra.mxu0 %v1478
        %1599 = vmatpush.msra.mxu0 %v1477
        %1600 = vmatpush.msra.mxu0 %v1476
        %1601 = vmatpush.msra.mxu0 %v1475
        %1602 = vmatpush.msra.mxu0 %v1474
        %1603 = vmatpush.msra.mxu0 %v1473
        %1604 = vmatpush.msra.mxu0 %v1472
        %1605 = vmatpush.msra.mxu0 %v1471
        %1606 = vmatpush.msra.mxu0 %v1470
        %1607 = vmatpush.msra.mxu0 %v1469
        %1608 = vmatpush.msra.mxu0 %v1468
        %1609 = vmatpush.msra.mxu0 %v1467
        %1610 = vmatpush.msra.mxu0 %v1466
        %1611 = vmatmul.f32.gmra.mxu0 %v665
        %v1612 = vpop.f32.mrf.mxu0
        %v1613 = vadd.f32 %v1500, %v1612
        %1614 = vmatmul.f32.gmra.mxu0 %v667
        %v1615 = vpop.f32.mrf.mxu0
        %v1616 = vadd.f32 %v1503, %v1615
        %1617 = vmatmul.f32.gmra.mxu0 %v669
        %v1618 = vpop.f32.mrf.mxu0
        %v1619 = vadd.f32 %v1506, %v1618
        %1620 = vmatmul.f32.gmra.mxu0 %v671
        %v1621 = vpop.f32.mrf.mxu0
        %v1622 = vadd.f32 %v1509, %v1621
        %1623 = vmatmul.f32.gmra.mxu0 %v673
        %v1624 = vpop.f32.mrf.mxu0
        %v1625 = vadd.f32 %v1512, %v1624
        %1626 = vmatmul.f32.gmra.mxu0 %v675
        %v1627 = vpop.f32.mrf.mxu0
        %v1628 = vadd.f32 %v1515, %v1627
        %1629 = vmatmul.f32.gmra.mxu0 %v677
        %v1630 = vpop.f32.mrf.mxu0
        %v1631 = vadd.f32 %v1518, %v1630
        %1632 = vmatmul.f32.gmra.mxu0 %v679
        %v1633 = vpop.f32.mrf.mxu0
        %v1634 = vadd.f32 %v1521, %v1633
        %1635 = vmatmul.f32.gmra.mxu0 %v681
        %v1636 = vpop.f32.mrf.mxu0
        %v1637 = vadd.f32 %v1524, %v1636
        %1638 = vmatmul.f32.gmra.mxu0 %v683
        %v1639 = vpop.f32.mrf.mxu0
        %v1640 = vadd.f32 %v1527, %v1639
        %1641 = vmatmul.f32.gmra.mxu0 %v685
        %v1642 = vpop.f32.mrf.mxu0
        %v1643 = vadd.f32 %v1530, %v1642
        %1644 = vmatmul.f32.gmra.mxu0 %v687
        %v1645 = vpop.f32.mrf.mxu0
        %v1646 = vadd.f32 %v1533, %v1645
        %1647 = vmatmul.f32.gmra.mxu0 %v689
        %v1648 = vpop.f32.mrf.mxu0
        %v1649 = vadd.f32 %v1536, %v1648
        %1650 = vmatmul.f32.gmra.mxu0 %v691
        %v1651 = vpop.f32.mrf.mxu0
        %v1652 = vadd.f32 %v1539, %v1651
        %1653 = vmatmul.f32.gmra.mxu0 %v693
        %v1654 = vpop.f32.mrf.mxu0
        %v1655 = vadd.f32 %v1542, %v1654
        %1656 = vmatmul.f32.gmra.mxu0 %v695
        %v1657 = vpop.f32.mrf.mxu0
        %v1658 = vadd.f32 %v1545, %v1657
        %1659 = vmatmul.f32.gmra.mxu0 %v697
        %v1660 = vpop.f32.mrf.mxu0
        %v1661 = vadd.f32 %v1548, %v1660
        %1662 = vmatmul.f32.gmra.mxu0 %v699
        %v1663 = vpop.f32.mrf.mxu0
        %v1664 = vadd.f32 %v1551, %v1663
        %1665 = vmatmul.f32.gmra.mxu0 %v701
        %v1666 = vpop.f32.mrf.mxu0
        %v1667 = vadd.f32 %v1554, %v1666
        %1668 = vmatmul.f32.gmra.mxu0 %v703
        %v1669 = vpop.f32.mrf.mxu0
        %v1670 = vadd.f32 %v1557, %v1669
        %1671 = vmatmul.f32.gmra.mxu0 %v705
        %v1672 = vpop.f32.mrf.mxu0
        %v1673 = vadd.f32 %v1560, %v1672
        %1674 = vmatmul.f32.gmra.mxu0 %v707
        %v1675 = vpop.f32.mrf.mxu0
        %v1676 = vadd.f32 %v1563, %v1675
        %1677 = vmatmul.f32.gmra.mxu0 %v709
        %v1678 = vpop.f32.mrf.mxu0
        %v1679 = vadd.f32 %v1566, %v1678
        %1680 = vmatmul.f32.gmra.mxu0 %v711
        %v1681 = vpop.f32.mrf.mxu0
        %v1682 = vadd.f32 %v1569, %v1681
        %1683 = vmatmul.f32.gmra.mxu0 %v713
        %v1684 = vpop.f32.mrf.mxu0
        %v1685 = vadd.f32 %v1572, %v1684
        %1686 = vmatmul.f32.gmra.mxu0 %v715
        %v1687 = vpop.f32.mrf.mxu0
        %v1688 = vadd.f32 %v1575, %v1687
        %1689 = vmatmul.f32.gmra.mxu0 %v717
        %v1690 = vpop.f32.mrf.mxu0
        %v1691 = vadd.f32 %v1578, %v1690
        %1692 = vmatmul.f32.gmra.mxu0 %v719
        %v1693 = vpop.f32.mrf.mxu0
        %v1694 = vadd.f32 %v1581, %v1693
        %1695 = vmatmul.f32.gmra.mxu0 %v721
        %v1696 = vpop.f32.mrf.mxu0
        %v1697 = vadd.f32 %v1584, %v1696
        %1698 = vmatmul.f32.gmra.mxu0 %v723
        %v1699 = vpop.f32.mrf.mxu0
        %v1700 = vadd.f32 %v1587, %v1699
        %1701 = vmatmul.f32.gmra.mxu0 %v725
        %v1702 = vpop.f32.mrf.mxu0
        %v1703 = vadd.f32 %v1590, %v1702
        %1704 = vmatmul.f32.gmra.mxu0 %v727
        %v1705 = vpop.f32.mrf.mxu0
        %v1706 = vadd.f32 %v1593, %v1705
        %1707 = vdwg.mxu0
        %v1708 = vadd.f32 %v1202, %v1613
        %v1709 = vadd.f32 %v1203, %v1616
        %v1710 = vadd.f32 %v1204, %v1619
        %v1711 = vadd.f32 %v1205, %v1622
        %v1712 = vadd.f32 %v1206, %v1625
        %v1713 = vadd.f32 %v1207, %v1628
        %v1714 = vadd.f32 %v1208, %v1631
        %v1715 = vadd.f32 %v1209, %v1634
        %v1716 = vadd.f32 %v1210, %v1637
        %v1717 = vadd.f32 %v1211, %v1640
        %v1718 = vadd.f32 %v1212, %v1643
        %v1719 = vadd.f32 %v1213, %v1646
        %v1720 = vadd.f32 %v1214, %v1649
        %v1721 = vadd.f32 %v1215, %v1652
        %v1722 = vadd.f32 %v1216, %v1655
        %v1723 = vadd.f32 %v1217, %v1658
        %v1724 = vadd.f32 %v1218, %v1661
        %v1725 = vadd.f32 %v1219, %v1664
        %v1726 = vadd.f32 %v1220, %v1667
        %v1727 = vadd.f32 %v1221, %v1670
        %v1728 = vadd.f32 %v1222, %v1673
        %v1729 = vadd.f32 %v1223, %v1676
        %v1730 = vadd.f32 %v1224, %v1679
        %v1731 = vadd.f32 %v1225, %v1682
        %v1732 = vadd.f32 %v1226, %v1685
        %v1733 = vadd.f32 %v1227, %v1688
        %v1734 = vadd.f32 %v1228, %v1691
        %v1735 = vadd.f32 %v1229, %v1694
        %v1736 = vadd.f32 %v1230, %v1697
        %v1737 = vadd.f32 %v1231, %v1700
        %v1738 = vadd.f32 %v1232, %v1703
        %v1739 = vadd.f32 %v1233, %v1706
        %v1740 = vld [vmem:[%s5] sm:$0xff]
        %v1741 = vld [vmem:[%s5 + $0x8] sm:$0xff]
        %v1742 = vld [vmem:[%s5 + $0x10] sm:$0xff]
        %v1743 = vld [vmem:[%s5 + $0x18] sm:$0xff]
        %v1744 = vld [vmem:[%s5 + $0x20] sm:$0xff]
        %v1745 = vld [vmem:[%s5 + $0x28] sm:$0xff]
        %v1746 = vld [vmem:[%s5 + $0x30] sm:$0xff]
        %v1747 = vld [vmem:[%s5 + $0x38] sm:$0xff]
        %1748 = vmatpush.msra.mxu0 %v1723
        %1749 = vmatpush.msra.mxu0 %v1722
        %1750 = vmatpush.msra.mxu0 %v1721
        %1751 = vmatpush.msra.mxu0 %v1720
        %1752 = vmatpush.msra.mxu0 %v1719
        %1753 = vmatpush.msra.mxu0 %v1718
        %1754 = vmatpush.msra.mxu0 %v1717
        %1755 = vmatpush.msra.mxu0 %v1716
        %1756 = vmatpush.msra.mxu0 %v1715
        %1757 = vmatpush.msra.mxu0 %v1714
        %1758 = vmatpush.msra.mxu0 %v1713
        %1759 = vmatpush.msra.mxu0 %v1712
        %1760 = vmatpush.msra.mxu0 %v1711
        %1761 = vmatpush.msra.mxu0 %v1710
        %1762 = vmatpush.msra.mxu0 %v1709
        %1763 = vmatpush.msra.mxu0 %v1708
        %1764 = vmatmul.f32.gmra.mxu0 %v1740
        %v1765 = vpop.f32.mrf.mxu0
        %v1766 = vadd.f32 0.0, %v1765
        %1767 = vmatmul.f32.gmra.mxu0 %v1742
        %v1768 = vpop.f32.mrf.mxu0
        %v1769 = vadd.f32 0.0, %v1768
        %1770 = vmatmul.f32.gmra.mxu0 %v1744
        %v1771 = vpop.f32.mrf.mxu0
        %v1772 = vadd.f32 0.0, %v1771
        %1773 = vmatmul.f32.gmra.mxu0 %v1746
        %v1774 = vpop.f32.mrf.mxu0
        %v1775 = vadd.f32 0.0, %v1774
        %1776 = vdwg.mxu0
        %1777 = vmatpush.msra.mxu0 %v1739
        %1778 = vmatpush.msra.mxu0 %v1738
        %1779 = vmatpush.msra.mxu0 %v1737
        %1780 = vmatpush.msra.mxu0 %v1736
        %1781 = vmatpush.msra.mxu0 %v1735
        %1782 = vmatpush.msra.mxu0 %v1734
        %1783 = vmatpush.msra.mxu0 %v1733
        %1784 = vmatpush.msra.mxu0 %v1732
        %1785 = vmatpush.msra.mxu0 %v1731
        %1786 = vmatpush.msra.mxu0 %v1730
        %1787 = vmatpush.msra.mxu0 %v1729
        %1788 = vmatpush.msra.mxu0 %v1728
        %1789 = vmatpush.msra.mxu0 %v1727
        %1790 = vmatpush.msra.mxu0 %v1726
        %1791 = vmatpush.msra.mxu0 %v1725
        %1792 = vmatpush.msra.mxu0 %v1724
        %1793 = vmatmul.f32.gmra.mxu0 %v1741
        %v1794 = vpop.f32.mrf.mxu0
        %v1795 = vadd.f32 %v1766, %v1794
        %1796 = vmatmul.f32.gmra.mxu0 %v1743
        %v1797 = vpop.f32.mrf.mxu0
        %v1798 = vadd.f32 %v1769, %v1797
        %1799 = vmatmul.f32.gmra.mxu0 %v1745
        %v1800 = vpop.f32.mrf.mxu0
        %v1801 = vadd.f32 %v1772, %v1800
        %1802 = vmatmul.f32.gmra.mxu0 %v1747
        %v1803 = vpop.f32.mrf.mxu0
        %v1804 = vadd.f32 %v1775, %v1803
        %1805 = vdwg.mxu0
        %1807 = vrot.lane.b32.xlu0 %v1798, 32
        %v1808 = vpop.permute.xlu0 %1807
        %1811 = vrot.lane.b32.xlu0 %v1801, 64
        %v1812 = vpop.permute.xlu0 %1811
        %1815 = vrot.lane.b32.xlu0 %v1804, 96
        %v1816 = vpop.permute.xlu0 %1815
        %v1818 = vsel %vm734, %v1795, %v1808
        %vm1819 = vcmask 523264
        %v1820 = vsel %vm1819, %v1818, %v1812
        %vm1821 = vcmask 785408
        %v1822 = vsel %vm1821, %v1820, %v1816
        %v1823 = vld [vmem:[%s631] sm:$0xff]
        %v1824 = vld [vmem:[%s631 + $0x8] sm:$0xff]
        %v1825 = vld [vmem:[%s631 + $0x10] sm:$0xff]
        %v1826 = vld [vmem:[%s631 + $0x18] sm:$0xff]
        %v1827 = vld [vmem:[%s631 + $0x20] sm:$0xff]
        %v1828 = vld [vmem:[%s631 + $0x28] sm:$0xff]
        %v1829 = vld [vmem:[%s631 + $0x30] sm:$0xff]
        %v1830 = vld [vmem:[%s631 + $0x38] sm:$0xff]
        %v1831 = vld [vmem:[%s631 + $0x40] sm:$0xff]
        %v1832 = vld [vmem:[%s631 + $0x48] sm:$0xff]
        %v1833 = vld [vmem:[%s631 + $0x50] sm:$0xff]
        %v1834 = vld [vmem:[%s631 + $0x58] sm:$0xff]
        %v1835 = vld [vmem:[%s631 + $0x60] sm:$0xff]
        %v1836 = vld [vmem:[%s631 + $0x68] sm:$0xff]
        %v1837 = vld [vmem:[%s631 + $0x70] sm:$0xff]
        %v1838 = vld [vmem:[%s631 + $0x78] sm:$0xff]
        %v1839 = vld [vmem:[%s6] sm:$0xff]
        %v1840 = vld [vmem:[%s6 + $0x8] sm:$0xff]
        %v1841 = vld [vmem:[%s6 + $0x10] sm:$0xff]
        %v1842 = vld [vmem:[%s6 + $0x18] sm:$0xff]
        %v1843 = vld [vmem:[%s6 + $0x20] sm:$0xff]
        %v1844 = vld [vmem:[%s6 + $0x28] sm:$0xff]
        %v1845 = vld [vmem:[%s6 + $0x30] sm:$0xff]
        %v1846 = vld [vmem:[%s6 + $0x38] sm:$0xff]
        %v1847 = vld [vmem:[%s6 + $0x40] sm:$0xff]
        %v1848 = vld [vmem:[%s6 + $0x48] sm:$0xff]
        %v1849 = vld [vmem:[%s6 + $0x50] sm:$0xff]
        %v1850 = vld [vmem:[%s6 + $0x58] sm:$0xff]
        %v1851 = vld [vmem:[%s6 + $0x60] sm:$0xff]
        %v1852 = vld [vmem:[%s6 + $0x68] sm:$0xff]
        %v1853 = vld [vmem:[%s6 + $0x70] sm:$0xff]
        %v1854 = vld [vmem:[%s6 + $0x78] sm:$0xff]
        %v1855 = vld [vmem:[#allocation7] sm:$0x1]
        %v1856 = vld [vmem:[%s10] sm:$0xff]
        %v1857 = vld [vmem:[%s10 + $0x8] sm:$0xff]
        %v1858 = vld [vmem:[%s10 + $0x10] sm:$0xff]
        %v1859 = vld [vmem:[%s10 + $0x18] sm:$0xff]
        %v1860 = vld [vmem:[%s10 + $0x20] sm:$0xff]
        %v1861 = vld [vmem:[%s10 + $0x28] sm:$0xff]
        %v1862 = vld [vmem:[%s10 + $0x30] sm:$0xff]
        %v1863 = vld [vmem:[%s10 + $0x38] sm:$0xff]
        %v1864 = vld [vmem:[%s10 + $0x40] sm:$0xff]
        %v1865 = vld [vmem:[%s10 + $0x48] sm:$0xff]
        %v1866 = vld [vmem:[%s10 + $0x50] sm:$0xff]
        %v1867 = vld [vmem:[%s10 + $0x58] sm:$0xff]
        %v1868 = vld [vmem:[%s10 + $0x60] sm:$0xff]
        %v1869 = vld [vmem:[%s10 + $0x68] sm:$0xff]
        %v1870 = vld [vmem:[%s10 + $0x70] sm:$0xff]
        %v1871 = vld [vmem:[%s10 + $0x78] sm:$0xff]
        %v1872 = vld [vmem:[%s11] sm:$0xff]
        %v1873 = vld [vmem:[%s12] sm:$0xff]
        %v1874 = vld [vmem:[%s12 + $0x8] sm:$0xff]
        %v1875 = vld [vmem:[%s12 + $0x10] sm:$0xff]
        %v1876 = vld [vmem:[%s12 + $0x18] sm:$0xff]
        %v1877 = vld [vmem:[%s12 + $0x20] sm:$0xff]
        %v1878 = vld [vmem:[%s12 + $0x28] sm:$0xff]
        %v1879 = vld [vmem:[%s12 + $0x30] sm:$0xff]
        %v1880 = vld [vmem:[%s12 + $0x38] sm:$0xff]
        %v1881 = vld [vmem:[%s12 + $0x40] sm:$0xff]
        %v1882 = vld [vmem:[%s12 + $0x48] sm:$0xff]
        %v1883 = vld [vmem:[%s12 + $0x50] sm:$0xff]
        %v1884 = vld [vmem:[%s12 + $0x58] sm:$0xff]
        %v1885 = vld [vmem:[%s12 + $0x60] sm:$0xff]
        %v1886 = vld [vmem:[%s12 + $0x68] sm:$0xff]
        %v1887 = vld [vmem:[%s12 + $0x70] sm:$0xff]
        %v1888 = vld [vmem:[%s12 + $0x78] sm:$0xff]
        %v1889 = vlaneseq
        %v1890 = vshrl.u32 %v1889, 7
        %v1891 = vadd.s32 %v1890, 8
        %v1892 = vadd.s32 %v1890, 16
        %v1893 = vadd.s32 %v1890, 24
        %v1894 = vadd.s32 %v1890, 32
        %v1895 = vadd.s32 %v1890, 40
        %v1896 = vadd.s32 %v1890, 48
        %v1897 = vadd.s32 %v1890, 56
        %v1898 = vadd.s32 %v1890, 64
        %v1899 = vadd.s32 %v1890, 72
        %v1900 = vadd.s32 %v1890, 80
        %v1901 = vadd.s32 %v1890, 88
        %v1902 = vadd.s32 %v1890, 96
        %v1903 = vadd.s32 %v1890, 104
        %v1904 = vadd.s32 %v1890, 112
        %v1905 = vadd.s32 %v1890, 120
        %vm1906 = vcmp.lt.s32.totalorder %v1890, 0
        %v1907 = vsub.s32 0, %v1890
        %v1908 = vsel %vm1906, %v1907, %v1890
        %v1909 = vshrl.u32 %v1908, 4
        %v1910 = vand.u32 %v1908, 15
        %v1911 = vsub.s32 0, %v1910
        %v1912 = vsel %vm1906, %v1911, %v1910
        %vm1913 = vcmp.lt.s32.totalorder %v1891, 0
        %v1914 = vsub.s32 0, %v1891
        %v1915 = vsel %vm1913, %v1914, %v1891
        %v1916 = vshrl.u32 %v1915, 4
        %v1917 = vand.u32 %v1915, 15
        %v1918 = vsub.s32 0, %v1917
        %v1919 = vsel %vm1913, %v1918, %v1917
        %vm1920 = vcmp.lt.s32.totalorder %v1892, 0
        %v1921 = vsub.s32 0, %v1892
        %v1922 = vsel %vm1920, %v1921, %v1892
        %v1923 = vshrl.u32 %v1922, 4
        %v1924 = vand.u32 %v1922, 15
        %v1925 = vsub.s32 0, %v1924
        %v1926 = vsel %vm1920, %v1925, %v1924
        %vm1927 = vcmp.lt.s32.totalorder %v1893, 0
        %v1928 = vsub.s32 0, %v1893
        %v1929 = vsel %vm1927, %v1928, %v1893
        %v1930 = vshrl.u32 %v1929, 4
        %v1931 = vand.u32 %v1929, 15
        %v1932 = vsub.s32 0, %v1931
        %v1933 = vsel %vm1927, %v1932, %v1931
        %vm1934 = vcmp.lt.s32.totalorder %v1894, 0
        %v1935 = vsub.s32 0, %v1894
        %v1936 = vsel %vm1934, %v1935, %v1894
        %v1937 = vshrl.u32 %v1936, 4
        %v1938 = vand.u32 %v1936, 15
        %v1939 = vsub.s32 0, %v1938
        %v1940 = vsel %vm1934, %v1939, %v1938
        %vm1941 = vcmp.lt.s32.totalorder %v1895, 0
        %v1942 = vsub.s32 0, %v1895
        %v1943 = vsel %vm1941, %v1942, %v1895
        %v1944 = vshrl.u32 %v1943, 4
        %v1945 = vand.u32 %v1943, 15
        %v1946 = vsub.s32 0, %v1945
        %v1947 = vsel %vm1941, %v1946, %v1945
        %vm1948 = vcmp.lt.s32.totalorder %v1896, 0
        %v1949 = vsub.s32 0, %v1896
        %v1950 = vsel %vm1948, %v1949, %v1896
        %v1951 = vshrl.u32 %v1950, 4
        %v1952 = vand.u32 %v1950, 15
        %v1953 = vsub.s32 0, %v1952
        %v1954 = vsel %vm1948, %v1953, %v1952
        %vm1955 = vcmp.lt.s32.totalorder %v1897, 0
        %v1956 = vsub.s32 0, %v1897
        %v1957 = vsel %vm1955, %v1956, %v1897
        %v1958 = vshrl.u32 %v1957, 4
        %v1959 = vand.u32 %v1957, 15
        %v1960 = vsub.s32 0, %v1959
        %v1961 = vsel %vm1955, %v1960, %v1959
        %vm1962 = vcmp.lt.s32.totalorder %v1898, 0
        %v1963 = vsub.s32 0, %v1898
        %v1964 = vsel %vm1962, %v1963, %v1898
        %v1965 = vshrl.u32 %v1964, 4
        %v1966 = vand.u32 %v1964, 15
        %v1967 = vsub.s32 0, %v1966
        %v1968 = vsel %vm1962, %v1967, %v1966
        %vm1969 = vcmp.lt.s32.totalorder %v1899, 0
        %v1970 = vsub.s32 0, %v1899
        %v1971 = vsel %vm1969, %v1970, %v1899
        %v1972 = vshrl.u32 %v1971, 4
        %v1973 = vand.u32 %v1971, 15
        %v1974 = vsub.s32 0, %v1973
        %v1975 = vsel %vm1969, %v1974, %v1973
        %vm1976 = vcmp.lt.s32.totalorder %v1900, 0
        %v1977 = vsub.s32 0, %v1900
        %v1978 = vsel %vm1976, %v1977, %v1900
        %v1979 = vshrl.u32 %v1978, 4
        %v1980 = vand.u32 %v1978, 15
        %v1981 = vsub.s32 0, %v1980
        %v1982 = vsel %vm1976, %v1981, %v1980
        %vm1983 = vcmp.lt.s32.totalorder %v1901, 0
        %v1984 = vsub.s32 0, %v1901
        %v1985 = vsel %vm1983, %v1984, %v1901
        %v1986 = vshrl.u32 %v1985, 4
        %v1987 = vand.u32 %v1985, 15
        %v1988 = vsub.s32 0, %v1987
        %v1989 = vsel %vm1983, %v1988, %v1987
        %vm1990 = vcmp.lt.s32.totalorder %v1902, 0
        %v1991 = vsub.s32 0, %v1902
        %v1992 = vsel %vm1990, %v1991, %v1902
        %v1993 = vshrl.u32 %v1992, 4
        %v1994 = vand.u32 %v1992, 15
        %v1995 = vsub.s32 0, %v1994
        %v1996 = vsel %vm1990, %v1995, %v1994
        %vm1997 = vcmp.lt.s32.totalorder %v1903, 0
        %v1998 = vsub.s32 0, %v1903
        %v1999 = vsel %vm1997, %v1998, %v1903
        %v2000 = vshrl.u32 %v1999, 4
        %v2001 = vand.u32 %v1999, 15
        %v2002 = vsub.s32 0, %v2001
        %v2003 = vsel %vm1997, %v2002, %v2001
        %vm2004 = vcmp.lt.s32.totalorder %v1904, 0
        %v2005 = vsub.s32 0, %v1904
        %v2006 = vsel %vm2004, %v2005, %v1904
        %v2007 = vshrl.u32 %v2006, 4
        %v2008 = vand.u32 %v2006, 15
        %v2009 = vsub.s32 0, %v2008
        %v2010 = vsel %vm2004, %v2009, %v2008
        %vm2011 = vcmp.lt.s32.totalorder %v1905, 0
        %v2012 = vsub.s32 0, %v1905
        %v2013 = vsel %vm2011, %v2012, %v1905
        %v2014 = vshrl.u32 %v2013, 4
        %v2015 = vand.u32 %v2013, 15
        %v2016 = vsub.s32 0, %v2015
        %v2017 = vsel %vm2011, %v2016, %v2015
        %vm2018 = vcmp.ne.s32.totalorder %v1912, 0
        %vm2019 = vcmp.ne.s32.totalorder %v1919, 0
        %vm2020 = vcmp.ne.s32.totalorder %v1926, 0
        %vm2021 = vcmp.ne.s32.totalorder %v1933, 0
        %vm2022 = vcmp.ne.s32.totalorder %v1940, 0
        %vm2023 = vcmp.ne.s32.totalorder %v1947, 0
        %vm2024 = vcmp.ne.s32.totalorder %v1954, 0
        %vm2025 = vcmp.ne.s32.totalorder %v1961, 0
        %vm2026 = vcmp.ne.s32.totalorder %v1968, 0
        %vm2027 = vcmp.ne.s32.totalorder %v1975, 0
        %vm2028 = vcmp.ne.s32.totalorder %v1982, 0
        %vm2029 = vcmp.ne.s32.totalorder %v1989, 0
        %vm2030 = vcmp.ne.s32.totalorder %v1996, 0
        %vm2031 = vcmp.ne.s32.totalorder %v2003, 0
        %vm2032 = vcmp.ne.s32.totalorder %v2010, 0
        %vm2033 = vcmp.ne.s32.totalorder %v2017, 0
        %vm2034 = vcmp.lt.s32.totalorder %v1912, 0
        %vm2035 = vcmp.lt.s32.totalorder %v1919, 0
        %vm2036 = vcmp.lt.s32.totalorder %v1926, 0
        %vm2037 = vcmp.lt.s32.totalorder %v1933, 0
        %vm2038 = vcmp.lt.s32.totalorder %v1940, 0
        %vm2039 = vcmp.lt.s32.totalorder %v1947, 0
        %vm2040 = vcmp.lt.s32.totalorder %v1954, 0
        %vm2041 = vcmp.lt.s32.totalorder %v1961, 0
        %vm2042 = vcmp.lt.s32.totalorder %v1968, 0
        %vm2043 = vcmp.lt.s32.totalorder %v1975, 0
        %vm2044 = vcmp.lt.s32.totalorder %v1982, 0
        %vm2045 = vcmp.lt.s32.totalorder %v1989, 0
        %vm2046 = vcmp.lt.s32.totalorder %v1996, 0
        %vm2047 = vcmp.lt.s32.totalorder %v2003, 0
        %vm2048 = vcmp.lt.s32.totalorder %v2010, 0
        %vm2049 = vcmp.lt.s32.totalorder %v2017, 0
        %vm2050 = vmand %vm2034, %vm2018
        %vm2051 = vmand %vm2035, %vm2019
        %vm2052 = vmand %vm2036, %vm2020
        %vm2053 = vmand %vm2037, %vm2021
        %vm2054 = vmand %vm2038, %vm2022
        %vm2055 = vmand %vm2039, %vm2023
        %vm2056 = vmand %vm2040, %vm2024
        %vm2057 = vmand %vm2041, %vm2025
        %vm2058 = vmand %vm2042, %vm2026
        %vm2059 = vmand %vm2043, %vm2027
        %vm2060 = vmand %vm2044, %vm2028
        %vm2061 = vmand %vm2045, %vm2029
        %vm2062 = vmand %vm2046, %vm2030
        %vm2063 = vmand %vm2047, %vm2031
        %vm2064 = vmand %vm2048, %vm2032
        %vm2065 = vmand %vm2049, %vm2033
        %v2066 = vadd.s32 %v1912, 16
        %v2067 = vadd.s32 %v1919, 16
        %v2068 = vadd.s32 %v1926, 16
        %v2069 = vadd.s32 %v1933, 16
        %v2070 = vadd.s32 %v1940, 16
        %v2071 = vadd.s32 %v1947, 16
        %v2072 = vadd.s32 %v1954, 16
        %v2073 = vadd.s32 %v1961, 16
        %v2074 = vadd.s32 %v1968, 16
        %v2075 = vadd.s32 %v1975, 16
        %v2076 = vadd.s32 %v1982, 16
        %v2077 = vadd.s32 %v1989, 16
        %v2078 = vadd.s32 %v1996, 16
        %v2079 = vadd.s32 %v2003, 16
        %v2080 = vadd.s32 %v2010, 16
        %v2081 = vadd.s32 %v2017, 16
        %v2082 = vsel %vm2050, %v2066, %v1912
        %v2083 = vsel %vm2051, %v2067, %v1919
        %v2084 = vsel %vm2052, %v2068, %v1926
        %v2085 = vsel %vm2053, %v2069, %v1933
        %v2086 = vsel %vm2054, %v2070, %v1940
        %v2087 = vsel %vm2055, %v2071, %v1947
        %v2088 = vsel %vm2056, %v2072, %v1954
        %v2089 = vsel %vm2057, %v2073, %v1961
        %v2090 = vsel %vm2058, %v2074, %v1968
        %v2091 = vsel %vm2059, %v2075, %v1975
        %v2092 = vsel %vm2060, %v2076, %v1982
        %v2093 = vsel %vm2061, %v2077, %v1989
        %v2094 = vsel %vm2062, %v2078, %v1996
        %v2095 = vsel %vm2063, %v2079, %v2003
        %v2096 = vsel %vm2064, %v2080, %v2010
        %v2097 = vsel %vm2065, %v2081, %v2017
        %v2098 = vadd.s32 %v2082, 4294967294
        %v2099 = vadd.s32 %v2083, 4294967294
        %v2100 = vadd.s32 %v2084, 4294967294
        %v2101 = vadd.s32 %v2085, 4294967294
        %v2102 = vadd.s32 %v2086, 4294967294
        %v2103 = vadd.s32 %v2087, 4294967294
        %v2104 = vadd.s32 %v2088, 4294967294
        %v2105 = vadd.s32 %v2089, 4294967294
        %v2106 = vadd.s32 %v2090, 4294967294
        %v2107 = vadd.s32 %v2091, 4294967294
        %v2108 = vadd.s32 %v2092, 4294967294
        %v2109 = vadd.s32 %v2093, 4294967294
        %v2110 = vadd.s32 %v2094, 4294967294
        %v2111 = vadd.s32 %v2095, 4294967294
        %v2112 = vadd.s32 %v2096, 4294967294
        %v2113 = vadd.s32 %v2097, 4294967294
        %vm2114 = vcmp.ge.s32.totalorder %v2098, 0
        %vm2115 = vcmp.ge.s32.totalorder %v2099, 0
        %vm2116 = vcmp.ge.s32.totalorder %v2100, 0
        %vm2117 = vcmp.ge.s32.totalorder %v2101, 0
        %vm2118 = vcmp.ge.s32.totalorder %v2102, 0
        %vm2119 = vcmp.ge.s32.totalorder %v2103, 0
        %vm2120 = vcmp.ge.s32.totalorder %v2104, 0
        %vm2121 = vcmp.ge.s32.totalorder %v2105, 0
        %vm2122 = vcmp.ge.s32.totalorder %v2106, 0
        %vm2123 = vcmp.ge.s32.totalorder %v2107, 0
        %vm2124 = vcmp.ge.s32.totalorder %v2108, 0
        %vm2125 = vcmp.ge.s32.totalorder %v2109, 0
        %vm2126 = vcmp.ge.s32.totalorder %v2110, 0
        %vm2127 = vcmp.ge.s32.totalorder %v2111, 0
        %vm2128 = vcmp.ge.s32.totalorder %v2112, 0
        %vm2129 = vcmp.ge.s32.totalorder %v2113, 0
        %vm2130 = vcmp.lt.s32.totalorder %v2098, 16
        %vm2131 = vcmp.lt.s32.totalorder %v2099, 16
        %vm2132 = vcmp.lt.s32.totalorder %v2100, 16
        %vm2133 = vcmp.lt.s32.totalorder %v2101, 16
        %vm2134 = vcmp.lt.s32.totalorder %v2102, 16
        %vm2135 = vcmp.lt.s32.totalorder %v2103, 16
        %vm2136 = vcmp.lt.s32.totalorder %v2104, 16
        %vm2137 = vcmp.lt.s32.totalorder %v2105, 16
        %vm2138 = vcmp.lt.s32.totalorder %v2106, 16
        %vm2139 = vcmp.lt.s32.totalorder %v2107, 16
        %vm2140 = vcmp.lt.s32.totalorder %v2108, 16
        %vm2141 = vcmp.lt.s32.totalorder %v2109, 16
        %vm2142 = vcmp.lt.s32.totalorder %v2110, 16
        %vm2143 = vcmp.lt.s32.totalorder %v2111, 16
        %vm2144 = vcmp.lt.s32.totalorder %v2112, 16
        %vm2145 = vcmp.lt.s32.totalorder %v2113, 16
        %vm2146 = vmand %vm2114, %vm2130
        %vm2147 = vmand %vm2115, %vm2131
        %vm2148 = vmand %vm2116, %vm2132
        %vm2149 = vmand %vm2117, %vm2133
        %vm2150 = vmand %vm2118, %vm2134
        %vm2151 = vmand %vm2119, %vm2135
        %vm2152 = vmand %vm2120, %vm2136
        %vm2153 = vmand %vm2121, %vm2137
        %vm2154 = vmand %vm2122, %vm2138
        %vm2155 = vmand %vm2123, %vm2139
        %vm2156 = vmand %vm2124, %vm2140
        %vm2157 = vmand %vm2125, %vm2141
        %vm2158 = vmand %vm2126, %vm2142
        %vm2159 = vmand %vm2127, %vm2143
        %vm2160 = vmand %vm2128, %vm2144
        %vm2161 = vmand %vm2129, %vm2145
        %v2162 = vadd.s32 %v2082, 4294967295
        %v2163 = vadd.s32 %v2083, 4294967295
        %v2164 = vadd.s32 %v2084, 4294967295
        %v2165 = vadd.s32 %v2085, 4294967295
        %v2166 = vadd.s32 %v2086, 4294967295
        %v2167 = vadd.s32 %v2087, 4294967295
        %v2168 = vadd.s32 %v2088, 4294967295
        %v2169 = vadd.s32 %v2089, 4294967295
        %v2170 = vadd.s32 %v2090, 4294967295
        %v2171 = vadd.s32 %v2091, 4294967295
        %v2172 = vadd.s32 %v2092, 4294967295
        %v2173 = vadd.s32 %v2093, 4294967295
        %v2174 = vadd.s32 %v2094, 4294967295
        %v2175 = vadd.s32 %v2095, 4294967295
        %v2176 = vadd.s32 %v2096, 4294967295
        %v2177 = vadd.s32 %v2097, 4294967295
        %vm2178 = vcmp.ge.s32.totalorder %v2162, 0
        %vm2179 = vcmp.ge.s32.totalorder %v2163, 0
        %vm2180 = vcmp.ge.s32.totalorder %v2164, 0
        %vm2181 = vcmp.ge.s32.totalorder %v2165, 0
        %vm2182 = vcmp.ge.s32.totalorder %v2166, 0
        %vm2183 = vcmp.ge.s32.totalorder %v2167, 0
        %vm2184 = vcmp.ge.s32.totalorder %v2168, 0
        %vm2185 = vcmp.ge.s32.totalorder %v2169, 0
        %vm2186 = vcmp.ge.s32.totalorder %v2170, 0
        %vm2187 = vcmp.ge.s32.totalorder %v2171, 0
        %vm2188 = vcmp.ge.s32.totalorder %v2172, 0
        %vm2189 = vcmp.ge.s32.totalorder %v2173, 0
        %vm2190 = vcmp.ge.s32.totalorder %v2174, 0
        %vm2191 = vcmp.ge.s32.totalorder %v2175, 0
        %vm2192 = vcmp.ge.s32.totalorder %v2176, 0
        %vm2193 = vcmp.ge.s32.totalorder %v2177, 0
        %vm2194 = vcmp.lt.s32.totalorder %v2162, 16
        %vm2195 = vcmp.lt.s32.totalorder %v2163, 16
        %vm2196 = vcmp.lt.s32.totalorder %v2164, 16
        %vm2197 = vcmp.lt.s32.totalorder %v2165, 16
        %vm2198 = vcmp.lt.s32.totalorder %v2166, 16
        %vm2199 = vcmp.lt.s32.totalorder %v2167, 16
        %vm2200 = vcmp.lt.s32.totalorder %v2168, 16
        %vm2201 = vcmp.lt.s32.totalorder %v2169, 16
        %vm2202 = vcmp.lt.s32.totalorder %v2170, 16
        %vm2203 = vcmp.lt.s32.totalorder %v2171, 16
        %vm2204 = vcmp.lt.s32.totalorder %v2172, 16
        %vm2205 = vcmp.lt.s32.totalorder %v2173, 16
        %vm2206 = vcmp.lt.s32.totalorder %v2174, 16
        %vm2207 = vcmp.lt.s32.totalorder %v2175, 16
        %vm2208 = vcmp.lt.s32.totalorder %v2176, 16
        %vm2209 = vcmp.lt.s32.totalorder %v2177, 16
        %vm2210 = vmand %vm2178, %vm2194
        %vm2211 = vmand %vm2179, %vm2195
        %vm2212 = vmand %vm2180, %vm2196
        %vm2213 = vmand %vm2181, %vm2197
        %vm2214 = vmand %vm2182, %vm2198
        %vm2215 = vmand %vm2183, %vm2199
        %vm2216 = vmand %vm2184, %vm2200
        %vm2217 = vmand %vm2185, %vm2201
        %vm2218 = vmand %vm2186, %vm2202
        %vm2219 = vmand %vm2187, %vm2203
        %vm2220 = vmand %vm2188, %vm2204
        %vm2221 = vmand %vm2189, %vm2205
        %vm2222 = vmand %vm2190, %vm2206
        %vm2223 = vmand %vm2191, %vm2207
        %vm2224 = vmand %vm2192, %vm2208
        %vm2225 = vmand %vm2193, %vm2209
        %v2226 = vadd.s32 %v2082, 1
        %v2227 = vadd.s32 %v2083, 1
        %v2228 = vadd.s32 %v2084, 1
        %v2229 = vadd.s32 %v2085, 1
        %v2230 = vadd.s32 %v2086, 1
        %v2231 = vadd.s32 %v2087, 1
        %v2232 = vadd.s32 %v2088, 1
        %v2233 = vadd.s32 %v2089, 1
        %v2234 = vadd.s32 %v2090, 1
        %v2235 = vadd.s32 %v2091, 1
        %v2236 = vadd.s32 %v2092, 1
        %v2237 = vadd.s32 %v2093, 1
        %v2238 = vadd.s32 %v2094, 1
        %v2239 = vadd.s32 %v2095, 1
        %v2240 = vadd.s32 %v2096, 1
        %v2241 = vadd.s32 %v2097, 1
        %vm2242 = vcmp.ge.s32.totalorder %v2226, 0
        %vm2243 = vcmp.ge.s32.totalorder %v2227, 0
        %vm2244 = vcmp.ge.s32.totalorder %v2228, 0
        %vm2245 = vcmp.ge.s32.totalorder %v2229, 0
        %vm2246 = vcmp.ge.s32.totalorder %v2230, 0
        %vm2247 = vcmp.ge.s32.totalorder %v2231, 0
        %vm2248 = vcmp.ge.s32.totalorder %v2232, 0
        %vm2249 = vcmp.ge.s32.totalorder %v2233, 0
        %vm2250 = vcmp.ge.s32.totalorder %v2234, 0
        %vm2251 = vcmp.ge.s32.totalorder %v2235, 0
        %vm2252 = vcmp.ge.s32.totalorder %v2236, 0
        %vm2253 = vcmp.ge.s32.totalorder %v2237, 0
        %vm2254 = vcmp.ge.s32.totalorder %v2238, 0
        %vm2255 = vcmp.ge.s32.totalorder %v2239, 0
        %vm2256 = vcmp.ge.s32.totalorder %v2240, 0
        %vm2257 = vcmp.ge.s32.totalorder %v2241, 0
        %vm2258 = vcmp.lt.s32.totalorder %v2226, 16
        %vm2259 = vcmp.lt.s32.totalorder %v2227, 16
        %vm2260 = vcmp.lt.s32.totalorder %v2228, 16
        %vm2261 = vcmp.lt.s32.totalorder %v2229, 16
        %vm2262 = vcmp.lt.s32.totalorder %v2230, 16
        %vm2263 = vcmp.lt.s32.totalorder %v2231, 16
        %vm2264 = vcmp.lt.s32.totalorder %v2232, 16
        %vm2265 = vcmp.lt.s32.totalorder %v2233, 16
        %vm2266 = vcmp.lt.s32.totalorder %v2234, 16
        %vm2267 = vcmp.lt.s32.totalorder %v2235, 16
        %vm2268 = vcmp.lt.s32.totalorder %v2236, 16
        %vm2269 = vcmp.lt.s32.totalorder %v2237, 16
        %vm2270 = vcmp.lt.s32.totalorder %v2238, 16
        %vm2271 = vcmp.lt.s32.totalorder %v2239, 16
        %vm2272 = vcmp.lt.s32.totalorder %v2240, 16
        %vm2273 = vcmp.lt.s32.totalorder %v2241, 16
        %vm2274 = vmand %vm2242, %vm2258
        %vm2275 = vmand %vm2243, %vm2259
        %vm2276 = vmand %vm2244, %vm2260
        %vm2277 = vmand %vm2245, %vm2261
        %vm2278 = vmand %vm2246, %vm2262
        %vm2279 = vmand %vm2247, %vm2263
        %vm2280 = vmand %vm2248, %vm2264
        %vm2281 = vmand %vm2249, %vm2265
        %vm2282 = vmand %vm2250, %vm2266
        %vm2283 = vmand %vm2251, %vm2267
        %vm2284 = vmand %vm2252, %vm2268
        %vm2285 = vmand %vm2253, %vm2269
        %vm2286 = vmand %vm2254, %vm2270
        %vm2287 = vmand %vm2255, %vm2271
        %vm2288 = vmand %vm2256, %vm2272
        %vm2289 = vmand %vm2257, %vm2273
        %v2290 = vadd.s32 %v2082, 2
        %v2291 = vadd.s32 %v2083, 2
        %v2292 = vadd.s32 %v2084, 2
        %v2293 = vadd.s32 %v2085, 2
        %v2294 = vadd.s32 %v2086, 2
        %v2295 = vadd.s32 %v2087, 2
        %v2296 = vadd.s32 %v2088, 2
        %v2297 = vadd.s32 %v2089, 2
        %v2298 = vadd.s32 %v2090, 2
        %v2299 = vadd.s32 %v2091, 2
        %v2300 = vadd.s32 %v2092, 2
        %v2301 = vadd.s32 %v2093, 2
        %v2302 = vadd.s32 %v2094, 2
        %v2303 = vadd.s32 %v2095, 2
        %v2304 = vadd.s32 %v2096, 2
        %v2305 = vadd.s32 %v2097, 2
        %vm2306 = vcmp.ge.s32.totalorder %v2290, 0
        %vm2307 = vcmp.ge.s32.totalorder %v2291, 0
        %vm2308 = vcmp.ge.s32.totalorder %v2292, 0
        %vm2309 = vcmp.ge.s32.totalorder %v2293, 0
        %vm2310 = vcmp.ge.s32.totalorder %v2294, 0
        %vm2311 = vcmp.ge.s32.totalorder %v2295, 0
        %vm2312 = vcmp.ge.s32.totalorder %v2296, 0
        %vm2313 = vcmp.ge.s32.totalorder %v2297, 0
        %vm2314 = vcmp.ge.s32.totalorder %v2298, 0
        %vm2315 = vcmp.ge.s32.totalorder %v2299, 0
        %vm2316 = vcmp.ge.s32.totalorder %v2300, 0
        %vm2317 = vcmp.ge.s32.totalorder %v2301, 0
        %vm2318 = vcmp.ge.s32.totalorder %v2302, 0
        %vm2319 = vcmp.ge.s32.totalorder %v2303, 0
        %vm2320 = vcmp.ge.s32.totalorder %v2304, 0
        %vm2321 = vcmp.ge.s32.totalorder %v2305, 0
        %vm2322 = vcmp.lt.s32.totalorder %v2290, 16
        %vm2323 = vcmp.lt.s32.totalorder %v2291, 16
        %vm2324 = vcmp.lt.s32.totalorder %v2292, 16
        %vm2325 = vcmp.lt.s32.totalorder %v2293, 16
        %vm2326 = vcmp.lt.s32.totalorder %v2294, 16
        %vm2327 = vcmp.lt.s32.totalorder %v2295, 16
        %vm2328 = vcmp.lt.s32.totalorder %v2296, 16
        %vm2329 = vcmp.lt.s32.totalorder %v2297, 16
        %vm2330 = vcmp.lt.s32.totalorder %v2298, 16
        %vm2331 = vcmp.lt.s32.totalorder %v2299, 16
        %vm2332 = vcmp.lt.s32.totalorder %v2300, 16
        %vm2333 = vcmp.lt.s32.totalorder %v2301, 16
        %vm2334 = vcmp.lt.s32.totalorder %v2302, 16
        %vm2335 = vcmp.lt.s32.totalorder %v2303, 16
        %vm2336 = vcmp.lt.s32.totalorder %v2304, 16
        %vm2337 = vcmp.lt.s32.totalorder %v2305, 16
        %vm2338 = vmand %vm2306, %vm2322
        %vm2339 = vmand %vm2307, %vm2323
        %vm2340 = vmand %vm2308, %vm2324
        %vm2341 = vmand %vm2309, %vm2325
        %vm2342 = vmand %vm2310, %vm2326
        %vm2343 = vmand %vm2311, %vm2327
        %vm2344 = vmand %vm2312, %vm2328
        %vm2345 = vmand %vm2313, %vm2329
        %vm2346 = vmand %vm2314, %vm2330
        %vm2347 = vmand %vm2315, %vm2331
        %vm2348 = vmand %vm2316, %vm2332
        %vm2349 = vmand %vm2317, %vm2333
        %vm2350 = vmand %vm2318, %vm2334
        %vm2351 = vmand %vm2319, %vm2335
        %vm2352 = vmand %vm2320, %vm2336
        %vm2353 = vmand %vm2321, %vm2337
        %v2354 = vrot.slane %v1823, 6
        %v2355 = vrot.slane %v1824, 6
        %v2356 = vrot.slane %v1825, 6
        %v2357 = vrot.slane %v1826, 6
        %v2358 = vrot.slane %v1827, 6
        %v2359 = vrot.slane %v1828, 6
        %v2360 = vrot.slane %v1829, 6
        %v2361 = vrot.slane %v1830, 6
        %v2362 = vrot.slane %v1831, 6
        %v2363 = vrot.slane %v1832, 6
        %v2364 = vrot.slane %v1833, 6
        %v2365 = vrot.slane %v1834, 6
        %v2366 = vrot.slane %v1835, 6
        %v2367 = vrot.slane %v1836, 6
        %v2368 = vrot.slane %v1837, 6
        %v2369 = vrot.slane %v1838, 6
        %vm2370 = vcmp.lt.s32.totalorder %v1890, 2
        %v2371 = vsel %vm2370, %v2368, %v2369
        %v2372 = vsel %vm2370, %v2367, %v2368
        %v2373 = vsel %vm2370, %v2366, %v2367
        %v2374 = vsel %vm2370, %v2365, %v2366
        %v2375 = vsel %vm2370, %v2364, %v2365
        %v2376 = vsel %vm2370, %v2363, %v2364
        %v2377 = vsel %vm2370, %v2362, %v2363
        %v2378 = vsel %vm2370, %v2361, %v2362
        %v2379 = vsel %vm2370, %v2360, %v2361
        %v2380 = vsel %vm2370, %v2359, %v2360
        %v2381 = vsel %vm2370, %v2358, %v2359
        %v2382 = vsel %vm2370, %v2357, %v2358
        %v2383 = vsel %vm2370, %v2356, %v2357
        %v2384 = vsel %vm2370, %v2355, %v2356
        %v2385 = vsel %vm2370, %v2354, %v2355
        %v2386 = vsel %vm2370, %v2369, %v2354
        %v2387 = vsel %vm2146, %v2386, 0.0
        %v2388 = vsel %vm2147, %v2385, 0.0
        %v2389 = vsel %vm2148, %v2384, 0.0
        %v2390 = vsel %vm2149, %v2383, 0.0
        %v2391 = vsel %vm2150, %v2382, 0.0
        %v2392 = vsel %vm2151, %v2381, 0.0
        %v2393 = vsel %vm2152, %v2380, 0.0
        %v2394 = vsel %vm2153, %v2379, 0.0
        %v2395 = vsel %vm2154, %v2378, 0.0
        %v2396 = vsel %vm2155, %v2377, 0.0
        %v2397 = vsel %vm2156, %v2376, 0.0
        %v2398 = vsel %vm2157, %v2375, 0.0
        %v2399 = vsel %vm2158, %v2374, 0.0
        %v2400 = vsel %vm2159, %v2373, 0.0
        %v2401 = vsel %vm2160, %v2372, 0.0
        %v2402 = vsel %vm2161, %v2371, 0.0
        %v2403 = vrot.slane %v1823, 7
        %v2404 = vrot.slane %v1824, 7
        %v2405 = vrot.slane %v1825, 7
        %v2406 = vrot.slane %v1826, 7
        %v2407 = vrot.slane %v1827, 7
        %v2408 = vrot.slane %v1828, 7
        %v2409 = vrot.slane %v1829, 7
        %v2410 = vrot.slane %v1830, 7
        %v2411 = vrot.slane %v1831, 7
        %v2412 = vrot.slane %v1832, 7
        %v2413 = vrot.slane %v1833, 7
        %v2414 = vrot.slane %v1834, 7
        %v2415 = vrot.slane %v1835, 7
        %v2416 = vrot.slane %v1836, 7
        %v2417 = vrot.slane %v1837, 7
        %v2418 = vrot.slane %v1838, 7
        %vm2419 = vcmp.lt.s32.totalorder %v1890, 1
        %v2420 = vsel %vm2419, %v2417, %v2418
        %v2421 = vsel %vm2419, %v2416, %v2417
        %v2422 = vsel %vm2419, %v2415, %v2416
        %v2423 = vsel %vm2419, %v2414, %v2415
        %v2424 = vsel %vm2419, %v2413, %v2414
        %v2425 = vsel %vm2419, %v2412, %v2413
        %v2426 = vsel %vm2419, %v2411, %v2412
        %v2427 = vsel %vm2419, %v2410, %v2411
        %v2428 = vsel %vm2419, %v2409, %v2410
        %v2429 = vsel %vm2419, %v2408, %v2409
        %v2430 = vsel %vm2419, %v2407, %v2408
        %v2431 = vsel %vm2419, %v2406, %v2407
        %v2432 = vsel %vm2419, %v2405, %v2406
        %v2433 = vsel %vm2419, %v2404, %v2405
        %v2434 = vsel %vm2419, %v2403, %v2404
        %v2435 = vsel %vm2419, %v2418, %v2403
        %v2436 = vsel %vm2210, %v2435, 0.0
        %v2437 = vsel %vm2211, %v2434, 0.0
        %v2438 = vsel %vm2212, %v2433, 0.0
        %v2439 = vsel %vm2213, %v2432, 0.0
        %v2440 = vsel %vm2214, %v2431, 0.0
        %v2441 = vsel %vm2215, %v2430, 0.0
        %v2442 = vsel %vm2216, %v2429, 0.0
        %v2443 = vsel %vm2217, %v2428, 0.0
        %v2444 = vsel %vm2218, %v2427, 0.0
        %v2445 = vsel %vm2219, %v2426, 0.0
        %v2446 = vsel %vm2220, %v2425, 0.0
        %v2447 = vsel %vm2221, %v2424, 0.0
        %v2448 = vsel %vm2222, %v2423, 0.0
        %v2449 = vsel %vm2223, %v2422, 0.0
        %v2450 = vsel %vm2224, %v2421, 0.0
        %v2451 = vsel %vm2225, %v2420, 0.0
        %v2452 = vrot.slane %v1823, 1
        %v2453 = vrot.slane %v1824, 1
        %v2454 = vrot.slane %v1825, 1
        %v2455 = vrot.slane %v1826, 1
        %v2456 = vrot.slane %v1827, 1
        %v2457 = vrot.slane %v1828, 1
        %v2458 = vrot.slane %v1829, 1
        %v2459 = vrot.slane %v1830, 1
        %v2460 = vrot.slane %v1831, 1
        %v2461 = vrot.slane %v1832, 1
        %v2462 = vrot.slane %v1833, 1
        %v2463 = vrot.slane %v1834, 1
        %v2464 = vrot.slane %v1835, 1
        %v2465 = vrot.slane %v1836, 1
        %v2466 = vrot.slane %v1837, 1
        %v2467 = vrot.slane %v1838, 1
        %vm2468 = vcmp.lt.s32.totalorder %v1890, 7
        %v2469 = vsel %vm2468, %v2466, %v2467
        %v2470 = vsel %vm2468, %v2465, %v2466
        %v2471 = vsel %vm2468, %v2464, %v2465
        %v2472 = vsel %vm2468, %v2463, %v2464
        %v2473 = vsel %vm2468, %v2462, %v2463
        %v2474 = vsel %vm2468, %v2461, %v2462
        %v2475 = vsel %vm2468, %v2460, %v2461
        %v2476 = vsel %vm2468, %v2459, %v2460
        %v2477 = vsel %vm2468, %v2458, %v2459
        %v2478 = vsel %vm2468, %v2457, %v2458
        %v2479 = vsel %vm2468, %v2456, %v2457
        %v2480 = vsel %vm2468, %v2455, %v2456
        %v2481 = vsel %vm2468, %v2454, %v2455
        %v2482 = vsel %vm2468, %v2453, %v2454
        %v2483 = vsel %vm2468, %v2452, %v2453
        %v2484 = vsel %vm2468, %v2467, %v2452
        %v2485 = vsel %vm2274, %v2483, 0.0
        %v2486 = vsel %vm2275, %v2482, 0.0
        %v2487 = vsel %vm2276, %v2481, 0.0
        %v2488 = vsel %vm2277, %v2480, 0.0
        %v2489 = vsel %vm2278, %v2479, 0.0
        %v2490 = vsel %vm2279, %v2478, 0.0
        %v2491 = vsel %vm2280, %v2477, 0.0
        %v2492 = vsel %vm2281, %v2476, 0.0
        %v2493 = vsel %vm2282, %v2475, 0.0
        %v2494 = vsel %vm2283, %v2474, 0.0
        %v2495 = vsel %vm2284, %v2473, 0.0
        %v2496 = vsel %vm2285, %v2472, 0.0
        %v2497 = vsel %vm2286, %v2471, 0.0
        %v2498 = vsel %vm2287, %v2470, 0.0
        %v2499 = vsel %vm2288, %v2469, 0.0
        %v2500 = vsel %vm2289, %v2484, 0.0
        %v2501 = vrot.slane %v1823, 2
        %v2502 = vrot.slane %v1824, 2
        %v2503 = vrot.slane %v1825, 2
        %v2504 = vrot.slane %v1826, 2
        %v2505 = vrot.slane %v1827, 2
        %v2506 = vrot.slane %v1828, 2
        %v2507 = vrot.slane %v1829, 2
        %v2508 = vrot.slane %v1830, 2
        %v2509 = vrot.slane %v1831, 2
        %v2510 = vrot.slane %v1832, 2
        %v2511 = vrot.slane %v1833, 2
        %v2512 = vrot.slane %v1834, 2
        %v2513 = vrot.slane %v1835, 2
        %v2514 = vrot.slane %v1836, 2
        %v2515 = vrot.slane %v1837, 2
        %v2516 = vrot.slane %v1838, 2
        %vm2517 = vcmp.lt.s32.totalorder %v1890, 6
        %v2518 = vsel %vm2517, %v2515, %v2516
        %v2519 = vsel %vm2517, %v2514, %v2515
        %v2520 = vsel %vm2517, %v2513, %v2514
        %v2521 = vsel %vm2517, %v2512, %v2513
        %v2522 = vsel %vm2517, %v2511, %v2512
        %v2523 = vsel %vm2517, %v2510, %v2511
        %v2524 = vsel %vm2517, %v2509, %v2510
        %v2525 = vsel %vm2517, %v2508, %v2509
        %v2526 = vsel %vm2517, %v2507, %v2508
        %v2527 = vsel %vm2517, %v2506, %v2507
        %v2528 = vsel %vm2517, %v2505, %v2506
        %v2529 = vsel %vm2517, %v2504, %v2505
        %v2530 = vsel %vm2517, %v2503, %v2504
        %v2531 = vsel %vm2517, %v2502, %v2503
        %v2532 = vsel %vm2517, %v2501, %v2502
        %v2533 = vsel %vm2517, %v2516, %v2501
        %v2534 = vsel %vm2338, %v2532, 0.0
        %v2535 = vsel %vm2339, %v2531, 0.0
        %v2536 = vsel %vm2340, %v2530, 0.0
        %v2537 = vsel %vm2341, %v2529, 0.0
        %v2538 = vsel %vm2342, %v2528, 0.0
        %v2539 = vsel %vm2343, %v2527, 0.0
        %v2540 = vsel %vm2344, %v2526, 0.0
        %v2541 = vsel %vm2345, %v2525, 0.0
        %v2542 = vsel %vm2346, %v2524, 0.0
        %v2543 = vsel %vm2347, %v2523, 0.0
        %v2544 = vsel %vm2348, %v2522, 0.0
        %v2545 = vsel %vm2349, %v2521, 0.0
        %v2546 = vsel %vm2350, %v2520, 0.0
        %v2547 = vsel %vm2351, %v2519, 0.0
        %v2548 = vsel %vm2352, %v2518, 0.0
        %v2549 = vsel %vm2353, %v2533, 0.0
        %v2550 = vld [vmem:[#allocation8] sm:$0xff]
        %v2551 = vld [vmem:[#allocation8 + $0x8] sm:$0xff]
        %v2552 = vld [vmem:[#allocation8 + $0x10] sm:$0xff]
        %v2553 = vld [vmem:[#allocation8 + $0x18] sm:$0xff]
        %v2554 = vld [vmem:[#allocation8 + $0x20] sm:$0xff]
        %v2555 = vld [vmem:[#allocation8 + $0x28] sm:$0xff]
        %v2556 = vld [vmem:[#allocation8 + $0x30] sm:$0xff]
        %v2557 = vld [vmem:[#allocation8 + $0x38] sm:$0xff]
        %v2558 = vld [vmem:[#allocation8 + $0x40] sm:$0xff]
        %v2559 = vld [vmem:[#allocation8 + $0x48] sm:$0xff]
        %v2560 = vld [vmem:[#allocation8 + $0x50] sm:$0xff]
        %v2561 = vld [vmem:[#allocation8 + $0x58] sm:$0xff]
        %v2562 = vld [vmem:[#allocation8 + $0x60] sm:$0xff]
        %v2563 = vld [vmem:[#allocation8 + $0x68] sm:$0xff]
        %v2564 = vld [vmem:[#allocation8 + $0x70] sm:$0xff]
        %v2565 = vld [vmem:[#allocation8 + $0x78] sm:$0xff]
        %v2566 = vld [vmem:[#allocation8 + $0x80] sm:$0xff]
        %v2567 = vld [vmem:[#allocation8 + $0x88] sm:$0xff]
        %v2568 = vld [vmem:[#allocation8 + $0x90] sm:$0xff]
        %v2569 = vld [vmem:[#allocation8 + $0x98] sm:$0xff]
        %v2570 = vld [vmem:[#allocation8 + $0xa0] sm:$0xff]
        %v2571 = vld [vmem:[#allocation8 + $0xa8] sm:$0xff]
        %v2572 = vld [vmem:[#allocation8 + $0xb0] sm:$0xff]
        %v2573 = vld [vmem:[#allocation8 + $0xb8] sm:$0xff]
        %v2574 = vld [vmem:[#allocation8 + $0xc0] sm:$0xff]
        %v2575 = vld [vmem:[#allocation8 + $0xc8] sm:$0xff]
        %v2576 = vld [vmem:[#allocation8 + $0xd0] sm:$0xff]
        %v2577 = vld [vmem:[#allocation8 + $0xd8] sm:$0xff]
        %v2578 = vld [vmem:[#allocation8 + $0xe0] sm:$0xff]
        %v2579 = vld [vmem:[#allocation8 + $0xe8] sm:$0xff]
        %v2580 = vld [vmem:[#allocation8 + $0xf0] sm:$0xff]
        %v2581 = vld [vmem:[#allocation8 + $0xf8] sm:$0xff]
        %v2582 = vld [vmem:[#allocation8 + $0x100] sm:$0xff]
        %v2583 = vld [vmem:[#allocation8 + $0x108] sm:$0xff]
        %v2584 = vld [vmem:[#allocation8 + $0x110] sm:$0xff]
        %v2585 = vld [vmem:[#allocation8 + $0x118] sm:$0xff]
        %v2586 = vld [vmem:[#allocation8 + $0x120] sm:$0xff]
        %v2587 = vld [vmem:[#allocation8 + $0x128] sm:$0xff]
        %v2588 = vld [vmem:[#allocation8 + $0x130] sm:$0xff]
        %v2589 = vld [vmem:[#allocation8 + $0x138] sm:$0xff]
        %v2590 = vld [vmem:[#allocation8 + $0x140] sm:$0xff]
        %v2591 = vld [vmem:[#allocation8 + $0x148] sm:$0xff]
        %v2592 = vld [vmem:[#allocation8 + $0x150] sm:$0xff]
        %v2593 = vld [vmem:[#allocation8 + $0x158] sm:$0xff]
        %v2594 = vld [vmem:[#allocation8 + $0x160] sm:$0xff]
        %v2595 = vld [vmem:[#allocation8 + $0x168] sm:$0xff]
        %v2596 = vld [vmem:[#allocation8 + $0x170] sm:$0xff]
        %v2597 = vld [vmem:[#allocation8 + $0x178] sm:$0xff]
        %v2598 = vld [vmem:[#allocation8 + $0x180] sm:$0xff]
        %v2599 = vld [vmem:[#allocation8 + $0x188] sm:$0xff]
        %v2600 = vld [vmem:[#allocation8 + $0x190] sm:$0xff]
        %v2601 = vld [vmem:[#allocation8 + $0x198] sm:$0xff]
        %v2602 = vld [vmem:[#allocation8 + $0x1a0] sm:$0xff]
        %v2603 = vld [vmem:[#allocation8 + $0x1a8] sm:$0xff]
        %v2604 = vld [vmem:[#allocation8 + $0x1b0] sm:$0xff]
        %v2605 = vld [vmem:[#allocation8 + $0x1b8] sm:$0xff]
        %v2606 = vld [vmem:[#allocation8 + $0x1c0] sm:$0xff]
        %v2607 = vld [vmem:[#allocation8 + $0x1c8] sm:$0xff]
        %v2608 = vld [vmem:[#allocation8 + $0x1d0] sm:$0xff]
        %v2609 = vld [vmem:[#allocation8 + $0x1d8] sm:$0xff]
        %v2610 = vld [vmem:[#allocation8 + $0x1e0] sm:$0xff]
        %v2611 = vld [vmem:[#allocation8 + $0x1e8] sm:$0xff]
        %v2612 = vld [vmem:[#allocation8 + $0x1f0] sm:$0xff]
        %v2613 = vld [vmem:[#allocation8 + $0x1f8] sm:$0xff]
        %v2614 = vld [vmem:[#allocation8 + $0x200] sm:$0xff]
        %v2615 = vld [vmem:[#allocation8 + $0x208] sm:$0xff]
        %v2616 = vld [vmem:[#allocation8 + $0x210] sm:$0xff]
        %v2617 = vld [vmem:[#allocation8 + $0x218] sm:$0xff]
        %v2618 = vld [vmem:[#allocation8 + $0x220] sm:$0xff]
        %v2619 = vld [vmem:[#allocation8 + $0x228] sm:$0xff]
        %v2620 = vld [vmem:[#allocation8 + $0x230] sm:$0xff]
        %v2621 = vld [vmem:[#allocation8 + $0x238] sm:$0xff]
        %v2622 = vld [vmem:[#allocation8 + $0x240] sm:$0xff]
        %v2623 = vld [vmem:[#allocation8 + $0x248] sm:$0xff]
        %v2624 = vld [vmem:[#allocation8 + $0x250] sm:$0xff]
        %v2625 = vld [vmem:[#allocation8 + $0x258] sm:$0xff]
        %v2626 = vld [vmem:[#allocation8 + $0x260] sm:$0xff]
        %v2627 = vld [vmem:[#allocation8 + $0x268] sm:$0xff]
        %v2628 = vld [vmem:[#allocation8 + $0x270] sm:$0xff]
        %v2629 = vld [vmem:[#allocation8 + $0x278] sm:$0xff]
        %v2630 = vld [vmem:[#allocation10] sm:$0x1]
        %v2631 = vperm.slane %v2630, 0
        %2632 = vmatpush.msra.mxu0 %v2565
        %2633 = vmatpush.msra.mxu0 %v2564
        %2634 = vmatpush.msra.mxu0 %v2563
        %2635 = vmatpush.msra.mxu0 %v2562
        %2636 = vmatpush.msra.mxu0 %v2561
        %2637 = vmatpush.msra.mxu0 %v2560
        %2638 = vmatpush.msra.mxu0 %v2559
        %2639 = vmatpush.msra.mxu0 %v2558
        %2640 = vmatpush.msra.mxu0 %v2557
        %2641 = vmatpush.msra.mxu0 %v2556
        %2642 = vmatpush.msra.mxu0 %v2555
        %2643 = vmatpush.msra.mxu0 %v2554
        %2644 = vmatpush.msra.mxu0 %v2553
        %2645 = vmatpush.msra.mxu0 %v2552
        %2646 = vmatpush.msra.mxu0 %v2551
        %2647 = vmatpush.msra.mxu0 %v2550
        %2648 = vmatmul.f32.gmra.mxu0 %v2387
        %v2649 = vpop.f32.mrf.mxu0
        %v2650 = vadd.f32 %v2631, %v2649
        %2651 = vmatmul.f32.gmra.mxu0 %v2388
        %v2652 = vpop.f32.mrf.mxu0
        %v2653 = vadd.f32 %v2631, %v2652
        %2654 = vmatmul.f32.gmra.mxu0 %v2389
        %v2655 = vpop.f32.mrf.mxu0
        %v2656 = vadd.f32 %v2631, %v2655
        %2657 = vmatmul.f32.gmra.mxu0 %v2390
        %v2658 = vpop.f32.mrf.mxu0
        %v2659 = vadd.f32 %v2631, %v2658
        %2660 = vmatmul.f32.gmra.mxu0 %v2391
        %v2661 = vpop.f32.mrf.mxu0
        %v2662 = vadd.f32 %v2631, %v2661
        %2663 = vmatmul.f32.gmra.mxu0 %v2392
        %v2664 = vpop.f32.mrf.mxu0
        %v2665 = vadd.f32 %v2631, %v2664
        %2666 = vmatmul.f32.gmra.mxu0 %v2393
        %v2667 = vpop.f32.mrf.mxu0
        %v2668 = vadd.f32 %v2631, %v2667
        %2669 = vmatmul.f32.gmra.mxu0 %v2394
        %v2670 = vpop.f32.mrf.mxu0
        %v2671 = vadd.f32 %v2631, %v2670
        %2672 = vmatmul.f32.gmra.mxu0 %v2395
        %v2673 = vpop.f32.mrf.mxu0
        %v2674 = vadd.f32 %v2631, %v2673
        %2675 = vmatmul.f32.gmra.mxu0 %v2396
        %v2676 = vpop.f32.mrf.mxu0
        %v2677 = vadd.f32 %v2631, %v2676
        %2678 = vmatmul.f32.gmra.mxu0 %v2397
        %v2679 = vpop.f32.mrf.mxu0
        %v2680 = vadd.f32 %v2631, %v2679
        %2681 = vmatmul.f32.gmra.mxu0 %v2398
        %v2682 = vpop.f32.mrf.mxu0
        %v2683 = vadd.f32 %v2631, %v2682
        %2684 = vmatmul.f32.gmra.mxu0 %v2399
        %v2685 = vpop.f32.mrf.mxu0
        %v2686 = vadd.f32 %v2631, %v2685
        %2687 = vmatmul.f32.gmra.mxu0 %v2400
        %v2688 = vpop.f32.mrf.mxu0
        %v2689 = vadd.f32 %v2631, %v2688
        %2690 = vmatmul.f32.gmra.mxu0 %v2401
        %v2691 = vpop.f32.mrf.mxu0
        %v2692 = vadd.f32 %v2631, %v2691
        %2693 = vmatmul.f32.gmra.mxu0 %v2402
        %v2694 = vpop.f32.mrf.mxu0
        %v2695 = vadd.f32 %v2631, %v2694
        %2696 = vdwg.mxu0
        %2697 = vmatpush.msra.mxu0 %v2581
        %2698 = vmatpush.msra.mxu0 %v2580
        %2699 = vmatpush.msra.mxu0 %v2579
        %2700 = vmatpush.msra.mxu0 %v2578
        %2701 = vmatpush.msra.mxu0 %v2577
        %2702 = vmatpush.msra.mxu0 %v2576
        %2703 = vmatpush.msra.mxu0 %v2575
        %2704 = vmatpush.msra.mxu0 %v2574
        %2705 = vmatpush.msra.mxu0 %v2573
        %2706 = vmatpush.msra.mxu0 %v2572
        %2707 = vmatpush.msra.mxu0 %v2571
        %2708 = vmatpush.msra.mxu0 %v2570
        %2709 = vmatpush.msra.mxu0 %v2569
        %2710 = vmatpush.msra.mxu0 %v2568
        %2711 = vmatpush.msra.mxu0 %v2567
        %2712 = vmatpush.msra.mxu0 %v2566
        %2713 = vmatmul.f32.gmra.mxu0 %v2436
        %v2714 = vpop.f32.mrf.mxu0
        %v2715 = vadd.f32 %v2650, %v2714
        %2716 = vmatmul.f32.gmra.mxu0 %v2437
        %v2717 = vpop.f32.mrf.mxu0
        %v2718 = vadd.f32 %v2653, %v2717
        %2719 = vmatmul.f32.gmra.mxu0 %v2438
        %v2720 = vpop.f32.mrf.mxu0
        %v2721 = vadd.f32 %v2656, %v2720
        %2722 = vmatmul.f32.gmra.mxu0 %v2439
        %v2723 = vpop.f32.mrf.mxu0
        %v2724 = vadd.f32 %v2659, %v2723
        %2725 = vmatmul.f32.gmra.mxu0 %v2440
        %v2726 = vpop.f32.mrf.mxu0
        %v2727 = vadd.f32 %v2662, %v2726
        %2728 = vmatmul.f32.gmra.mxu0 %v2441
        %v2729 = vpop.f32.mrf.mxu0
        %v2730 = vadd.f32 %v2665, %v2729
        %2731 = vmatmul.f32.gmra.mxu0 %v2442
        %v2732 = vpop.f32.mrf.mxu0
        %v2733 = vadd.f32 %v2668, %v2732
        %2734 = vmatmul.f32.gmra.mxu0 %v2443
        %v2735 = vpop.f32.mrf.mxu0
        %v2736 = vadd.f32 %v2671, %v2735
        %2737 = vmatmul.f32.gmra.mxu0 %v2444
        %v2738 = vpop.f32.mrf.mxu0
        %v2739 = vadd.f32 %v2674, %v2738
        %2740 = vmatmul.f32.gmra.mxu0 %v2445
        %v2741 = vpop.f32.mrf.mxu0
        %v2742 = vadd.f32 %v2677, %v2741
        %2743 = vmatmul.f32.gmra.mxu0 %v2446
        %v2744 = vpop.f32.mrf.mxu0
        %v2745 = vadd.f32 %v2680, %v2744
        %2746 = vmatmul.f32.gmra.mxu0 %v2447
        %v2747 = vpop.f32.mrf.mxu0
        %v2748 = vadd.f32 %v2683, %v2747
        %2749 = vmatmul.f32.gmra.mxu0 %v2448
        %v2750 = vpop.f32.mrf.mxu0
        %v2751 = vadd.f32 %v2686, %v2750
        %2752 = vmatmul.f32.gmra.mxu0 %v2449
        %v2753 = vpop.f32.mrf.mxu0
        %v2754 = vadd.f32 %v2689, %v2753
        %2755 = vmatmul.f32.gmra.mxu0 %v2450
        %v2756 = vpop.f32.mrf.mxu0
        %v2757 = vadd.f32 %v2692, %v2756
        %2758 = vmatmul.f32.gmra.mxu0 %v2451
        %v2759 = vpop.f32.mrf.mxu0
        %v2760 = vadd.f32 %v2695, %v2759
        %2761 = vdwg.mxu0
        %2762 = vmatpush.msra.mxu0 %v2597
        %2763 = vmatpush.msra.mxu0 %v2596
        %2764 = vmatpush.msra.mxu0 %v2595
        %2765 = vmatpush.msra.mxu0 %v2594
        %2766 = vmatpush.msra.mxu0 %v2593
        %2767 = vmatpush.msra.mxu0 %v2592
        %2768 = vmatpush.msra.mxu0 %v2591
        %2769 = vmatpush.msra.mxu0 %v2590
        %2770 = vmatpush.msra.mxu0 %v2589
        %2771 = vmatpush.msra.mxu0 %v2588
        %2772 = vmatpush.msra.mxu0 %v2587
        %2773 = vmatpush.msra.mxu0 %v2586
        %2774 = vmatpush.msra.mxu0 %v2585
        %2775 = vmatpush.msra.mxu0 %v2584
        %2776 = vmatpush.msra.mxu0 %v2583
        %2777 = vmatpush.msra.mxu0 %v2582
        %2778 = vmatmul.f32.gmra.mxu0 %v1823
        %v2779 = vpop.f32.mrf.mxu0
        %v2780 = vadd.f32 %v2715, %v2779
        %2781 = vmatmul.f32.gmra.mxu0 %v1824
        %v2782 = vpop.f32.mrf.mxu0
        %v2783 = vadd.f32 %v2718, %v2782
        %2784 = vmatmul.f32.gmra.mxu0 %v1825
        %v2785 = vpop.f32.mrf.mxu0
        %v2786 = vadd.f32 %v2721, %v2785
        %2787 = vmatmul.f32.gmra.mxu0 %v1826
        %v2788 = vpop.f32.mrf.mxu0
        %v2789 = vadd.f32 %v2724, %v2788
        %2790 = vmatmul.f32.gmra.mxu0 %v1827
        %v2791 = vpop.f32.mrf.mxu0
        %v2792 = vadd.f32 %v2727, %v2791
        %2793 = vmatmul.f32.gmra.mxu0 %v1828
        %v2794 = vpop.f32.mrf.mxu0
        %v2795 = vadd.f32 %v2730, %v2794
        %2796 = vmatmul.f32.gmra.mxu0 %v1829
        %v2797 = vpop.f32.mrf.mxu0
        %v2798 = vadd.f32 %v2733, %v2797
        %2799 = vmatmul.f32.gmra.mxu0 %v1830
        %v2800 = vpop.f32.mrf.mxu0
        %v2801 = vadd.f32 %v2736, %v2800
        %2802 = vmatmul.f32.gmra.mxu0 %v1831
        %v2803 = vpop.f32.mrf.mxu0
        %v2804 = vadd.f32 %v2739, %v2803
        %2805 = vmatmul.f32.gmra.mxu0 %v1832
        %v2806 = vpop.f32.mrf.mxu0
        %v2807 = vadd.f32 %v2742, %v2806
        %2808 = vmatmul.f32.gmra.mxu0 %v1833
        %v2809 = vpop.f32.mrf.mxu0
        %v2810 = vadd.f32 %v2745, %v2809
        %2811 = vmatmul.f32.gmra.mxu0 %v1834
        %v2812 = vpop.f32.mrf.mxu0
        %v2813 = vadd.f32 %v2748, %v2812
        %2814 = vmatmul.f32.gmra.mxu0 %v1835
        %v2815 = vpop.f32.mrf.mxu0
        %v2816 = vadd.f32 %v2751, %v2815
        %2817 = vmatmul.f32.gmra.mxu0 %v1836
        %v2818 = vpop.f32.mrf.mxu0
        %v2819 = vadd.f32 %v2754, %v2818
        %2820 = vmatmul.f32.gmra.mxu0 %v1837
        %v2821 = vpop.f32.mrf.mxu0
        %v2822 = vadd.f32 %v2757, %v2821
        %2823 = vmatmul.f32.gmra.mxu0 %v1838
        %v2824 = vpop.f32.mrf.mxu0
        %v2825 = vadd.f32 %v2760, %v2824
        %2826 = vdwg.mxu0
        %2827 = vmatpush.msra.mxu0 %v2613
        %2828 = vmatpush.msra.mxu0 %v2612
        %2829 = vmatpush.msra.mxu0 %v2611
        %2830 = vmatpush.msra.mxu0 %v2610
        %2831 = vmatpush.msra.mxu0 %v2609
        %2832 = vmatpush.msra.mxu0 %v2608
        %2833 = vmatpush.msra.mxu0 %v2607
        %2834 = vmatpush.msra.mxu0 %v2606
        %2835 = vmatpush.msra.mxu0 %v2605
        %2836 = vmatpush.msra.mxu0 %v2604
        %2837 = vmatpush.msra.mxu0 %v2603
        %2838 = vmatpush.msra.mxu0 %v2602
        %2839 = vmatpush.msra.mxu0 %v2601
        %2840 = vmatpush.msra.mxu0 %v2600
        %2841 = vmatpush.msra.mxu0 %v2599
        %2842 = vmatpush.msra.mxu0 %v2598
        %2843 = vmatmul.f32.gmra.mxu0 %v2485
        %v2844 = vpop.f32.mrf.mxu0
        %v2845 = vadd.f32 %v2780, %v2844
        %2846 = vmatmul.f32.gmra.mxu0 %v2486
        %v2847 = vpop.f32.mrf.mxu0
        %v2848 = vadd.f32 %v2783, %v2847
        %2849 = vmatmul.f32.gmra.mxu0 %v2487
        %v2850 = vpop.f32.mrf.mxu0
        %v2851 = vadd.f32 %v2786, %v2850
        %2852 = vmatmul.f32.gmra.mxu0 %v2488
        %v2853 = vpop.f32.mrf.mxu0
        %v2854 = vadd.f32 %v2789, %v2853
        %2855 = vmatmul.f32.gmra.mxu0 %v2489
        %v2856 = vpop.f32.mrf.mxu0
        %v2857 = vadd.f32 %v2792, %v2856
        %2858 = vmatmul.f32.gmra.mxu0 %v2490
        %v2859 = vpop.f32.mrf.mxu0
        %v2860 = vadd.f32 %v2795, %v2859
        %2861 = vmatmul.f32.gmra.mxu0 %v2491
        %v2862 = vpop.f32.mrf.mxu0
        %v2863 = vadd.f32 %v2798, %v2862
        %2864 = vmatmul.f32.gmra.mxu0 %v2492
        %v2865 = vpop.f32.mrf.mxu0
        %v2866 = vadd.f32 %v2801, %v2865
        %2867 = vmatmul.f32.gmra.mxu0 %v2493
        %v2868 = vpop.f32.mrf.mxu0
        %v2869 = vadd.f32 %v2804, %v2868
        %2870 = vmatmul.f32.gmra.mxu0 %v2494
        %v2871 = vpop.f32.mrf.mxu0
        %v2872 = vadd.f32 %v2807, %v2871
        %2873 = vmatmul.f32.gmra.mxu0 %v2495
        %v2874 = vpop.f32.mrf.mxu0
        %v2875 = vadd.f32 %v2810, %v2874
        %2876 = vmatmul.f32.gmra.mxu0 %v2496
        %v2877 = vpop.f32.mrf.mxu0
        %v2878 = vadd.f32 %v2813, %v2877
        %2879 = vmatmul.f32.gmra.mxu0 %v2497
        %v2880 = vpop.f32.mrf.mxu0
        %v2881 = vadd.f32 %v2816, %v2880
        %2882 = vmatmul.f32.gmra.mxu0 %v2498
        %v2883 = vpop.f32.mrf.mxu0
        %v2884 = vadd.f32 %v2819, %v2883
        %2885 = vmatmul.f32.gmra.mxu0 %v2499
        %v2886 = vpop.f32.mrf.mxu0
        %v2887 = vadd.f32 %v2822, %v2886
        %2888 = vmatmul.f32.gmra.mxu0 %v2500
        %v2889 = vpop.f32.mrf.mxu0
        %v2890 = vadd.f32 %v2825, %v2889
        %2891 = vdwg.mxu0
        %2892 = vmatpush.msra.mxu0 %v2629
        %2893 = vmatpush.msra.mxu0 %v2628
        %2894 = vmatpush.msra.mxu0 %v2627
        %2895 = vmatpush.msra.mxu0 %v2626
        %2896 = vmatpush.msra.mxu0 %v2625
        %2897 = vmatpush.msra.mxu0 %v2624
        %2898 = vmatpush.msra.mxu0 %v2623
        %2899 = vmatpush.msra.mxu0 %v2622
        %2900 = vmatpush.msra.mxu0 %v2621
        %2901 = vmatpush.msra.mxu0 %v2620
        %2902 = vmatpush.msra.mxu0 %v2619
        %2903 = vmatpush.msra.mxu0 %v2618
        %2904 = vmatpush.msra.mxu0 %v2617
        %2905 = vmatpush.msra.mxu0 %v2616
        %2906 = vmatpush.msra.mxu0 %v2615
        %2907 = vmatpush.msra.mxu0 %v2614
        %2908 = vmatmul.f32.gmra.mxu0 %v2534
        %v2909 = vpop.f32.mrf.mxu0
        %v2910 = vadd.f32 %v2845, %v2909
        %2911 = vmatmul.f32.gmra.mxu0 %v2535
        %v2912 = vpop.f32.mrf.mxu0
        %v2913 = vadd.f32 %v2848, %v2912
        %2914 = vmatmul.f32.gmra.mxu0 %v2536
        %v2915 = vpop.f32.mrf.mxu0
        %v2916 = vadd.f32 %v2851, %v2915
        %2917 = vmatmul.f32.gmra.mxu0 %v2537
        %v2918 = vpop.f32.mrf.mxu0
        %v2919 = vadd.f32 %v2854, %v2918
        %2920 = vmatmul.f32.gmra.mxu0 %v2538
        %v2921 = vpop.f32.mrf.mxu0
        %v2922 = vadd.f32 %v2857, %v2921
        %2923 = vmatmul.f32.gmra.mxu0 %v2539
        %v2924 = vpop.f32.mrf.mxu0
        %v2925 = vadd.f32 %v2860, %v2924
        %2926 = vmatmul.f32.gmra.mxu0 %v2540
        %v2927 = vpop.f32.mrf.mxu0
        %v2928 = vadd.f32 %v2863, %v2927
        %2929 = vmatmul.f32.gmra.mxu0 %v2541
        %v2930 = vpop.f32.mrf.mxu0
        %v2931 = vadd.f32 %v2866, %v2930
        %2932 = vmatmul.f32.gmra.mxu0 %v2542
        %v2933 = vpop.f32.mrf.mxu0
        %v2934 = vadd.f32 %v2869, %v2933
        %2935 = vmatmul.f32.gmra.mxu0 %v2543
        %v2936 = vpop.f32.mrf.mxu0
        %v2937 = vadd.f32 %v2872, %v2936
        %2938 = vmatmul.f32.gmra.mxu0 %v2544
        %v2939 = vpop.f32.mrf.mxu0
        %v2940 = vadd.f32 %v2875, %v2939
        %2941 = vmatmul.f32.gmra.mxu0 %v2545
        %v2942 = vpop.f32.mrf.mxu0
        %v2943 = vadd.f32 %v2878, %v2942
        %2944 = vmatmul.f32.gmra.mxu0 %v2546
        %v2945 = vpop.f32.mrf.mxu0
        %v2946 = vadd.f32 %v2881, %v2945
        %2947 = vmatmul.f32.gmra.mxu0 %v2547
        %v2948 = vpop.f32.mrf.mxu0
        %v2949 = vadd.f32 %v2884, %v2948
        %2950 = vmatmul.f32.gmra.mxu0 %v2548
        %v2951 = vpop.f32.mrf.mxu0
        %v2952 = vadd.f32 %v2887, %v2951
        %2953 = vmatmul.f32.gmra.mxu0 %v2549
        %v2954 = vpop.f32.mrf.mxu0
        %v2955 = vadd.f32 %v2890, %v2954
        %2956 = vdwg.mxu0
        %v2957 = vmax.f32 %v2910, 0.0
        %v2958 = vmax.f32 %v2913, 0.0
        %v2959 = vmax.f32 %v2916, 0.0
        %v2960 = vmax.f32 %v2919, 0.0
        %v2961 = vmax.f32 %v2922, 0.0
        %v2962 = vmax.f32 %v2925, 0.0
        %v2963 = vmax.f32 %v2928, 0.0
        %v2964 = vmax.f32 %v2931, 0.0
        %v2965 = vmax.f32 %v2934, 0.0
        %v2966 = vmax.f32 %v2937, 0.0
        %v2967 = vmax.f32 %v2940, 0.0
        %v2968 = vmax.f32 %v2943, 0.0
        %v2969 = vmax.f32 %v2946, 0.0
        %v2970 = vmax.f32 %v2949, 0.0
        %v2971 = vmax.f32 %v2952, 0.0
        %v2972 = vmax.f32 %v2955, 0.0
        %v2974 = vperm.slane %v1855, 0
        %2976 = vmatpush.msra.mxu0 %v1854
        %2977 = vmatpush.msra.mxu0 %v1853
        %2978 = vmatpush.msra.mxu0 %v1852
        %2979 = vmatpush.msra.mxu0 %v1851
        %2980 = vmatpush.msra.mxu0 %v1850
        %2981 = vmatpush.msra.mxu0 %v1849
        %2982 = vmatpush.msra.mxu0 %v1848
        %2983 = vmatpush.msra.mxu0 %v1847
        %2984 = vmatpush.msra.mxu0 %v1846
        %2985 = vmatpush.msra.mxu0 %v1845
        %2986 = vmatpush.msra.mxu0 %v1844
        %2987 = vmatpush.msra.mxu0 %v1843
        %2988 = vmatpush.msra.mxu0 %v1842
        %2989 = vmatpush.msra.mxu0 %v1841
        %2990 = vmatpush.msra.mxu0 %v1840
        %2991 = vmatpush.msra.mxu0 %v1839
        %2992 = vmatmul.f32.gmra.mxu0 %v1822
        %v2993 = vpop.f32.mrf.mxu0
        %v2994 = vadd.f32 %v2974, %v2993
        %2995 = vdwg.mxu0
        %v2996 = vmax.f32 %v2994, 0.0
        %2997 = vmatpush.msra.mxu0 %v1854
        %2998 = vmatpush.msra.mxu0 %v1853
        %2999 = vmatpush.msra.mxu0 %v1852
        %3000 = vmatpush.msra.mxu0 %v1851
        %3001 = vmatpush.msra.mxu0 %v1850
        %3002 = vmatpush.msra.mxu0 %v1849
        %3003 = vmatpush.msra.mxu0 %v1848
        %3004 = vmatpush.msra.mxu0 %v1847
        %3005 = vmatpush.msra.mxu0 %v1846
        %3006 = vmatpush.msra.mxu0 %v1845
        %3007 = vmatpush.msra.mxu0 %v1844
        %3008 = vmatpush.msra.mxu0 %v1843
        %3009 = vmatpush.msra.mxu0 %v1842
        %3010 = vmatpush.msra.mxu0 %v1841
        %3011 = vmatpush.msra.mxu0 %v1840
        %3012 = vmatpush.msra.mxu0 %v1839
        %3013 = vmatmul.f32.gmra.mxu0 %v2957
        %v3014 = vpop.f32.mrf.mxu0
        %v3015 = vadd.f32 %v2974, %v3014
        %3016 = vmatmul.f32.gmra.mxu0 %v2958
        %v3017 = vpop.f32.mrf.mxu0
        %v3018 = vadd.f32 %v2974, %v3017
        %3019 = vmatmul.f32.gmra.mxu0 %v2959
        %v3020 = vpop.f32.mrf.mxu0
        %v3021 = vadd.f32 %v2974, %v3020
        %3022 = vmatmul.f32.gmra.mxu0 %v2960
        %v3023 = vpop.f32.mrf.mxu0
        %v3024 = vadd.f32 %v2974, %v3023
        %3025 = vmatmul.f32.gmra.mxu0 %v2961
        %v3026 = vpop.f32.mrf.mxu0
        %v3027 = vadd.f32 %v2974, %v3026
        %3028 = vmatmul.f32.gmra.mxu0 %v2962
        %v3029 = vpop.f32.mrf.mxu0
        %v3030 = vadd.f32 %v2974, %v3029
        %3031 = vmatmul.f32.gmra.mxu0 %v2963
        %v3032 = vpop.f32.mrf.mxu0
        %v3033 = vadd.f32 %v2974, %v3032
        %3034 = vmatmul.f32.gmra.mxu0 %v2964
        %v3035 = vpop.f32.mrf.mxu0
        %v3036 = vadd.f32 %v2974, %v3035
        %3037 = vmatmul.f32.gmra.mxu0 %v2965
        %v3038 = vpop.f32.mrf.mxu0
        %v3039 = vadd.f32 %v2974, %v3038
        %3040 = vmatmul.f32.gmra.mxu0 %v2966
        %v3041 = vpop.f32.mrf.mxu0
        %v3042 = vadd.f32 %v2974, %v3041
        %3043 = vmatmul.f32.gmra.mxu0 %v2967
        %v3044 = vpop.f32.mrf.mxu0
        %v3045 = vadd.f32 %v2974, %v3044
        %3046 = vmatmul.f32.gmra.mxu0 %v2968
        %v3047 = vpop.f32.mrf.mxu0
        %v3048 = vadd.f32 %v2974, %v3047
        %3049 = vmatmul.f32.gmra.mxu0 %v2969
        %v3050 = vpop.f32.mrf.mxu0
        %v3051 = vadd.f32 %v2974, %v3050
        %3052 = vmatmul.f32.gmra.mxu0 %v2970
        %v3053 = vpop.f32.mrf.mxu0
        %v3054 = vadd.f32 %v2974, %v3053
        %3055 = vmatmul.f32.gmra.mxu0 %v2971
        %v3056 = vpop.f32.mrf.mxu0
        %v3057 = vadd.f32 %v2974, %v3056
        %3058 = vmatmul.f32.gmra.mxu0 %v2972
        %v3059 = vpop.f32.mrf.mxu0
        %v3060 = vadd.f32 %v2974, %v3059
        %3061 = vdwg.mxu0
        %v3062 = vmax.f32 %v3015, 0.0
        %v3063 = vmax.f32 %v3018, 0.0
        %v3064 = vmax.f32 %v3021, 0.0
        %v3065 = vmax.f32 %v3024, 0.0
        %v3066 = vmax.f32 %v3027, 0.0
        %v3067 = vmax.f32 %v3030, 0.0
        %v3068 = vmax.f32 %v3033, 0.0
        %v3069 = vmax.f32 %v3036, 0.0
        %v3070 = vmax.f32 %v3039, 0.0
        %v3071 = vmax.f32 %v3042, 0.0
        %v3072 = vmax.f32 %v3045, 0.0
        %v3073 = vmax.f32 %v3048, 0.0
        %v3074 = vmax.f32 %v3051, 0.0
        %v3075 = vmax.f32 %v3054, 0.0
        %v3076 = vmax.f32 %v3057, 0.0
        %v3077 = vmax.f32 %v3060, 0.0
        %vm3078 = vcmask 64512
        %v3080 = vsel %vm3078, %v1856, 0
        %v3083 = vsel %vm3078, %v1857, 0
        %v3086 = vsel %vm3078, %v1858, 0
        %v3089 = vsel %vm3078, %v1859, 0
        %v3092 = vsel %vm3078, %v1860, 0
        %v3095 = vsel %vm3078, %v1861, 0
        %v3098 = vsel %vm3078, %v1862, 0
        %v3101 = vsel %vm3078, %v1863, 0
        %v3104 = vsel %vm3078, %v1864, 0
        %v3107 = vsel %vm3078, %v1865, 0
        %v3110 = vsel %vm3078, %v1866, 0
        %v3113 = vsel %vm3078, %v1867, 0
        %v3116 = vsel %vm3078, %v1868, 0
        %v3119 = vsel %vm3078, %v1869, 0
        %v3122 = vsel %vm3078, %v1870, 0
        %v3125 = vsel %vm3078, %v1871, 0
        %3127 = vmatpush.msra.mxu0 0.0
        %3128 = vmatpush.msra.mxu0 0.0
        %3129 = vmatpush.msra.mxu0 0.0
        %3130 = vmatpush.msra.mxu0 0.0
        %3131 = vmatpush.msra.mxu0 0.0
        %3132 = vmatpush.msra.mxu0 0.0
        %3133 = vmatpush.msra.mxu0 0.0
        %3134 = vmatpush.msra.mxu0 0.0
        %3135 = vmatpush.msra.mxu0 0.0
        %3136 = vmatpush.msra.mxu0 0.0
        %3137 = vmatpush.msra.mxu0 0.0
        %3138 = vmatpush.msra.mxu0 0.0
        %3139 = vmatpush.msra.mxu0 0.0
        %3140 = vmatpush.msra.mxu0 0.0
        %3141 = vmatpush.msra.mxu0 0.0
        %3142 = vmatpush.msra.mxu0 %v2996
        %3143 = vmatmul.f32.gmra.mxu0 %v3080
        %v3144 = vpop.f32.mrf.mxu0
        %v3145 = vadd.f32 0.0, %v3144
        %3146 = vmatmul.f32.gmra.mxu0 %v3083
        %v3147 = vpop.f32.mrf.mxu0
        %v3148 = vadd.f32 0.0, %v3147
        %3149 = vmatmul.f32.gmra.mxu0 %v3086
        %v3150 = vpop.f32.mrf.mxu0
        %v3151 = vadd.f32 0.0, %v3150
        %3152 = vmatmul.f32.gmra.mxu0 %v3089
        %v3153 = vpop.f32.mrf.mxu0
        %v3154 = vadd.f32 0.0, %v3153
        %3155 = vmatmul.f32.gmra.mxu0 %v3092
        %v3156 = vpop.f32.mrf.mxu0
        %v3157 = vadd.f32 0.0, %v3156
        %3158 = vmatmul.f32.gmra.mxu0 %v3095
        %v3159 = vpop.f32.mrf.mxu0
        %v3160 = vadd.f32 0.0, %v3159
        %3161 = vmatmul.f32.gmra.mxu0 %v3098
        %v3162 = vpop.f32.mrf.mxu0
        %v3163 = vadd.f32 0.0, %v3162
        %3164 = vmatmul.f32.gmra.mxu0 %v3101
        %v3165 = vpop.f32.mrf.mxu0
        %v3166 = vadd.f32 0.0, %v3165
        %3167 = vmatmul.f32.gmra.mxu0 %v3104
        %v3168 = vpop.f32.mrf.mxu0
        %v3169 = vadd.f32 0.0, %v3168
        %3170 = vmatmul.f32.gmra.mxu0 %v3107
        %v3171 = vpop.f32.mrf.mxu0
        %v3172 = vadd.f32 0.0, %v3171
        %3173 = vmatmul.f32.gmra.mxu0 %v3110
        %v3174 = vpop.f32.mrf.mxu0
        %v3175 = vadd.f32 0.0, %v3174
        %3176 = vmatmul.f32.gmra.mxu0 %v3113
        %v3177 = vpop.f32.mrf.mxu0
        %v3178 = vadd.f32 0.0, %v3177
        %3179 = vmatmul.f32.gmra.mxu0 %v3116
        %v3180 = vpop.f32.mrf.mxu0
        %v3181 = vadd.f32 0.0, %v3180
        %3182 = vmatmul.f32.gmra.mxu0 %v3119
        %v3183 = vpop.f32.mrf.mxu0
        %v3184 = vadd.f32 0.0, %v3183
        %3185 = vmatmul.f32.gmra.mxu0 %v3122
        %v3186 = vpop.f32.mrf.mxu0
        %v3187 = vadd.f32 0.0, %v3186
        %3188 = vmatmul.f32.gmra.mxu0 %v3125
        %v3189 = vpop.f32.mrf.mxu0
        %v3190 = vadd.f32 0.0, %v3189
        %3191 = vdwg.mxu0
        %v3192 = vmul.f32 %v3062, %v3145
        %v3193 = vmul.f32 %v3063, %v3148
        %v3194 = vmul.f32 %v3064, %v3151
        %v3195 = vmul.f32 %v3065, %v3154
        %v3196 = vmul.f32 %v3066, %v3157
        %v3197 = vmul.f32 %v3067, %v3160
        %v3198 = vmul.f32 %v3068, %v3163
        %v3199 = vmul.f32 %v3069, %v3166
        %v3200 = vmul.f32 %v3070, %v3169
        %v3201 = vmul.f32 %v3071, %v3172
        %v3202 = vmul.f32 %v3072, %v3175
        %v3203 = vmul.f32 %v3073, %v3178
        %v3204 = vmul.f32 %v3074, %v3181
        %v3205 = vmul.f32 %v3075, %v3184
        %v3206 = vmul.f32 %v3076, %v3187
        %v3207 = vmul.f32 %v3077, %v3190
        %3208 = vmatpush.msra.mxu0 %v1888
        %3209 = vmatpush.msra.mxu0 %v1887
        %3210 = vmatpush.msra.mxu0 %v1886
        %3211 = vmatpush.msra.mxu0 %v1885
        %3212 = vmatpush.msra.mxu0 %v1884
        %3213 = vmatpush.msra.mxu0 %v1883
        %3214 = vmatpush.msra.mxu0 %v1882
        %3215 = vmatpush.msra.mxu0 %v1881
        %3216 = vmatpush.msra.mxu0 %v1880
        %3217 = vmatpush.msra.mxu0 %v1879
        %3218 = vmatpush.msra.mxu0 %v1878
        %3219 = vmatpush.msra.mxu0 %v1877
        %3220 = vmatpush.msra.mxu0 %v1876
        %3221 = vmatpush.msra.mxu0 %v1875
        %3222 = vmatpush.msra.mxu0 %v1874
        %3223 = vmatpush.msra.mxu0 %v1873
        %3224 = vmatmul.f32.gmra.mxu0 %v3192
        %v3225 = vpop.f32.mrf.mxu0
        %v3226 = vadd.f32 0.0, %v3225
        %3227 = vmatmul.f32.gmra.mxu0 %v3193
        %v3228 = vpop.f32.mrf.mxu0
        %v3229 = vadd.f32 0.0, %v3228
        %3230 = vmatmul.f32.gmra.mxu0 %v3194
        %v3231 = vpop.f32.mrf.mxu0
        %v3232 = vadd.f32 0.0, %v3231
        %3233 = vmatmul.f32.gmra.mxu0 %v3195
        %v3234 = vpop.f32.mrf.mxu0
        %v3235 = vadd.f32 0.0, %v3234
        %3236 = vmatmul.f32.gmra.mxu0 %v3196
        %v3237 = vpop.f32.mrf.mxu0
        %v3238 = vadd.f32 0.0, %v3237
        %3239 = vmatmul.f32.gmra.mxu0 %v3197
        %v3240 = vpop.f32.mrf.mxu0
        %v3241 = vadd.f32 0.0, %v3240
        %3242 = vmatmul.f32.gmra.mxu0 %v3198
        %v3243 = vpop.f32.mrf.mxu0
        %v3244 = vadd.f32 0.0, %v3243
        %3245 = vmatmul.f32.gmra.mxu0 %v3199
        %v3246 = vpop.f32.mrf.mxu0
        %v3247 = vadd.f32 0.0, %v3246
        %3248 = vmatmul.f32.gmra.mxu0 %v3200
        %v3249 = vpop.f32.mrf.mxu0
        %v3250 = vadd.f32 0.0, %v3249
        %3251 = vmatmul.f32.gmra.mxu0 %v3201
        %v3252 = vpop.f32.mrf.mxu0
        %v3253 = vadd.f32 0.0, %v3252
        %3254 = vmatmul.f32.gmra.mxu0 %v3202
        %v3255 = vpop.f32.mrf.mxu0
        %v3256 = vadd.f32 0.0, %v3255
        %3257 = vmatmul.f32.gmra.mxu0 %v3203
        %v3258 = vpop.f32.mrf.mxu0
        %v3259 = vadd.f32 0.0, %v3258
        %3260 = vmatmul.f32.gmra.mxu0 %v3204
        %v3261 = vpop.f32.mrf.mxu0
        %v3262 = vadd.f32 0.0, %v3261
        %3263 = vmatmul.f32.gmra.mxu0 %v3205
        %v3264 = vpop.f32.mrf.mxu0
        %v3265 = vadd.f32 0.0, %v3264
        %3266 = vmatmul.f32.gmra.mxu0 %v3206
        %v3267 = vpop.f32.mrf.mxu0
        %v3268 = vadd.f32 0.0, %v3267
        %3269 = vmatmul.f32.gmra.mxu0 %v3207
        %v3270 = vpop.f32.mrf.mxu0
        %v3271 = vadd.f32 0.0, %v3270
        %3272 = vdwg.mxu0
        %v3273 = vtanh.pop %v3226
        %v3274 = vtanh.pop %v3229
        %v3275 = vtanh.pop %v3232
        %v3276 = vtanh.pop %v3235
        %v3277 = vtanh.pop %v3238
        %v3278 = vtanh.pop %v3241
        %v3279 = vtanh.pop %v3244
        %v3280 = vtanh.pop %v3247
        %v3281 = vtanh.pop %v3250
        %v3282 = vtanh.pop %v3253
        %v3283 = vtanh.pop %v3256
        %v3284 = vtanh.pop %v3259
        %v3285 = vtanh.pop %v3262
        %v3286 = vtanh.pop %v3265
        %v3287 = vtanh.pop %v3268
        %v3288 = vtanh.pop %v3271
        %v3289 = vmul.f32 %v3273, %v3062
        %v3290 = vmul.f32 %v3274, %v3063
        %v3291 = vmul.f32 %v3275, %v3064
        %v3292 = vmul.f32 %v3276, %v3065
        %v3293 = vmul.f32 %v3277, %v3066
        %v3294 = vmul.f32 %v3278, %v3067
        %v3295 = vmul.f32 %v3279, %v3068
        %v3296 = vmul.f32 %v3280, %v3069
        %v3297 = vmul.f32 %v3281, %v3070
        %v3298 = vmul.f32 %v3282, %v3071
        %v3299 = vmul.f32 %v3283, %v3072
        %v3300 = vmul.f32 %v3284, %v3073
        %v3301 = vmul.f32 %v3285, %v3074
        %v3302 = vmul.f32 %v3286, %v3075
        %v3303 = vmul.f32 %v3287, %v3076
        %v3304 = vmul.f32 %v3288, %v3077
        %v3305 = vrot.slane %v3289, 6
        %v3306 = vrot.slane %v3290, 6
        %v3307 = vrot.slane %v3291, 6
        %v3308 = vrot.slane %v3292, 6
        %v3309 = vrot.slane %v3293, 6
        %v3310 = vrot.slane %v3294, 6
        %v3311 = vrot.slane %v3295, 6
        %v3312 = vrot.slane %v3296, 6
        %v3313 = vrot.slane %v3297, 6
        %v3314 = vrot.slane %v3298, 6
        %v3315 = vrot.slane %v3299, 6
        %v3316 = vrot.slane %v3300, 6
        %v3317 = vrot.slane %v3301, 6
        %v3318 = vrot.slane %v3302, 6
        %v3319 = vrot.slane %v3303, 6
        %v3320 = vrot.slane %v3304, 6
        %v3321 = vsel %vm2370, %v3319, %v3320
        %v3322 = vsel %vm2370, %v3318, %v3319
        %v3323 = vsel %vm2370, %v3317, %v3318
        %v3324 = vsel %vm2370, %v3316, %v3317
        %v3325 = vsel %vm2370, %v3315, %v3316
        %v3326 = vsel %vm2370, %v3314, %v3315
        %v3327 = vsel %vm2370, %v3313, %v3314
        %v3328 = vsel %vm2370, %v3312, %v3313
        %v3329 = vsel %vm2370, %v3311, %v3312
        %v3330 = vsel %vm2370, %v3310, %v3311
        %v3331 = vsel %vm2370, %v3309, %v3310
        %v3332 = vsel %vm2370, %v3308, %v3309
        %v3333 = vsel %vm2370, %v3307, %v3308
        %v3334 = vsel %vm2370, %v3306, %v3307
        %v3335 = vsel %vm2370, %v3305, %v3306
        %v3336 = vsel %vm2370, %v3320, %v3305
        %v3337 = vsel %vm2146, %v3336, 0.0
        %v3338 = vsel %vm2147, %v3335, 0.0
        %v3339 = vsel %vm2148, %v3334, 0.0
        %v3340 = vsel %vm2149, %v3333, 0.0
        %v3341 = vsel %vm2150, %v3332, 0.0
        %v3342 = vsel %vm2151, %v3331, 0.0
        %v3343 = vsel %vm2152, %v3330, 0.0
        %v3344 = vsel %vm2153, %v3329, 0.0
        %v3345 = vsel %vm2154, %v3328, 0.0
        %v3346 = vsel %vm2155, %v3327, 0.0
        %v3347 = vsel %vm2156, %v3326, 0.0
        %v3348 = vsel %vm2157, %v3325, 0.0
        %v3349 = vsel %vm2158, %v3324, 0.0
        %v3350 = vsel %vm2159, %v3323, 0.0
        %v3351 = vsel %vm2160, %v3322, 0.0
        %v3352 = vsel %vm2161, %v3321, 0.0
        %v3353 = vrot.slane %v3289, 7
        %v3354 = vrot.slane %v3290, 7
        %v3355 = vrot.slane %v3291, 7
        %v3356 = vrot.slane %v3292, 7
        %v3357 = vrot.slane %v3293, 7
        %v3358 = vrot.slane %v3294, 7
        %v3359 = vrot.slane %v3295, 7
        %v3360 = vrot.slane %v3296, 7
        %v3361 = vrot.slane %v3297, 7
        %v3362 = vrot.slane %v3298, 7
        %v3363 = vrot.slane %v3299, 7
        %v3364 = vrot.slane %v3300, 7
        %v3365 = vrot.slane %v3301, 7
        %v3366 = vrot.slane %v3302, 7
        %v3367 = vrot.slane %v3303, 7
        %v3368 = vrot.slane %v3304, 7
        %v3369 = vsel %vm2419, %v3367, %v3368
        %v3370 = vsel %vm2419, %v3366, %v3367
        %v3371 = vsel %vm2419, %v3365, %v3366
        %v3372 = vsel %vm2419, %v3364, %v3365
        %v3373 = vsel %vm2419, %v3363, %v3364
        %v3374 = vsel %vm2419, %v3362, %v3363
        %v3375 = vsel %vm2419, %v3361, %v3362
        %v3376 = vsel %vm2419, %v3360, %v3361
        %v3377 = vsel %vm2419, %v3359, %v3360
        %v3378 = vsel %vm2419, %v3358, %v3359
        %v3379 = vsel %vm2419, %v3357, %v3358
        %v3380 = vsel %vm2419, %v3356, %v3357
        %v3381 = vsel %vm2419, %v3355, %v3356
        %v3382 = vsel %vm2419, %v3354, %v3355
        %v3383 = vsel %vm2419, %v3353, %v3354
        %v3384 = vsel %vm2419, %v3368, %v3353
        %v3385 = vsel %vm2210, %v3384, 0.0
        %v3386 = vsel %vm2211, %v3383, 0.0
        %v3387 = vsel %vm2212, %v3382, 0.0
        %v3388 = vsel %vm2213, %v3381, 0.0
        %v3389 = vsel %vm2214, %v3380, 0.0
        %v3390 = vsel %vm2215, %v3379, 0.0
        %v3391 = vsel %vm2216, %v3378, 0.0
        %v3392 = vsel %vm2217, %v3377, 0.0
        %v3393 = vsel %vm2218, %v3376, 0.0
        %v3394 = vsel %vm2219, %v3375, 0.0
        %v3395 = vsel %vm2220, %v3374, 0.0
        %v3396 = vsel %vm2221, %v3373, 0.0
        %v3397 = vsel %vm2222, %v3372, 0.0
        %v3398 = vsel %vm2223, %v3371, 0.0
        %v3399 = vsel %vm2224, %v3370, 0.0
        %v3400 = vsel %vm2225, %v3369, 0.0
        %v3401 = vrot.slane %v3289, 1
        %v3402 = vrot.slane %v3290, 1
        %v3403 = vrot.slane %v3291, 1
        %v3404 = vrot.slane %v3292, 1
        %v3405 = vrot.slane %v3293, 1
        %v3406 = vrot.slane %v3294, 1
        %v3407 = vrot.slane %v3295, 1
        %v3408 = vrot.slane %v3296, 1
        %v3409 = vrot.slane %v3297, 1
        %v3410 = vrot.slane %v3298, 1
        %v3411 = vrot.slane %v3299, 1
        %v3412 = vrot.slane %v3300, 1
        %v3413 = vrot.slane %v3301, 1
        %v3414 = vrot.slane %v3302, 1
        %v3415 = vrot.slane %v3303, 1
        %v3416 = vrot.slane %v3304, 1
        %v3417 = vsel %vm2468, %v3415, %v3416
        %v3418 = vsel %vm2468, %v3414, %v3415
        %v3419 = vsel %vm2468, %v3413, %v3414
        %v3420 = vsel %vm2468, %v3412, %v3413
        %v3421 = vsel %vm2468, %v3411, %v3412
        %v3422 = vsel %vm2468, %v3410, %v3411
        %v3423 = vsel %vm2468, %v3409, %v3410
        %v3424 = vsel %vm2468, %v3408, %v3409
        %v3425 = vsel %vm2468, %v3407, %v3408
        %v3426 = vsel %vm2468, %v3406, %v3407
        %v3427 = vsel %vm2468, %v3405, %v3406
        %v3428 = vsel %vm2468, %v3404, %v3405
        %v3429 = vsel %vm2468, %v3403, %v3404
        %v3430 = vsel %vm2468, %v3402, %v3403
        %v3431 = vsel %vm2468, %v3401, %v3402
        %v3432 = vsel %vm2468, %v3416, %v3401
        %v3433 = vsel %vm2274, %v3431, 0.0
        %v3434 = vsel %vm2275, %v3430, 0.0
        %v3435 = vsel %vm2276, %v3429, 0.0
        %v3436 = vsel %vm2277, %v3428, 0.0
        %v3437 = vsel %vm2278, %v3427, 0.0
        %v3438 = vsel %vm2279, %v3426, 0.0
        %v3439 = vsel %vm2280, %v3425, 0.0
        %v3440 = vsel %vm2281, %v3424, 0.0
        %v3441 = vsel %vm2282, %v3423, 0.0
        %v3442 = vsel %vm2283, %v3422, 0.0
        %v3443 = vsel %vm2284, %v3421, 0.0
        %v3444 = vsel %vm2285, %v3420, 0.0
        %v3445 = vsel %vm2286, %v3419, 0.0
        %v3446 = vsel %vm2287, %v3418, 0.0
        %v3447 = vsel %vm2288, %v3417, 0.0
        %v3448 = vsel %vm2289, %v3432, 0.0
        %v3449 = vrot.slane %v3289, 2
        %v3450 = vrot.slane %v3290, 2
        %v3451 = vrot.slane %v3291, 2
        %v3452 = vrot.slane %v3292, 2
        %v3453 = vrot.slane %v3293, 2
        %v3454 = vrot.slane %v3294, 2
        %v3455 = vrot.slane %v3295, 2
        %v3456 = vrot.slane %v3296, 2
        %v3457 = vrot.slane %v3297, 2
        %v3458 = vrot.slane %v3298, 2
        %v3459 = vrot.slane %v3299, 2
        %v3460 = vrot.slane %v3300, 2
        %v3461 = vrot.slane %v3301, 2
        %v3462 = vrot.slane %v3302, 2
        %v3463 = vrot.slane %v3303, 2
        %v3464 = vrot.slane %v3304, 2
        %v3465 = vsel %vm2517, %v3463, %v3464
        %v3466 = vsel %vm2517, %v3462, %v3463
        %v3467 = vsel %vm2517, %v3461, %v3462
        %v3468 = vsel %vm2517, %v3460, %v3461
        %v3469 = vsel %vm2517, %v3459, %v3460
        %v3470 = vsel %vm2517, %v3458, %v3459
        %v3471 = vsel %vm2517, %v3457, %v3458
        %v3472 = vsel %vm2517, %v3456, %v3457
        %v3473 = vsel %vm2517, %v3455, %v3456
        %v3474 = vsel %vm2517, %v3454, %v3455
        %v3475 = vsel %vm2517, %v3453, %v3454
        %v3476 = vsel %vm2517, %v3452, %v3453
        %v3477 = vsel %vm2517, %v3451, %v3452
        %v3478 = vsel %vm2517, %v3450, %v3451
        %v3479 = vsel %vm2517, %v3449, %v3450
        %v3480 = vsel %vm2517, %v3464, %v3449
        %v3481 = vsel %vm2338, %v3479, 0.0
        %v3482 = vsel %vm2339, %v3478, 0.0
        %v3483 = vsel %vm2340, %v3477, 0.0
        %v3484 = vsel %vm2341, %v3476, 0.0
        %v3485 = vsel %vm2342, %v3475, 0.0
        %v3486 = vsel %vm2343, %v3474, 0.0
        %v3487 = vsel %vm2344, %v3473, 0.0
        %v3488 = vsel %vm2345, %v3472, 0.0
        %v3489 = vsel %vm2346, %v3471, 0.0
        %v3490 = vsel %vm2347, %v3470, 0.0
        %v3491 = vsel %vm2348, %v3469, 0.0
        %v3492 = vsel %vm2349, %v3468, 0.0
        %v3493 = vsel %vm2350, %v3467, 0.0
        %v3494 = vsel %vm2351, %v3466, 0.0
        %v3495 = vsel %vm2352, %v3465, 0.0
        %v3496 = vsel %vm2353, %v3480, 0.0
        %s3497 = scalar_lea.vmem [#allocation8], 640
        %v3498 = vld [vmem:[%s3497] sm:$0xff]
        %v3499 = vld [vmem:[%s3497 + $0x8] sm:$0xff]
        %v3500 = vld [vmem:[%s3497 + $0x10] sm:$0xff]
        %v3501 = vld [vmem:[%s3497 + $0x18] sm:$0xff]
        %v3502 = vld [vmem:[%s3497 + $0x20] sm:$0xff]
        %v3503 = vld [vmem:[%s3497 + $0x28] sm:$0xff]
        %v3504 = vld [vmem:[%s3497 + $0x30] sm:$0xff]
        %v3505 = vld [vmem:[%s3497 + $0x38] sm:$0xff]
        %v3506 = vld [vmem:[%s3497 + $0x40] sm:$0xff]
        %v3507 = vld [vmem:[%s3497 + $0x48] sm:$0xff]
        %v3508 = vld [vmem:[%s3497 + $0x50] sm:$0xff]
        %v3509 = vld [vmem:[%s3497 + $0x58] sm:$0xff]
        %v3510 = vld [vmem:[%s3497 + $0x60] sm:$0xff]
        %v3511 = vld [vmem:[%s3497 + $0x68] sm:$0xff]
        %v3512 = vld [vmem:[%s3497 + $0x70] sm:$0xff]
        %v3513 = vld [vmem:[%s3497 + $0x78] sm:$0xff]
        %v3514 = vld [vmem:[%s3497 + $0x80] sm:$0xff]
        %v3515 = vld [vmem:[%s3497 + $0x88] sm:$0xff]
        %v3516 = vld [vmem:[%s3497 + $0x90] sm:$0xff]
        %v3517 = vld [vmem:[%s3497 + $0x98] sm:$0xff]
        %v3518 = vld [vmem:[%s3497 + $0xa0] sm:$0xff]
        %v3519 = vld [vmem:[%s3497 + $0xa8] sm:$0xff]
        %v3520 = vld [vmem:[%s3497 + $0xb0] sm:$0xff]
        %v3521 = vld [vmem:[%s3497 + $0xb8] sm:$0xff]
        %v3522 = vld [vmem:[%s3497 + $0xc0] sm:$0xff]
        %v3523 = vld [vmem:[%s3497 + $0xc8] sm:$0xff]
        %v3524 = vld [vmem:[%s3497 + $0xd0] sm:$0xff]
        %v3525 = vld [vmem:[%s3497 + $0xd8] sm:$0xff]
        %v3526 = vld [vmem:[%s3497 + $0xe0] sm:$0xff]
        %v3527 = vld [vmem:[%s3497 + $0xe8] sm:$0xff]
        %v3528 = vld [vmem:[%s3497 + $0xf0] sm:$0xff]
        %v3529 = vld [vmem:[%s3497 + $0xf8] sm:$0xff]
        %v3530 = vld [vmem:[%s3497 + $0x100] sm:$0xff]
        %v3531 = vld [vmem:[%s3497 + $0x108] sm:$0xff]
        %v3532 = vld [vmem:[%s3497 + $0x110] sm:$0xff]
        %v3533 = vld [vmem:[%s3497 + $0x118] sm:$0xff]
        %v3534 = vld [vmem:[%s3497 + $0x120] sm:$0xff]
        %v3535 = vld [vmem:[%s3497 + $0x128] sm:$0xff]
        %v3536 = vld [vmem:[%s3497 + $0x130] sm:$0xff]
        %v3537 = vld [vmem:[%s3497 + $0x138] sm:$0xff]
        %v3538 = vld [vmem:[%s3497 + $0x140] sm:$0xff]
        %v3539 = vld [vmem:[%s3497 + $0x148] sm:$0xff]
        %v3540 = vld [vmem:[%s3497 + $0x150] sm:$0xff]
        %v3541 = vld [vmem:[%s3497 + $0x158] sm:$0xff]
        %v3542 = vld [vmem:[%s3497 + $0x160] sm:$0xff]
        %v3543 = vld [vmem:[%s3497 + $0x168] sm:$0xff]
        %v3544 = vld [vmem:[%s3497 + $0x170] sm:$0xff]
        %v3545 = vld [vmem:[%s3497 + $0x178] sm:$0xff]
        %v3546 = vld [vmem:[%s3497 + $0x180] sm:$0xff]
        %v3547 = vld [vmem:[%s3497 + $0x188] sm:$0xff]
        %v3548 = vld [vmem:[%s3497 + $0x190] sm:$0xff]
        %v3549 = vld [vmem:[%s3497 + $0x198] sm:$0xff]
        %v3550 = vld [vmem:[%s3497 + $0x1a0] sm:$0xff]
        %v3551 = vld [vmem:[%s3497 + $0x1a8] sm:$0xff]
        %v3552 = vld [vmem:[%s3497 + $0x1b0] sm:$0xff]
        %v3553 = vld [vmem:[%s3497 + $0x1b8] sm:$0xff]
        %v3554 = vld [vmem:[%s3497 + $0x1c0] sm:$0xff]
        %v3555 = vld [vmem:[%s3497 + $0x1c8] sm:$0xff]
        %v3556 = vld [vmem:[%s3497 + $0x1d0] sm:$0xff]
        %v3557 = vld [vmem:[%s3497 + $0x1d8] sm:$0xff]
        %v3558 = vld [vmem:[%s3497 + $0x1e0] sm:$0xff]
        %v3559 = vld [vmem:[%s3497 + $0x1e8] sm:$0xff]
        %v3560 = vld [vmem:[%s3497 + $0x1f0] sm:$0xff]
        %v3561 = vld [vmem:[%s3497 + $0x1f8] sm:$0xff]
        %v3562 = vld [vmem:[%s3497 + $0x200] sm:$0xff]
        %v3563 = vld [vmem:[%s3497 + $0x208] sm:$0xff]
        %v3564 = vld [vmem:[%s3497 + $0x210] sm:$0xff]
        %v3565 = vld [vmem:[%s3497 + $0x218] sm:$0xff]
        %v3566 = vld [vmem:[%s3497 + $0x220] sm:$0xff]
        %v3567 = vld [vmem:[%s3497 + $0x228] sm:$0xff]
        %v3568 = vld [vmem:[%s3497 + $0x230] sm:$0xff]
        %v3569 = vld [vmem:[%s3497 + $0x238] sm:$0xff]
        %v3570 = vld [vmem:[%s3497 + $0x240] sm:$0xff]
        %v3571 = vld [vmem:[%s3497 + $0x248] sm:$0xff]
        %v3572 = vld [vmem:[%s3497 + $0x250] sm:$0xff]
        %v3573 = vld [vmem:[%s3497 + $0x258] sm:$0xff]
        %v3574 = vld [vmem:[%s3497 + $0x260] sm:$0xff]
        %v3575 = vld [vmem:[%s3497 + $0x268] sm:$0xff]
        %v3576 = vld [vmem:[%s3497 + $0x270] sm:$0xff]
        %v3577 = vld [vmem:[%s3497 + $0x278] sm:$0xff]
        %v3578 = vld [vmem:[#allocation10 + $0x1] sm:$0x1]
        %v3579 = vperm.slane %v3578, 0
        %3580 = vmatpush.msra.mxu0 %v3513
        %3581 = vmatpush.msra.mxu0 %v3512
        %3582 = vmatpush.msra.mxu0 %v3511
        %3583 = vmatpush.msra.mxu0 %v3510
        %3584 = vmatpush.msra.mxu0 %v3509
        %3585 = vmatpush.msra.mxu0 %v3508
        %3586 = vmatpush.msra.mxu0 %v3507
        %3587 = vmatpush.msra.mxu0 %v3506
        %3588 = vmatpush.msra.mxu0 %v3505
        %3589 = vmatpush.msra.mxu0 %v3504
        %3590 = vmatpush.msra.mxu0 %v3503
        %3591 = vmatpush.msra.mxu0 %v3502
        %3592 = vmatpush.msra.mxu0 %v3501
        %3593 = vmatpush.msra.mxu0 %v3500
        %3594 = vmatpush.msra.mxu0 %v3499
        %3595 = vmatpush.msra.mxu0 %v3498
        %3596 = vmatmul.f32.gmra.mxu0 %v3337
        %v3597 = vpop.f32.mrf.mxu0
        %v3598 = vadd.f32 %v3579, %v3597
        %3599 = vmatmul.f32.gmra.mxu0 %v3338
        %v3600 = vpop.f32.mrf.mxu0
        %v3601 = vadd.f32 %v3579, %v3600
        %3602 = vmatmul.f32.gmra.mxu0 %v3339
        %v3603 = vpop.f32.mrf.mxu0
        %v3604 = vadd.f32 %v3579, %v3603
        %3605 = vmatmul.f32.gmra.mxu0 %v3340
        %v3606 = vpop.f32.mrf.mxu0
        %v3607 = vadd.f32 %v3579, %v3606
        %3608 = vmatmul.f32.gmra.mxu0 %v3341
        %v3609 = vpop.f32.mrf.mxu0
        %v3610 = vadd.f32 %v3579, %v3609
        %3611 = vmatmul.f32.gmra.mxu0 %v3342
        %v3612 = vpop.f32.mrf.mxu0
        %v3613 = vadd.f32 %v3579, %v3612
        %3614 = vmatmul.f32.gmra.mxu0 %v3343
        %v3615 = vpop.f32.mrf.mxu0
        %v3616 = vadd.f32 %v3579, %v3615
        %3617 = vmatmul.f32.gmra.mxu0 %v3344
        %v3618 = vpop.f32.mrf.mxu0
        %v3619 = vadd.f32 %v3579, %v3618
        %3620 = vmatmul.f32.gmra.mxu0 %v3345
        %v3621 = vpop.f32.mrf.mxu0
        %v3622 = vadd.f32 %v3579, %v3621
        %3623 = vmatmul.f32.gmra.mxu0 %v3346
        %v3624 = vpop.f32.mrf.mxu0
        %v3625 = vadd.f32 %v3579, %v3624
        %3626 = vmatmul.f32.gmra.mxu0 %v3347
        %v3627 = vpop.f32.mrf.mxu0
        %v3628 = vadd.f32 %v3579, %v3627
        %3629 = vmatmul.f32.gmra.mxu0 %v3348
        %v3630 = vpop.f32.mrf.mxu0
        %v3631 = vadd.f32 %v3579, %v3630
        %3632 = vmatmul.f32.gmra.mxu0 %v3349
        %v3633 = vpop.f32.mrf.mxu0
        %v3634 = vadd.f32 %v3579, %v3633
        %3635 = vmatmul.f32.gmra.mxu0 %v3350
        %v3636 = vpop.f32.mrf.mxu0
        %v3637 = vadd.f32 %v3579, %v3636
        %3638 = vmatmul.f32.gmra.mxu0 %v3351
        %v3639 = vpop.f32.mrf.mxu0
        %v3640 = vadd.f32 %v3579, %v3639
        %3641 = vmatmul.f32.gmra.mxu0 %v3352
        %v3642 = vpop.f32.mrf.mxu0
        %v3643 = vadd.f32 %v3579, %v3642
        %3644 = vdwg.mxu0
        %3645 = vmatpush.msra.mxu0 %v3529
        %3646 = vmatpush.msra.mxu0 %v3528
        %3647 = vmatpush.msra.mxu0 %v3527
        %3648 = vmatpush.msra.mxu0 %v3526
        %3649 = vmatpush.msra.mxu0 %v3525
        %3650 = vmatpush.msra.mxu0 %v3524
        %3651 = vmatpush.msra.mxu0 %v3523
        %3652 = vmatpush.msra.mxu0 %v3522
        %3653 = vmatpush.msra.mxu0 %v3521
        %3654 = vmatpush.msra.mxu0 %v3520
        %3655 = vmatpush.msra.mxu0 %v3519
        %3656 = vmatpush.msra.mxu0 %v3518
        %3657 = vmatpush.msra.mxu0 %v3517
        %3658 = vmatpush.msra.mxu0 %v3516
        %3659 = vmatpush.msra.mxu0 %v3515
        %3660 = vmatpush.msra.mxu0 %v3514
        %3661 = vmatmul.f32.gmra.mxu0 %v3385
        %v3662 = vpop.f32.mrf.mxu0
        %v3663 = vadd.f32 %v3598, %v3662
        %3664 = vmatmul.f32.gmra.mxu0 %v3386
        %v3665 = vpop.f32.mrf.mxu0
        %v3666 = vadd.f32 %v3601, %v3665
        %3667 = vmatmul.f32.gmra.mxu0 %v3387
        %v3668 = vpop.f32.mrf.mxu0
        %v3669 = vadd.f32 %v3604, %v3668
        %3670 = vmatmul.f32.gmra.mxu0 %v3388
        %v3671 = vpop.f32.mrf.mxu0
        %v3672 = vadd.f32 %v3607, %v3671
        %3673 = vmatmul.f32.gmra.mxu0 %v3389
        %v3674 = vpop.f32.mrf.mxu0
        %v3675 = vadd.f32 %v3610, %v3674
        %3676 = vmatmul.f32.gmra.mxu0 %v3390
        %v3677 = vpop.f32.mrf.mxu0
        %v3678 = vadd.f32 %v3613, %v3677
        %3679 = vmatmul.f32.gmra.mxu0 %v3391
        %v3680 = vpop.f32.mrf.mxu0
        %v3681 = vadd.f32 %v3616, %v3680
        %3682 = vmatmul.f32.gmra.mxu0 %v3392
        %v3683 = vpop.f32.mrf.mxu0
        %v3684 = vadd.f32 %v3619, %v3683
        %3685 = vmatmul.f32.gmra.mxu0 %v3393
        %v3686 = vpop.f32.mrf.mxu0
        %v3687 = vadd.f32 %v3622, %v3686
        %3688 = vmatmul.f32.gmra.mxu0 %v3394
        %v3689 = vpop.f32.mrf.mxu0
        %v3690 = vadd.f32 %v3625, %v3689
        %3691 = vmatmul.f32.gmra.mxu0 %v3395
        %v3692 = vpop.f32.mrf.mxu0
        %v3693 = vadd.f32 %v3628, %v3692
        %3694 = vmatmul.f32.gmra.mxu0 %v3396
        %v3695 = vpop.f32.mrf.mxu0
        %v3696 = vadd.f32 %v3631, %v3695
        %3697 = vmatmul.f32.gmra.mxu0 %v3397
        %v3698 = vpop.f32.mrf.mxu0
        %v3699 = vadd.f32 %v3634, %v3698
        %3700 = vmatmul.f32.gmra.mxu0 %v3398
        %v3701 = vpop.f32.mrf.mxu0
        %v3702 = vadd.f32 %v3637, %v3701
        %3703 = vmatmul.f32.gmra.mxu0 %v3399
        %v3704 = vpop.f32.mrf.mxu0
        %v3705 = vadd.f32 %v3640, %v3704
        %3706 = vmatmul.f32.gmra.mxu0 %v3400
        %v3707 = vpop.f32.mrf.mxu0
        %v3708 = vadd.f32 %v3643, %v3707
        %3709 = vdwg.mxu0
        %3710 = vmatpush.msra.mxu0 %v3545
        %3711 = vmatpush.msra.mxu0 %v3544
        %3712 = vmatpush.msra.mxu0 %v3543
        %3713 = vmatpush.msra.mxu0 %v3542
        %3714 = vmatpush.msra.mxu0 %v3541
        %3715 = vmatpush.msra.mxu0 %v3540
        %3716 = vmatpush.msra.mxu0 %v3539
        %3717 = vmatpush.msra.mxu0 %v3538
        %3718 = vmatpush.msra.mxu0 %v3537
        %3719 = vmatpush.msra.mxu0 %v3536
        %3720 = vmatpush.msra.mxu0 %v3535
        %3721 = vmatpush.msra.mxu0 %v3534
        %3722 = vmatpush.msra.mxu0 %v3533
        %3723 = vmatpush.msra.mxu0 %v3532
        %3724 = vmatpush.msra.mxu0 %v3531
        %3725 = vmatpush.msra.mxu0 %v3530
        %3726 = vmatmul.f32.gmra.mxu0 %v3289
        %v3727 = vpop.f32.mrf.mxu0
        %v3728 = vadd.f32 %v3663, %v3727
        %3729 = vmatmul.f32.gmra.mxu0 %v3290
        %v3730 = vpop.f32.mrf.mxu0
        %v3731 = vadd.f32 %v3666, %v3730
        %3732 = vmatmul.f32.gmra.mxu0 %v3291
        %v3733 = vpop.f32.mrf.mxu0
        %v3734 = vadd.f32 %v3669, %v3733
        %3735 = vmatmul.f32.gmra.mxu0 %v3292
        %v3736 = vpop.f32.mrf.mxu0
        %v3737 = vadd.f32 %v3672, %v3736
        %3738 = vmatmul.f32.gmra.mxu0 %v3293
        %v3739 = vpop.f32.mrf.mxu0
        %v3740 = vadd.f32 %v3675, %v3739
        %3741 = vmatmul.f32.gmra.mxu0 %v3294
        %v3742 = vpop.f32.mrf.mxu0
        %v3743 = vadd.f32 %v3678, %v3742
        %3744 = vmatmul.f32.gmra.mxu0 %v3295
        %v3745 = vpop.f32.mrf.mxu0
        %v3746 = vadd.f32 %v3681, %v3745
        %3747 = vmatmul.f32.gmra.mxu0 %v3296
        %v3748 = vpop.f32.mrf.mxu0
        %v3749 = vadd.f32 %v3684, %v3748
        %3750 = vmatmul.f32.gmra.mxu0 %v3297
        %v3751 = vpop.f32.mrf.mxu0
        %v3752 = vadd.f32 %v3687, %v3751
        %3753 = vmatmul.f32.gmra.mxu0 %v3298
        %v3754 = vpop.f32.mrf.mxu0
        %v3755 = vadd.f32 %v3690, %v3754
        %3756 = vmatmul.f32.gmra.mxu0 %v3299
        %v3757 = vpop.f32.mrf.mxu0
        %v3758 = vadd.f32 %v3693, %v3757
        %3759 = vmatmul.f32.gmra.mxu0 %v3300
        %v3760 = vpop.f32.mrf.mxu0
        %v3761 = vadd.f32 %v3696, %v3760
        %3762 = vmatmul.f32.gmra.mxu0 %v3301
        %v3763 = vpop.f32.mrf.mxu0
        %v3764 = vadd.f32 %v3699, %v3763
        %3765 = vmatmul.f32.gmra.mxu0 %v3302
        %v3766 = vpop.f32.mrf.mxu0
        %v3767 = vadd.f32 %v3702, %v3766
        %3768 = vmatmul.f32.gmra.mxu0 %v3303
        %v3769 = vpop.f32.mrf.mxu0
        %v3770 = vadd.f32 %v3705, %v3769
        %3771 = vmatmul.f32.gmra.mxu0 %v3304
        %v3772 = vpop.f32.mrf.mxu0
        %v3773 = vadd.f32 %v3708, %v3772
        %3774 = vdwg.mxu0
        %3775 = vmatpush.msra.mxu0 %v3561
        %3776 = vmatpush.msra.mxu0 %v3560
        %3777 = vmatpush.msra.mxu0 %v3559
        %3778 = vmatpush.msra.mxu0 %v3558
        %3779 = vmatpush.msra.mxu0 %v3557
        %3780 = vmatpush.msra.mxu0 %v3556
        %3781 = vmatpush.msra.mxu0 %v3555
        %3782 = vmatpush.msra.mxu0 %v3554
        %3783 = vmatpush.msra.mxu0 %v3553
        %3784 = vmatpush.msra.mxu0 %v3552
        %3785 = vmatpush.msra.mxu0 %v3551
        %3786 = vmatpush.msra.mxu0 %v3550
        %3787 = vmatpush.msra.mxu0 %v3549
        %3788 = vmatpush.msra.mxu0 %v3548
        %3789 = vmatpush.msra.mxu0 %v3547
        %3790 = vmatpush.msra.mxu0 %v3546
        %3791 = vmatmul.f32.gmra.mxu0 %v3433
        %v3792 = vpop.f32.mrf.mxu0
        %v3793 = vadd.f32 %v3728, %v3792
        %3794 = vmatmul.f32.gmra.mxu0 %v3434
        %v3795 = vpop.f32.mrf.mxu0
        %v3796 = vadd.f32 %v3731, %v3795
        %3797 = vmatmul.f32.gmra.mxu0 %v3435
        %v3798 = vpop.f32.mrf.mxu0
        %v3799 = vadd.f32 %v3734, %v3798
        %3800 = vmatmul.f32.gmra.mxu0 %v3436
        %v3801 = vpop.f32.mrf.mxu0
        %v3802 = vadd.f32 %v3737, %v3801
        %3803 = vmatmul.f32.gmra.mxu0 %v3437
        %v3804 = vpop.f32.mrf.mxu0
        %v3805 = vadd.f32 %v3740, %v3804
        %3806 = vmatmul.f32.gmra.mxu0 %v3438
        %v3807 = vpop.f32.mrf.mxu0
        %v3808 = vadd.f32 %v3743, %v3807
        %3809 = vmatmul.f32.gmra.mxu0 %v3439
        %v3810 = vpop.f32.mrf.mxu0
        %v3811 = vadd.f32 %v3746, %v3810
        %3812 = vmatmul.f32.gmra.mxu0 %v3440
        %v3813 = vpop.f32.mrf.mxu0
        %v3814 = vadd.f32 %v3749, %v3813
        %3815 = vmatmul.f32.gmra.mxu0 %v3441
        %v3816 = vpop.f32.mrf.mxu0
        %v3817 = vadd.f32 %v3752, %v3816
        %3818 = vmatmul.f32.gmra.mxu0 %v3442
        %v3819 = vpop.f32.mrf.mxu0
        %v3820 = vadd.f32 %v3755, %v3819
        %3821 = vmatmul.f32.gmra.mxu0 %v3443
        %v3822 = vpop.f32.mrf.mxu0
        %v3823 = vadd.f32 %v3758, %v3822
        %3824 = vmatmul.f32.gmra.mxu0 %v3444
        %v3825 = vpop.f32.mrf.mxu0
        %v3826 = vadd.f32 %v3761, %v3825
        %3827 = vmatmul.f32.gmra.mxu0 %v3445
        %v3828 = vpop.f32.mrf.mxu0
        %v3829 = vadd.f32 %v3764, %v3828
        %3830 = vmatmul.f32.gmra.mxu0 %v3446
        %v3831 = vpop.f32.mrf.mxu0
        %v3832 = vadd.f32 %v3767, %v3831
        %3833 = vmatmul.f32.gmra.mxu0 %v3447
        %v3834 = vpop.f32.mrf.mxu0
        %v3835 = vadd.f32 %v3770, %v3834
        %3836 = vmatmul.f32.gmra.mxu0 %v3448
        %v3837 = vpop.f32.mrf.mxu0
        %v3838 = vadd.f32 %v3773, %v3837
        %3839 = vdwg.mxu0
        %3840 = vmatpush.msra.mxu0 %v3577
        %3841 = vmatpush.msra.mxu0 %v3576
        %3842 = vmatpush.msra.mxu0 %v3575
        %3843 = vmatpush.msra.mxu0 %v3574
        %3844 = vmatpush.msra.mxu0 %v3573
        %3845 = vmatpush.msra.mxu0 %v3572
        %3846 = vmatpush.msra.mxu0 %v3571
        %3847 = vmatpush.msra.mxu0 %v3570
        %3848 = vmatpush.msra.mxu0 %v3569
        %3849 = vmatpush.msra.mxu0 %v3568
        %3850 = vmatpush.msra.mxu0 %v3567
        %3851 = vmatpush.msra.mxu0 %v3566
        %3852 = vmatpush.msra.mxu0 %v3565
        %3853 = vmatpush.msra.mxu0 %v3564
        %3854 = vmatpush.msra.mxu0 %v3563
        %3855 = vmatpush.msra.mxu0 %v3562
        %3856 = vmatmul.f32.gmra.mxu0 %v3481
        %v3857 = vpop.f32.mrf.mxu0
        %v3858 = vadd.f32 %v3793, %v3857
        %3859 = vmatmul.f32.gmra.mxu0 %v3482
        %v3860 = vpop.f32.mrf.mxu0
        %v3861 = vadd.f32 %v3796, %v3860
        %3862 = vmatmul.f32.gmra.mxu0 %v3483
        %v3863 = vpop.f32.mrf.mxu0
        %v3864 = vadd.f32 %v3799, %v3863
        %3865 = vmatmul.f32.gmra.mxu0 %v3484
        %v3866 = vpop.f32.mrf.mxu0
        %v3867 = vadd.f32 %v3802, %v3866
        %3868 = vmatmul.f32.gmra.mxu0 %v3485
        %v3869 = vpop.f32.mrf.mxu0
        %v3870 = vadd.f32 %v3805, %v3869
        %3871 = vmatmul.f32.gmra.mxu0 %v3486
        %v3872 = vpop.f32.mrf.mxu0
        %v3873 = vadd.f32 %v3808, %v3872
        %3874 = vmatmul.f32.gmra.mxu0 %v3487
        %v3875 = vpop.f32.mrf.mxu0
        %v3876 = vadd.f32 %v3811, %v3875
        %3877 = vmatmul.f32.gmra.mxu0 %v3488
        %v3878 = vpop.f32.mrf.mxu0
        %v3879 = vadd.f32 %v3814, %v3878
        %3880 = vmatmul.f32.gmra.mxu0 %v3489
        %v3881 = vpop.f32.mrf.mxu0
        %v3882 = vadd.f32 %v3817, %v3881
        %3883 = vmatmul.f32.gmra.mxu0 %v3490
        %v3884 = vpop.f32.mrf.mxu0
        %v3885 = vadd.f32 %v3820, %v3884
        %3886 = vmatmul.f32.gmra.mxu0 %v3491
        %v3887 = vpop.f32.mrf.mxu0
        %v3888 = vadd.f32 %v3823, %v3887
        %3889 = vmatmul.f32.gmra.mxu0 %v3492
        %v3890 = vpop.f32.mrf.mxu0
        %v3891 = vadd.f32 %v3826, %v3890
        %3892 = vmatmul.f32.gmra.mxu0 %v3493
        %v3893 = vpop.f32.mrf.mxu0
        %v3894 = vadd.f32 %v3829, %v3893
        %3895 = vmatmul.f32.gmra.mxu0 %v3494
        %v3896 = vpop.f32.mrf.mxu0
        %v3897 = vadd.f32 %v3832, %v3896
        %3898 = vmatmul.f32.gmra.mxu0 %v3495
        %v3899 = vpop.f32.mrf.mxu0
        %v3900 = vadd.f32 %v3835, %v3899
        %3901 = vmatmul.f32.gmra.mxu0 %v3496
        %v3902 = vpop.f32.mrf.mxu0
        %v3903 = vadd.f32 %v3838, %v3902
        %3904 = vdwg.mxu0
        %v3905 = vmax.f32 %v3858, 0.0
        %v3906 = vmax.f32 %v3861, 0.0
        %v3907 = vmax.f32 %v3864, 0.0
        %v3908 = vmax.f32 %v3867, 0.0
        %v3909 = vmax.f32 %v3870, 0.0
        %v3910 = vmax.f32 %v3873, 0.0
        %v3911 = vmax.f32 %v3876, 0.0
        %v3912 = vmax.f32 %v3879, 0.0
        %v3913 = vmax.f32 %v3882, 0.0
        %v3914 = vmax.f32 %v3885, 0.0
        %v3915 = vmax.f32 %v3888, 0.0
        %v3916 = vmax.f32 %v3891, 0.0
        %v3917 = vmax.f32 %v3894, 0.0
        %v3918 = vmax.f32 %v3897, 0.0
        %v3919 = vmax.f32 %v3900, 0.0
        %v3920 = vmax.f32 %v3903, 0.0
        %3921 = vmatpush.msra.mxu0 %v1854
        %3922 = vmatpush.msra.mxu0 %v1853
        %3923 = vmatpush.msra.mxu0 %v1852
        %3924 = vmatpush.msra.mxu0 %v1851
        %3925 = vmatpush.msra.mxu0 %v1850
        %3926 = vmatpush.msra.mxu0 %v1849
        %3927 = vmatpush.msra.mxu0 %v1848
        %3928 = vmatpush.msra.mxu0 %v1847
        %3929 = vmatpush.msra.mxu0 %v1846
        %3930 = vmatpush.msra.mxu0 %v1845
        %3931 = vmatpush.msra.mxu0 %v1844
        %3932 = vmatpush.msra.mxu0 %v1843
        %3933 = vmatpush.msra.mxu0 %v1842
        %3934 = vmatpush.msra.mxu0 %v1841
        %3935 = vmatpush.msra.mxu0 %v1840
        %3936 = vmatpush.msra.mxu0 %v1839
        %3937 = vmatmul.f32.gmra.mxu0 %v2996
        %v3938 = vpop.f32.mrf.mxu0
        %v3939 = vadd.f32 %v2974, %v3938
        %3940 = vdwg.mxu0
        %v3941 = vmax.f32 %v3939, 0.0
        %3942 = vmatpush.msra.mxu0 %v1854
        %3943 = vmatpush.msra.mxu0 %v1853
        %3944 = vmatpush.msra.mxu0 %v1852
        %3945 = vmatpush.msra.mxu0 %v1851
        %3946 = vmatpush.msra.mxu0 %v1850
        %3947 = vmatpush.msra.mxu0 %v1849
        %3948 = vmatpush.msra.mxu0 %v1848
        %3949 = vmatpush.msra.mxu0 %v1847
        %3950 = vmatpush.msra.mxu0 %v1846
        %3951 = vmatpush.msra.mxu0 %v1845
        %3952 = vmatpush.msra.mxu0 %v1844
        %3953 = vmatpush.msra.mxu0 %v1843
        %3954 = vmatpush.msra.mxu0 %v1842
        %3955 = vmatpush.msra.mxu0 %v1841
        %3956 = vmatpush.msra.mxu0 %v1840
        %3957 = vmatpush.msra.mxu0 %v1839
        %3958 = vmatmul.f32.gmra.mxu0 %v3905
        %v3959 = vpop.f32.mrf.mxu0
        %v3960 = vadd.f32 %v2974, %v3959
        %3961 = vmatmul.f32.gmra.mxu0 %v3906
        %v3962 = vpop.f32.mrf.mxu0
        %v3963 = vadd.f32 %v2974, %v3962
        %3964 = vmatmul.f32.gmra.mxu0 %v3907
        %v3965 = vpop.f32.mrf.mxu0
        %v3966 = vadd.f32 %v2974, %v3965
        %3967 = vmatmul.f32.gmra.mxu0 %v3908
        %v3968 = vpop.f32.mrf.mxu0
        %v3969 = vadd.f32 %v2974, %v3968
        %3970 = vmatmul.f32.gmra.mxu0 %v3909
        %v3971 = vpop.f32.mrf.mxu0
        %v3972 = vadd.f32 %v2974, %v3971
        %3973 = vmatmul.f32.gmra.mxu0 %v3910
        %v3974 = vpop.f32.mrf.mxu0
        %v3975 = vadd.f32 %v2974, %v3974
        %3976 = vmatmul.f32.gmra.mxu0 %v3911
        %v3977 = vpop.f32.mrf.mxu0
        %v3978 = vadd.f32 %v2974, %v3977
        %3979 = vmatmul.f32.gmra.mxu0 %v3912
        %v3980 = vpop.f32.mrf.mxu0
        %v3981 = vadd.f32 %v2974, %v3980
        %3982 = vmatmul.f32.gmra.mxu0 %v3913
        %v3983 = vpop.f32.mrf.mxu0
        %v3984 = vadd.f32 %v2974, %v3983
        %3985 = vmatmul.f32.gmra.mxu0 %v3914
        %v3986 = vpop.f32.mrf.mxu0
        %v3987 = vadd.f32 %v2974, %v3986
        %3988 = vmatmul.f32.gmra.mxu0 %v3915
        %v3989 = vpop.f32.mrf.mxu0
        %v3990 = vadd.f32 %v2974, %v3989
        %3991 = vmatmul.f32.gmra.mxu0 %v3916
        %v3992 = vpop.f32.mrf.mxu0
        %v3993 = vadd.f32 %v2974, %v3992
        %3994 = vmatmul.f32.gmra.mxu0 %v3917
        %v3995 = vpop.f32.mrf.mxu0
        %v3996 = vadd.f32 %v2974, %v3995
        %3997 = vmatmul.f32.gmra.mxu0 %v3918
        %v3998 = vpop.f32.mrf.mxu0
        %v3999 = vadd.f32 %v2974, %v3998
        %4000 = vmatmul.f32.gmra.mxu0 %v3919
        %v4001 = vpop.f32.mrf.mxu0
        %v4002 = vadd.f32 %v2974, %v4001
        %4003 = vmatmul.f32.gmra.mxu0 %v3920
        %v4004 = vpop.f32.mrf.mxu0
        %v4005 = vadd.f32 %v2974, %v4004
        %4006 = vdwg.mxu0
        %v4007 = vmax.f32 %v3960, 0.0
        %v4008 = vmax.f32 %v3963, 0.0
        %v4009 = vmax.f32 %v3966, 0.0
        %v4010 = vmax.f32 %v3969, 0.0
        %v4011 = vmax.f32 %v3972, 0.0
        %v4012 = vmax.f32 %v3975, 0.0
        %v4013 = vmax.f32 %v3978, 0.0
        %v4014 = vmax.f32 %v3981, 0.0
        %v4015 = vmax.f32 %v3984, 0.0
        %v4016 = vmax.f32 %v3987, 0.0
        %v4017 = vmax.f32 %v3990, 0.0
        %v4018 = vmax.f32 %v3993, 0.0
        %v4019 = vmax.f32 %v3996, 0.0
        %v4020 = vmax.f32 %v3999, 0.0
        %v4021 = vmax.f32 %v4002, 0.0
        %v4022 = vmax.f32 %v4005, 0.0
        %4023 = vmatpush.msra.mxu0 0.0
        %4024 = vmatpush.msra.mxu0 0.0
        %4025 = vmatpush.msra.mxu0 0.0
        %4026 = vmatpush.msra.mxu0 0.0
        %4027 = vmatpush.msra.mxu0 0.0
        %4028 = vmatpush.msra.mxu0 0.0
        %4029 = vmatpush.msra.mxu0 0.0
        %4030 = vmatpush.msra.mxu0 0.0
        %4031 = vmatpush.msra.mxu0 0.0
        %4032 = vmatpush.msra.mxu0 0.0
        %4033 = vmatpush.msra.mxu0 0.0
        %4034 = vmatpush.msra.mxu0 0.0
        %4035 = vmatpush.msra.mxu0 0.0
        %4036 = vmatpush.msra.mxu0 0.0
        %4037 = vmatpush.msra.mxu0 0.0
        %4038 = vmatpush.msra.mxu0 %v3941
        %4039 = vmatmul.f32.gmra.mxu0 %v3080
        %v4040 = vpop.f32.mrf.mxu0
        %v4041 = vadd.f32 0.0, %v4040
        %4042 = vmatmul.f32.gmra.mxu0 %v3083
        %v4043 = vpop.f32.mrf.mxu0
        %v4044 = vadd.f32 0.0, %v4043
        %4045 = vmatmul.f32.gmra.mxu0 %v3086
        %v4046 = vpop.f32.mrf.mxu0
        %v4047 = vadd.f32 0.0, %v4046
        %4048 = vmatmul.f32.gmra.mxu0 %v3089
        %v4049 = vpop.f32.mrf.mxu0
        %v4050 = vadd.f32 0.0, %v4049
        %4051 = vmatmul.f32.gmra.mxu0 %v3092
        %v4052 = vpop.f32.mrf.mxu0
        %v4053 = vadd.f32 0.0, %v4052
        %4054 = vmatmul.f32.gmra.mxu0 %v3095
        %v4055 = vpop.f32.mrf.mxu0
        %v4056 = vadd.f32 0.0, %v4055
        %4057 = vmatmul.f32.gmra.mxu0 %v3098
        %v4058 = vpop.f32.mrf.mxu0
        %v4059 = vadd.f32 0.0, %v4058
        %4060 = vmatmul.f32.gmra.mxu0 %v3101
        %v4061 = vpop.f32.mrf.mxu0
        %v4062 = vadd.f32 0.0, %v4061
        %4063 = vmatmul.f32.gmra.mxu0 %v3104
        %v4064 = vpop.f32.mrf.mxu0
        %v4065 = vadd.f32 0.0, %v4064
        %4066 = vmatmul.f32.gmra.mxu0 %v3107
        %v4067 = vpop.f32.mrf.mxu0
        %v4068 = vadd.f32 0.0, %v4067
        %4069 = vmatmul.f32.gmra.mxu0 %v3110
        %v4070 = vpop.f32.mrf.mxu0
        %v4071 = vadd.f32 0.0, %v4070
        %4072 = vmatmul.f32.gmra.mxu0 %v3113
        %v4073 = vpop.f32.mrf.mxu0
        %v4074 = vadd.f32 0.0, %v4073
        %4075 = vmatmul.f32.gmra.mxu0 %v3116
        %v4076 = vpop.f32.mrf.mxu0
        %v4077 = vadd.f32 0.0, %v4076
        %4078 = vmatmul.f32.gmra.mxu0 %v3119
        %v4079 = vpop.f32.mrf.mxu0
        %v4080 = vadd.f32 0.0, %v4079
        %4081 = vmatmul.f32.gmra.mxu0 %v3122
        %v4082 = vpop.f32.mrf.mxu0
        %v4083 = vadd.f32 0.0, %v4082
        %4084 = vmatmul.f32.gmra.mxu0 %v3125
        %v4085 = vpop.f32.mrf.mxu0
        %v4086 = vadd.f32 0.0, %v4085
        %4087 = vdwg.mxu0
        %v4088 = vmul.f32 %v4007, %v4041
        %v4089 = vmul.f32 %v4008, %v4044
        %v4090 = vmul.f32 %v4009, %v4047
        %v4091 = vmul.f32 %v4010, %v4050
        %v4092 = vmul.f32 %v4011, %v4053
        %v4093 = vmul.f32 %v4012, %v4056
        %v4094 = vmul.f32 %v4013, %v4059
        %v4095 = vmul.f32 %v4014, %v4062
        %v4096 = vmul.f32 %v4015, %v4065
        %v4097 = vmul.f32 %v4016, %v4068
        %v4098 = vmul.f32 %v4017, %v4071
        %v4099 = vmul.f32 %v4018, %v4074
        %v4100 = vmul.f32 %v4019, %v4077
        %v4101 = vmul.f32 %v4020, %v4080
        %v4102 = vmul.f32 %v4021, %v4083
        %v4103 = vmul.f32 %v4022, %v4086
        %4104 = vmatpush.msra.mxu0 %v1888
        %4105 = vmatpush.msra.mxu0 %v1887
        %4106 = vmatpush.msra.mxu0 %v1886
        %4107 = vmatpush.msra.mxu0 %v1885
        %4108 = vmatpush.msra.mxu0 %v1884
        %4109 = vmatpush.msra.mxu0 %v1883
        %4110 = vmatpush.msra.mxu0 %v1882
        %4111 = vmatpush.msra.mxu0 %v1881
        %4112 = vmatpush.msra.mxu0 %v1880
        %4113 = vmatpush.msra.mxu0 %v1879
        %4114 = vmatpush.msra.mxu0 %v1878
        %4115 = vmatpush.msra.mxu0 %v1877
        %4116 = vmatpush.msra.mxu0 %v1876
        %4117 = vmatpush.msra.mxu0 %v1875
        %4118 = vmatpush.msra.mxu0 %v1874
        %4119 = vmatpush.msra.mxu0 %v1873
        %4120 = vmatmul.f32.gmra.mxu0 %v4088
        %v4121 = vpop.f32.mrf.mxu0
        %v4122 = vadd.f32 0.0, %v4121
        %4123 = vmatmul.f32.gmra.mxu0 %v4089
        %v4124 = vpop.f32.mrf.mxu0
        %v4125 = vadd.f32 0.0, %v4124
        %4126 = vmatmul.f32.gmra.mxu0 %v4090
        %v4127 = vpop.f32.mrf.mxu0
        %v4128 = vadd.f32 0.0, %v4127
        %4129 = vmatmul.f32.gmra.mxu0 %v4091
        %v4130 = vpop.f32.mrf.mxu0
        %v4131 = vadd.f32 0.0, %v4130
        %4132 = vmatmul.f32.gmra.mxu0 %v4092
        %v4133 = vpop.f32.mrf.mxu0
        %v4134 = vadd.f32 0.0, %v4133
        %4135 = vmatmul.f32.gmra.mxu0 %v4093
        %v4136 = vpop.f32.mrf.mxu0
        %v4137 = vadd.f32 0.0, %v4136
        %4138 = vmatmul.f32.gmra.mxu0 %v4094
        %v4139 = vpop.f32.mrf.mxu0
        %v4140 = vadd.f32 0.0, %v4139
        %4141 = vmatmul.f32.gmra.mxu0 %v4095
        %v4142 = vpop.f32.mrf.mxu0
        %v4143 = vadd.f32 0.0, %v4142
        %4144 = vmatmul.f32.gmra.mxu0 %v4096
        %v4145 = vpop.f32.mrf.mxu0
        %v4146 = vadd.f32 0.0, %v4145
        %4147 = vmatmul.f32.gmra.mxu0 %v4097
        %v4148 = vpop.f32.mrf.mxu0
        %v4149 = vadd.f32 0.0, %v4148
        %4150 = vmatmul.f32.gmra.mxu0 %v4098
        %v4151 = vpop.f32.mrf.mxu0
        %v4152 = vadd.f32 0.0, %v4151
        %4153 = vmatmul.f32.gmra.mxu0 %v4099
        %v4154 = vpop.f32.mrf.mxu0
        %v4155 = vadd.f32 0.0, %v4154
        %4156 = vmatmul.f32.gmra.mxu0 %v4100
        %v4157 = vpop.f32.mrf.mxu0
        %v4158 = vadd.f32 0.0, %v4157
        %4159 = vmatmul.f32.gmra.mxu0 %v4101
        %v4160 = vpop.f32.mrf.mxu0
        %v4161 = vadd.f32 0.0, %v4160
        %4162 = vmatmul.f32.gmra.mxu0 %v4102
        %v4163 = vpop.f32.mrf.mxu0
        %v4164 = vadd.f32 0.0, %v4163
        %4165 = vmatmul.f32.gmra.mxu0 %v4103
        %v4166 = vpop.f32.mrf.mxu0
        %v4167 = vadd.f32 0.0, %v4166
        %4168 = vdwg.mxu0
        %v4169 = vtanh.pop %v4122
        %v4170 = vtanh.pop %v4125
        %v4171 = vtanh.pop %v4128
        %v4172 = vtanh.pop %v4131
        %v4173 = vtanh.pop %v4134
        %v4174 = vtanh.pop %v4137
        %v4175 = vtanh.pop %v4140
        %v4176 = vtanh.pop %v4143
        %v4177 = vtanh.pop %v4146
        %v4178 = vtanh.pop %v4149
        %v4179 = vtanh.pop %v4152
        %v4180 = vtanh.pop %v4155
        %v4181 = vtanh.pop %v4158
        %v4182 = vtanh.pop %v4161
        %v4183 = vtanh.pop %v4164
        %v4184 = vtanh.pop %v4167
        %v4185 = vmul.f32 %v4169, %v4007
        %v4186 = vmul.f32 %v4170, %v4008
        %v4187 = vmul.f32 %v4171, %v4009
        %v4188 = vmul.f32 %v4172, %v4010
        %v4189 = vmul.f32 %v4173, %v4011
        %v4190 = vmul.f32 %v4174, %v4012
        %v4191 = vmul.f32 %v4175, %v4013
        %v4192 = vmul.f32 %v4176, %v4014
        %v4193 = vmul.f32 %v4177, %v4015
        %v4194 = vmul.f32 %v4178, %v4016
        %v4195 = vmul.f32 %v4179, %v4017
        %v4196 = vmul.f32 %v4180, %v4018
        %v4197 = vmul.f32 %v4181, %v4019
        %v4198 = vmul.f32 %v4182, %v4020
        %v4199 = vmul.f32 %v4183, %v4021
        %v4200 = vmul.f32 %v4184, %v4022
        %4201 = vmatpush.msra.mxu0 %v4200
        %4202 = vmatpush.msra.mxu0 %v4199
        %4203 = vmatpush.msra.mxu0 %v4198
        %4204 = vmatpush.msra.mxu0 %v4197
        %4205 = vmatpush.msra.mxu0 %v4196
        %4206 = vmatpush.msra.mxu0 %v4195
        %4207 = vmatpush.msra.mxu0 %v4194
        %4208 = vmatpush.msra.mxu0 %v4193
        %4209 = vmatpush.msra.mxu0 %v4192
        %4210 = vmatpush.msra.mxu0 %v4191
        %4211 = vmatpush.msra.mxu0 %v4190
        %4212 = vmatpush.msra.mxu0 %v4189
        %4213 = vmatpush.msra.mxu0 %v4188
        %4214 = vmatpush.msra.mxu0 %v4187
        %4215 = vmatpush.msra.mxu0 %v4186
        %4216 = vmatpush.msra.mxu0 %v4185
        %4217 = vmatmul.f32.gmra.mxu0 %v1872
        %v4218 = vpop.f32.mrf.mxu0
        %v4219 = vadd.f32 0.0, %v4218
        %4220 = vdwg.mxu0
        %4222 = vrot.lane.b32.xlu0 %v4219, 96
        %v4223 = vpop.permute.xlu0 %4222
        %4224 = vrot.lane.b32.xlu0 %v4219, 64
        %v4225 = vpop.permute.xlu0 %4224
        %4226 = vrot.lane.b32.xlu0 %v4219, 32
        %v4227 = vpop.permute.xlu0 %4226
        %v4228 = vld [vmem:[#allocation11] sm:$0xff]
        %v4229 = vld [vmem:[#allocation11 + $0x8] sm:$0xff]
        %v4230 = vld [vmem:[#allocation11 + $0x10] sm:$0xff]
        %v4231 = vld [vmem:[#allocation11 + $0x18] sm:$0xff]
        %v4232 = vld [vmem:[#allocation11 + $0x20] sm:$0xff]
        %v4233 = vld [vmem:[#allocation11 + $0x28] sm:$0xff]
        %v4234 = vld [vmem:[#allocation11 + $0x30] sm:$0xff]
        %v4235 = vld [vmem:[#allocation11 + $0x38] sm:$0xff]
        %v4236 = vsel %vm734, %v4219, 0
        %v4238 = vsel %vm734, %v4223, 0
        %v4240 = vsel %vm734, %v4225, 0
        %v4242 = vsel %vm734, %v4227, 0
        %4244 = vmatpush.msra.mxu0 0.0
        %4245 = vmatpush.msra.mxu0 0.0
        %4246 = vmatpush.msra.mxu0 0.0
        %4247 = vmatpush.msra.mxu0 0.0
        %4248 = vmatpush.msra.mxu0 0.0
        %4249 = vmatpush.msra.mxu0 0.0
        %4250 = vmatpush.msra.mxu0 0.0
        %4251 = vmatpush.msra.mxu0 0.0
        %4252 = vmatpush.msra.mxu0 0.0
        %4253 = vmatpush.msra.mxu0 0.0
        %4254 = vmatpush.msra.mxu0 0.0
        %4255 = vmatpush.msra.mxu0 0.0
        %4256 = vmatpush.msra.mxu0 %v4235
        %4257 = vmatpush.msra.mxu0 %v4234
        %4258 = vmatpush.msra.mxu0 %v4233
        %4259 = vmatpush.msra.mxu0 %v4232
        %4260 = vmatmul.f32.gmra.mxu0 %v4236
        %v4261 = vpop.f32.mrf.mxu0
        %v4262 = vadd.f32 0.0, %v4261
        %4263 = vmatmul.f32.gmra.mxu0 %v4238
        %v4264 = vpop.f32.mrf.mxu0
        %v4265 = vadd.f32 0.0, %v4264
        %4266 = vmatmul.f32.gmra.mxu0 %v4240
        %v4267 = vpop.f32.mrf.mxu0
        %v4268 = vadd.f32 0.0, %v4267
        %4269 = vmatmul.f32.gmra.mxu0 %v4242
        %v4270 = vpop.f32.mrf.mxu0
        %v4271 = vadd.f32 0.0, %v4270
        %4272 = vdwg.mxu0
        %v4274 = vsel %vm734, %v1795, 0
        %v4276 = vsel %vm734, %v1798, 0
        %v4278 = vsel %vm734, %v1801, 0
        %v4280 = vsel %vm734, %v1804, 0
        %4282 = vmatpush.msra.mxu0 0.0
        %4283 = vmatpush.msra.mxu0 0.0
        %4284 = vmatpush.msra.mxu0 0.0
        %4285 = vmatpush.msra.mxu0 0.0
        %4286 = vmatpush.msra.mxu0 0.0
        %4287 = vmatpush.msra.mxu0 0.0
        %4288 = vmatpush.msra.mxu0 0.0
        %4289 = vmatpush.msra.mxu0 0.0
        %4290 = vmatpush.msra.mxu0 0.0
        %4291 = vmatpush.msra.mxu0 0.0
        %4292 = vmatpush.msra.mxu0 0.0
        %4293 = vmatpush.msra.mxu0 0.0
        %4294 = vmatpush.msra.mxu0 %v4231
        %4295 = vmatpush.msra.mxu0 %v4230
        %4296 = vmatpush.msra.mxu0 %v4229
        %4297 = vmatpush.msra.mxu0 %v4228
        %4298 = vmatmul.f32.gmra.mxu0 %v4274
        %v4299 = vpop.f32.mrf.mxu0
        %v4300 = vadd.f32 %v4262, %v4299
        %4301 = vmatmul.f32.gmra.mxu0 %v4276
        %v4302 = vpop.f32.mrf.mxu0
        %v4303 = vadd.f32 %v4265, %v4302
        %4304 = vmatmul.f32.gmra.mxu0 %v4278
        %v4305 = vpop.f32.mrf.mxu0
        %v4306 = vadd.f32 %v4268, %v4305
        %4307 = vmatmul.f32.gmra.mxu0 %v4280
        %v4308 = vpop.f32.mrf.mxu0
        %v4309 = vadd.f32 %v4271, %v4308
        %4310 = vdwg.mxu0
        %v4311 = vld [vmem:[%s14] sm:$0x1]
        %v4313 = vperm.slane %v4311, 0
        %v4315 = vadd.f32 %v4300, %v4313
        %v4316 = vadd.f32 %v4303, %v4313
        %v4317 = vadd.f32 %v4306, %v4313
        %v4318 = vadd.f32 %v4309, %v4313
        %4319 = vst [vmem:[%s621] sm:$0xff] %v4315
        %4320 = vst [vmem:[%s621 + $0x8] sm:$0xff] %v4316
        %4321 = vst [vmem:[%s621 + $0x10] sm:$0xff] %v4317
        %4322 = vst [vmem:[%s621 + $0x18] sm:$0xff] %v4318
        %s4323 = sand.u32 %s373, 1
        %s4324 = scalar_lea.sflag [#allocation4], %s4323
        %s4325 = sand.u32 %s373, 1
        %s4326 = smul.addr %s4325, 32
        %s4327 = scalar_lea.vmem [#allocation13], %s4326
        // Predicated region
        $region105: #{tpu_custom_call.1} parent=79 // pred_check
          %p4328 = pneg %p383
        $region106: #{tpu_custom_call.1} parent=79 // pred_check_branch
          %4330 = sbr.rel (%p4328) target = $region108
        $region107: #{tpu_custom_call.1} parent=79 // pred_region
          %4332 = vsyncadd %s4324, 0
          %s4333 = smul.addr %s35, 4
          %s4334 = smul.addr %s4333, 8
          %s4335 = scalar_lea.hbm %s15, %s4334
          %s4336 = sshll.u32 %s4327, 4
          %s4337 = int_to_ptr.vmem [resolvable:$true] %s4336
          %s4338 = sshll.u32 %s4335, 4
          %s4339 = int_to_ptr.hbm [resolvable:$true] %s4338
          %4344 = dma.vmem_to_hbm [thread:$0]  %s4337, 512, %s4339, %s4324, 128, 128, 8
        $region108: #{tpu_custom_call.1} parent=79 // pred_fallthru
          _
      $region80: #{tpu_custom_call.1} parent=5 // pred_fallthru
        _
      %p4345 = scmp.le.s32.totalorder 2, %s30
      // Predicated region
      $region109: #{tpu_custom_call.1} parent=5 // pred_check
        %p4346 = pneg %p4345
      $region110: #{tpu_custom_call.1} parent=5 // pred_check_branch
        %4348 = sbr.rel (%p4346) target = $region112
      $region111: #{tpu_custom_call.1} parent=5 // pred_region
        %s4349 = ssub.s32 %s30, 2
        // Predicated region
        $region113: #{tpu_custom_call.1} parent=111 // pred_check
          %p4350 = pneg %p389
        $region114: #{tpu_custom_call.1} parent=111 // pred_check_branch
          %4352 = sbr.rel (%p4350) target = $region116
        $region115: #{tpu_custom_call.1} parent=111 // pred_region
          %s4353 = sand.u32 %s374, 1
          %s4354 = scalar_lea.sflag [#allocation4], %s4353
          %s4355 = sand.u32 %s374, 1
          %s4356 = smul.addr %s4355, 32
          %s4357 = scalar_lea.vmem [#allocation13], %s4356
          %4359 = dma.done %s4354, 512
        $region116: #{tpu_custom_call.1} parent=111 // pred_fallthru
          _
      $region112: #{tpu_custom_call.1} parent=5 // pred_fallthru
        _
    $region6: #{tpu_custom_call.1} parent=1 // loop_footer
      %s34 = sadd.s32 1, %s30
    $region7: #{tpu_custom_call.1} parent=1 // loop_footer_branch
      %29 = sbr.rel target = $region3
    $region8: #{tpu_custom_call.1} parent=1 // loop_exit
      _
    %4360 = vsyncpa [#allocation3], 1
    %s4361 = scalar_lea.sflag [#allocation3], 1
    %4362 = vsyncpa %s4361, 1
    %4363 = vsyncpa [#allocation6], 1
    %4364 = vsyncpa [#allocation9], 1
    %4365 = vsyncpa [#allocation12], 1
    %4366 = vsyncpa [#allocation4], 1
    %s4367 = scalar_lea.sflag [#allocation4], 1
    %4368 = vsyncpa %s4367, 1

</llo_original>
